<compile_context>
chip_gen: v5e
topology: v5e:2x2
jax: 0.10.0
libtpu: 0.0.40
codegen_flags: <defaults>
</compile_context>

<pallas_src>
import functools
import math

import jax
import jax.numpy as jnp
from jax.experimental import pallas as pl
from jax.experimental.pallas import tpu as pltpu


def _conv_stats_kernel(x0_ref, x1_ref, mask_ref, w_ref,
                       y_ref, sum_ref, ssq_ref,
                       slab_ref,
                       *, taps, tm, cin, cg, ns):
    j = pl.program_id(0)

    @pl.when(j == 0)
    def _init():
        sum_ref[...] = jnp.zeros_like(sum_ref)
        ssq_ref[...] = jnp.zeros_like(ssq_ref)
        if cg > cin:  # zero the sublane-pad rows once; scratch persists
            slab_ref[cin:, :] = jnp.zeros(
                (cg - cin, slab_ref.shape[1]), jnp.float32)

    # halo slab: [ current tm-wide tile | next `halo` lanes ]
    slab_ref[:cin, :tm] = x0_ref[...]
    slab_ref[:cin, tm:] = x1_ref[...]

    # Conv3d (valid) as per-tap accumulating MXU matmuls on shifted slab views
    # (no materialized im2col buffer; shifts are static lane offsets).
    acc = jnp.dot(w_ref[0], slab_ref[:, taps[0]:taps[0] + tm],
                  preferred_element_type=jnp.float32)
    for t in range(1, len(taps)):
        off = taps[t]
        acc = acc + jnp.dot(w_ref[t], slab_ref[:, off:off + tm],
                            preferred_element_type=jnp.float32)

    cout = y_ref.shape[0]
    yv = acc[:cout]                     # drop zero output-channel pad rows
    y_ref[...] = yv

    # single-pass global BN statistics over valid conv-output positions only:
    # resident tile-periodic interior mask * in-bounds (flat index < ns) check.
    lane = jax.lax.broadcasted_iota(jnp.int32, (1, tm), 1)
    valid = mask_ref[...] * (lane + j * tm < ns).astype(jnp.float32)
    ym = yv * valid
    sum_ref[...] += jnp.sum(ym, axis=1, keepdims=True)
    ssq_ref[...] += jnp.sum(ym * ym, axis=1, keepdims=True)


def _bn_swish_kernel(y_ref, ss_ref, o_ref):
    z = y_ref[...] * ss_ref[:, 0:1] + ss_ref[:, 1:2]
    o_ref[...] = z * jax.nn.sigmoid(z)


def conv_block_1d(x, w, b, gamma, beta, kernel_size=3, tm=2048, eps=1e-5):
    """x: (N, Cin, D, H, W) f32.  w: (Cout, Cin, k, k, k).  Returns NCDHW output.

    `b` (Conv3d bias) is accepted for API parity but unused: training-mode
    BatchNorm's mean subtraction cancels it exactly.
    """
    del b
    N, Cin, D, H, W = x.shape
    k = kernel_size
    Cout = w.shape[0]
    Do, Ho, Wo = D - k + 1, H - k + 1, W - k + 1

    cg = 8 * pl.cdiv(Cin, 8)            # sublane-padded contraction (VMEM only)
    cog = 8 * pl.cdiv(Cout, 8)          # sublane-padded weight rows (VMEM only)
    ns = N * D * H * W                  # flattened batch+spatial (lane axis)
    cyc = D * H * W

    # tap offsets in the flattened (n, d, h, w) index; valid outputs never
    # cross a sample boundary, so a flat shift == the 3-D shifted window.
    taps = tuple(kd * H * W + kh * W + kw
                 for kd in range(k) for kh in range(k) for kw in range(k))
    halo = 128 * pl.cdiv(max(taps) + 1, 128)      # narrow halo block (lanes)

    # tm must be a multiple of `halo` (halo BlockSpec indexing) and of D*H*W
    # (tile-periodic interior mask); clamp so tiny inputs are not over-padded.
    unit = halo * cyc // math.gcd(halo, cyc)
    tm = max(unit, (tm // unit) * unit)
    tm = min(tm, unit * pl.cdiv(ns, unit))
    assert tm % halo == 0 and tm % cyc == 0
    num_tiles = pl.cdiv(ns, tm)
    nsp = num_tiles * tm
    hb = tm // halo

    # channels -> sublanes (unpadded in HBM), spatial -> lanes (+halo pad)
    xt = x.transpose(1, 0, 2, 3, 4).reshape(Cin, ns)
    xt = jnp.pad(xt, ((0, 0), (0, nsp + halo - ns)))

    # weights (Cout, Cin, kd, kh, kw) -> (k^3 taps, cog, cg), zero-padded
    wt = w.transpose(2, 3, 4, 0, 1).reshape(k ** 3, Cout, Cin)
    wt = jnp.pad(wt, ((0, 0), (0, cog - Cout), (0, cg - Cin)))

    # tile-periodic interior-validity mask (one (1, tm) tile, resident in VMEM)
    idx = jnp.arange(cyc, dtype=jnp.int32)
    base = (((idx // (H * W)) < Do) & (((idx // W) % H) < Ho)
            & ((idx % W) < Wo)).astype(jnp.float32)
    base_mask = jnp.tile(base, tm // cyc).reshape(1, tm)

    kern1 = functools.partial(_conv_stats_kernel, taps=taps, tm=tm,
                              cin=Cin, cg=cg, ns=ns)
    y_full, ysum, yssq = pl.pallas_call(
        kern1,
        out_shape=(jax.ShapeDtypeStruct((Cout, nsp), jnp.float32),
                   jax.ShapeDtypeStruct((Cout, 1), jnp.float32),
                   jax.ShapeDtypeStruct((Cout, 1), jnp.float32)),
        grid=(num_tiles,),
        in_specs=[
            pl.BlockSpec((Cin, tm), lambda j: (0, j)),              # tile
            pl.BlockSpec((Cin, halo), lambda j: (0, (j + 1) * hb)),  # halo
            pl.BlockSpec((1, tm), lambda j: (0, 0)),                # mask
            pl.BlockSpec((k ** 3, cog, cg), lambda j: (0, 0, 0)),   # weights
        ],
        out_specs=(
            pl.BlockSpec((Cout, tm), lambda j: (0, j)),             # conv out
            pl.BlockSpec((Cout, 1), lambda j: (0, 0)),              # sum
            pl.BlockSpec((Cout, 1), lambda j: (0, 0)),              # sumsq
        ),
        scratch_shapes=[pltpu.VMEM((cg, tm + halo), jnp.float32)],  # halo slab
        compiler_params=pltpu.CompilerParams(
            dimension_semantics=("arbitrary",)),
    )(xt, xt, base_mask, wt)

    # tiny per-channel math: fold mean/var/gamma/beta into one scale + shift
    cnt = float(N * Do * Ho * Wo)
    mean = ysum[:, 0] / cnt
    var = yssq[:, 0] / cnt - mean * mean
    scale = gamma * jax.lax.rsqrt(var + eps)
    shift = beta - mean * scale
    ss = jnp.stack([scale, shift], axis=1)                          # (Cout, 2)

    out_full = pl.pallas_call(
        _bn_swish_kernel,
        out_shape=jax.ShapeDtypeStruct((Cout, nsp), jnp.float32),
        grid=(num_tiles,),
        in_specs=[
            pl.BlockSpec((Cout, tm), lambda j: (0, j)),
            pl.BlockSpec((Cout, 2), lambda j: (0, 0)),
        ],
        out_specs=pl.BlockSpec((Cout, tm), lambda j: (0, j)),
        compiler_params=pltpu.CompilerParams(
            dimension_semantics=("parallel",)),
    )(y_full, ss)

    # extract the valid conv region and return NCDHW
    out = out_full[:, :ns].reshape(Cout, N, D, H, W)[:, :, :Do, :Ho, :Wo]
    return out.transpose(1, 0, 2, 3, 4)


def reference(x, w, b, gamma, beta):
    y = jax.lax.conv_general_dilated(
        x, w, window_strides=(1, 1, 1), padding='VALID',
        dimension_numbers=('NCDHW', 'OIDHW', 'NCDHW'))
    y = y + b.reshape(1, -1, 1, 1, 1)
    mean = y.mean(axis=(0, 2, 3, 4), keepdims=True)
    var = ((y - mean) ** 2).mean(axis=(0, 2, 3, 4), keepdims=True)
    yn = (y - mean) * jax.lax.rsqrt(var + 1e-5)
    yn = yn * gamma.reshape(1, -1, 1, 1, 1) + beta.reshape(1, -1, 1, 1, 1)
    return yn * jax.nn.sigmoid(yn)


if __name__ == "__main__":
    # ConvBlock1D(in_channels=4), seq='CBA' -> Conv3d(4, 4, 3), BatchNorm3d(4), Swish
    N, Cin, Cout, k = 2, 4, 4, 3
    D = H = W = 8

    key = jax.random.PRNGKey(0)
    kx, kw, kb = jax.random.split(key, 3)
    x = jax.random.normal(kx, (N, Cin, D, H, W), dtype=jnp.float32)
    w = 0.1 * jax.random.normal(kw, (Cout, Cin, k, k, k), dtype=jnp.float32)
    b = 0.05 * jax.random.normal(kb, (Cout,), dtype=jnp.float32)
    gamma = jnp.ones((Cout,), dtype=jnp.float32)   # BatchNorm default weight
    beta = jnp.zeros((Cout,), dtype=jnp.float32)   # BatchNorm default bias

    out = conv_block_1d(x, w, b, gamma, beta, kernel_size=k)
    out = jax.block_until_ready(out)

    ref = reference(x, w, b, gamma, beta)
    assert out.shape == (N, Cout, D - k + 1, H - k + 1, W - k + 1), out.shape
    err = float(jnp.abs(out - ref).max())
    assert jnp.allclose(out, ref, atol=2e-4, rtol=2e-4), err
    print("KERNEL_OK")
</pallas_src>

<mosaic_0001>
module attributes {stable_mosaic.version = 11 : i64} {
  func.func @_conv_stats_kernel(%arg0: i32, %arg1: memref<4x1024xf32, #tpu.memory_space<vmem>>, %arg2: memref<4x256xf32, #tpu.memory_space<vmem>>, %arg3: memref<1x1024xf32, #tpu.memory_space<vmem>>, %arg4: memref<27x8x8xf32, #tpu.memory_space<vmem>>, %arg5: memref<4x1024xf32, #tpu.memory_space<vmem>>, %arg6: memref<4x1xf32, #tpu.memory_space<vmem>>, %arg7: memref<4x1xf32, #tpu.memory_space<vmem>>, %arg8: memref<8x1280xf32, #tpu.memory_space<vmem>>) attributes {dimension_semantics = [#tpu.dimension_semantics<arbitrary>], iteration_bounds = array<i64: 1>, scalar_prefetch = 0 : i64, scratch_operands = 1 : i64, tpu.core_type = #tpu.core_type<tc>, window_params = [{transform_indices = @transform_0, window_bounds = array<i64: 4, 1024>}, {transform_indices = @transform_1, window_bounds = array<i64: 4, 256>}, {pipeline_mode = #tpu.pipeline_mode<synchronous>, transform_indices = @transform_2, window_bounds = array<i64: 1, 1024>}, {pipeline_mode = #tpu.pipeline_mode<synchronous>, transform_indices = @transform_3, window_bounds = array<i64: 27, 8, 8>}, {transform_indices = @transform_4, window_bounds = array<i64: 4, 1024>}, {pipeline_mode = #tpu.pipeline_mode<synchronous>, transform_indices = @transform_5, window_bounds = array<i64: 4, 1>}, {pipeline_mode = #tpu.pipeline_mode<synchronous>, transform_indices = @transform_6, window_bounds = array<i64: 4, 1>}]} {
    %c0_i32 = arith.constant 0 : i32
    %0 = arith.cmpi eq, %arg0, %c0_i32 : i32
    %1 = arith.extui %0 : i1 to i32
    %c0_i32_0 = arith.constant 0 : i32
    %2 = arith.cmpi ne, %1, %c0_i32_0 : i32
    scf.if %2 {
      %cst_139 = arith.constant 0.000000e+00 : f32
      %166 = vector.broadcast %cst_139 : f32 to vector<4x1xf32>
      %c0_140 = arith.constant 0 : index
      %c0_141 = arith.constant 0 : index
      %167 = vector.load %arg6[%c0_140, %c0_141] : memref<4x1xf32, #tpu.memory_space<vmem>>, vector<4x1xf32>
      tpu.vector_store %arg6[%c0_140, %c0_141], %166 {strides = array<i32>} : memref<4x1xf32, #tpu.memory_space<vmem>>, vector<4x1xf32>,
      %cst_142 = arith.constant 0.000000e+00 : f32
      %168 = vector.broadcast %cst_142 : f32 to vector<4x1xf32>
      %c0_143 = arith.constant 0 : index
      %c0_144 = arith.constant 0 : index
      %169 = vector.load %arg7[%c0_143, %c0_144] : memref<4x1xf32, #tpu.memory_space<vmem>>, vector<4x1xf32>
      tpu.vector_store %arg7[%c0_143, %c0_144], %168 {strides = array<i32>} : memref<4x1xf32, #tpu.memory_space<vmem>>, vector<4x1xf32>,
      %cst_145 = arith.constant 0.000000e+00 : f32
      %170 = vector.broadcast %cst_145 : f32 to vector<4x1280xf32>
      %c4_146 = arith.constant 4 : index
      %c0_147 = arith.constant 0 : index
      %171 = vector.load %arg8[%c4_146, %c0_147] : memref<8x1280xf32, #tpu.memory_space<vmem>>, vector<4x1280xf32>
      tpu.vector_store %arg8[%c4_146, %c0_147], %170 {strides = array<i32>} : memref<8x1280xf32, #tpu.memory_space<vmem>>, vector<4x1280xf32>,
    } else {
    }
    %c0 = arith.constant 0 : index
    %c0_1 = arith.constant 0 : index
    %3 = vector.load %arg1[%c0, %c0_1] : memref<4x1024xf32, #tpu.memory_space<vmem>>, vector<4x1024xf32>
    %c0_2 = arith.constant 0 : index
    %c0_3 = arith.constant 0 : index
    %4 = vector.load %arg8[%c0_2, %c0_3] : memref<8x1280xf32, #tpu.memory_space<vmem>>, vector<4x1024xf32>
    tpu.vector_store %arg8[%c0_2, %c0_3], %3 {strides = array<i32>} : memref<8x1280xf32, #tpu.memory_space<vmem>>, vector<4x1024xf32>,
    %c0_4 = arith.constant 0 : index
    %c0_5 = arith.constant 0 : index
    %5 = vector.load %arg2[%c0_4, %c0_5] : memref<4x256xf32, #tpu.memory_space<vmem>>, vector<4x256xf32>
    %c0_6 = arith.constant 0 : index
    %c1024 = arith.constant 1024 : index
    %6 = vector.load %arg8[%c0_6, %c1024] : memref<8x1280xf32, #tpu.memory_space<vmem>>, vector<4x256xf32>
    tpu.vector_store %arg8[%c0_6, %c1024], %5 {strides = array<i32>} : memref<8x1280xf32, #tpu.memory_space<vmem>>, vector<4x256xf32>,
    %c0_7 = arith.constant 0 : index
    %c0_8 = arith.constant 0 : index
    %c0_9 = arith.constant 0 : index
    %7 = vector.load %arg4[%c0_7, %c0_8, %c0_9] : memref<27x8x8xf32, #tpu.memory_space<vmem>>, vector<1x8x8xf32>
    %8 = vector.shape_cast %7 : vector<1x8x8xf32> to vector<8x8xf32>
    %c0_10 = arith.constant 0 : index
    %c0_11 = arith.constant 0 : index
    %9 = vector.load %arg8[%c0_10, %c0_11] : memref<8x1280xf32, #tpu.memory_space<vmem>>, vector<8x1024xf32>
    %cst = arith.constant dense<0.000000e+00> : vector<8x1024xf32>
    %10 = tpu.matmul %8, %9, %cst {dimension_numbers = #tpu.dot_dimension_numbers<[1], [0], [0], [1], [0, 0, 1, 1], [], []>} : vector<8x8xf32>, vector<8x1024xf32>, vector<8x1024xf32> -> vector<8x1024xf32>
    %c1 = arith.constant 1 : index
    %c0_12 = arith.constant 0 : index
    %c0_13 = arith.constant 0 : index
    %11 = vector.load %arg4[%c1, %c0_12, %c0_13] : memref<27x8x8xf32, #tpu.memory_space<vmem>>, vector<1x8x8xf32>
    %12 = vector.shape_cast %11 : vector<1x8x8xf32> to vector<8x8xf32>
    %c0_14 = arith.constant 0 : index
    %c1_15 = arith.constant 1 : index
    %13 = vector.load %arg8[%c0_14, %c1_15] : memref<8x1280xf32, #tpu.memory_space<vmem>>, vector<8x1024xf32>
    %cst_16 = arith.constant dense<0.000000e+00> : vector<8x1024xf32>
    %14 = tpu.matmul %12, %13, %cst_16 {dimension_numbers = #tpu.dot_dimension_numbers<[1], [0], [0], [1], [0, 0, 1, 1], [], []>} : vector<8x8xf32>, vector<8x1024xf32>, vector<8x1024xf32> -> vector<8x1024xf32>
    %15 = arith.addf %10, %14 : vector<8x1024xf32>
    %c2 = arith.constant 2 : index
    %c0_17 = arith.constant 0 : index
    %c0_18 = arith.constant 0 : index
    %16 = vector.load %arg4[%c2, %c0_17, %c0_18] : memref<27x8x8xf32, #tpu.memory_space<vmem>>, vector<1x8x8xf32>
    %17 = vector.shape_cast %16 : vector<1x8x8xf32> to vector<8x8xf32>
    %c0_19 = arith.constant 0 : index
    %c2_20 = arith.constant 2 : index
    %18 = vector.load %arg8[%c0_19, %c2_20] : memref<8x1280xf32, #tpu.memory_space<vmem>>, vector<8x1024xf32>
    %cst_21 = arith.constant dense<0.000000e+00> : vector<8x1024xf32>
    %19 = tpu.matmul %17, %18, %cst_21 {dimension_numbers = #tpu.dot_dimension_numbers<[1], [0], [0], [1], [0, 0, 1, 1], [], []>} : vector<8x8xf32>, vector<8x1024xf32>, vector<8x1024xf32> -> vector<8x1024xf32>
    %20 = arith.addf %15, %19 : vector<8x1024xf32>
    %c3 = arith.constant 3 : index
    %c0_22 = arith.constant 0 : index
    %c0_23 = arith.constant 0 : index
    %21 = vector.load %arg4[%c3, %c0_22, %c0_23] : memref<27x8x8xf32, #tpu.memory_space<vmem>>, vector<1x8x8xf32>
    %22 = vector.shape_cast %21 : vector<1x8x8xf32> to vector<8x8xf32>
    %c0_24 = arith.constant 0 : index
    %c8 = arith.constant 8 : index
    %23 = vector.load %arg8[%c0_24, %c8] : memref<8x1280xf32, #tpu.memory_space<vmem>>, vector<8x1024xf32>
    %cst_25 = arith.constant dense<0.000000e+00> : vector<8x1024xf32>
    %24 = tpu.matmul %22, %23, %cst_25 {dimension_numbers = #tpu.dot_dimension_numbers<[1], [0], [0], [1], [0, 0, 1, 1], [], []>} : vector<8x8xf32>, vector<8x1024xf32>, vector<8x1024xf32> -> vector<8x1024xf32>
    %25 = arith.addf %20, %24 : vector<8x1024xf32>
    %c4 = arith.constant 4 : index
    %c0_26 = arith.constant 0 : index
    %c0_27 = arith.constant 0 : index
    %26 = vector.load %arg4[%c4, %c0_26, %c0_27] : memref<27x8x8xf32, #tpu.memory_space<vmem>>, vector<1x8x8xf32>
    %27 = vector.shape_cast %26 : vector<1x8x8xf32> to vector<8x8xf32>
    %c0_28 = arith.constant 0 : index
    %c9 = arith.constant 9 : index
    %28 = vector.load %arg8[%c0_28, %c9] : memref<8x1280xf32, #tpu.memory_space<vmem>>, vector<8x1024xf32>
    %cst_29 = arith.constant dense<0.000000e+00> : vector<8x1024xf32>
    %29 = tpu.matmul %27, %28, %cst_29 {dimension_numbers = #tpu.dot_dimension_numbers<[1], [0], [0], [1], [0, 0, 1, 1], [], []>} : vector<8x8xf32>, vector<8x1024xf32>, vector<8x1024xf32> -> vector<8x1024xf32>
    %30 = arith.addf %25, %29 : vector<8x1024xf32>
    %c5 = arith.constant 5 : index
    %c0_30 = arith.constant 0 : index
    %c0_31 = arith.constant 0 : index
    %31 = vector.load %arg4[%c5, %c0_30, %c0_31] : memref<27x8x8xf32, #tpu.memory_space<vmem>>, vector<1x8x8xf32>
    %32 = vector.shape_cast %31 : vector<1x8x8xf32> to vector<8x8xf32>
    %c0_32 = arith.constant 0 : index
    %c10 = arith.constant 10 : index
    %33 = vector.load %arg8[%c0_32, %c10] : memref<8x1280xf32, #tpu.memory_space<vmem>>, vector<8x1024xf32>
    %cst_33 = arith.constant dense<0.000000e+00> : vector<8x1024xf32>
    %34 = tpu.matmul %32, %33, %cst_33 {dimension_numbers = #tpu.dot_dimension_numbers<[1], [0], [0], [1], [0, 0, 1, 1], [], []>} : vector<8x8xf32>, vector<8x1024xf32>, vector<8x1024xf32> -> vector<8x1024xf32>
    %35 = arith.addf %30, %34 : vector<8x1024xf32>
    %c6 = arith.constant 6 : index
    %c0_34 = arith.constant 0 : index
    %c0_35 = arith.constant 0 : index
    %36 = vector.load %arg4[%c6, %c0_34, %c0_35] : memref<27x8x8xf32, #tpu.memory_space<vmem>>, vector<1x8x8xf32>
    %37 = vector.shape_cast %36 : vector<1x8x8xf32> to vector<8x8xf32>
    %c0_36 = arith.constant 0 : index
    %c16 = arith.constant 16 : index
    %38 = vector.load %arg8[%c0_36, %c16] : memref<8x1280xf32, #tpu.memory_space<vmem>>, vector<8x1024xf32>
    %cst_37 = arith.constant dense<0.000000e+00> : vector<8x1024xf32>
    %39 = tpu.matmul %37, %38, %cst_37 {dimension_numbers = #tpu.dot_dimension_numbers<[1], [0], [0], [1], [0, 0, 1, 1], [], []>} : vector<8x8xf32>, vector<8x1024xf32>, vector<8x1024xf32> -> vector<8x1024xf32>
    %40 = arith.addf %35, %39 : vector<8x1024xf32>
    %c7 = arith.constant 7 : index
    %c0_38 = arith.constant 0 : index
    %c0_39 = arith.constant 0 : index
    %41 = vector.load %arg4[%c7, %c0_38, %c0_39] : memref<27x8x8xf32, #tpu.memory_space<vmem>>, vector<1x8x8xf32>
    %42 = vector.shape_cast %41 : vector<1x8x8xf32> to vector<8x8xf32>
    %c0_40 = arith.constant 0 : index
    %c17 = arith.constant 17 : index
    %43 = vector.load %arg8[%c0_40, %c17] : memref<8x1280xf32, #tpu.memory_space<vmem>>, vector<8x1024xf32>
    %cst_41 = arith.constant dense<0.000000e+00> : vector<8x1024xf32>
    %44 = tpu.matmul %42, %43, %cst_41 {dimension_numbers = #tpu.dot_dimension_numbers<[1], [0], [0], [1], [0, 0, 1, 1], [], []>} : vector<8x8xf32>, vector<8x1024xf32>, vector<8x1024xf32> -> vector<8x1024xf32>
    %45 = arith.addf %40, %44 : vector<8x1024xf32>
    %c8_42 = arith.constant 8 : index
    %c0_43 = arith.constant 0 : index
    %c0_44 = arith.constant 0 : index
    %46 = vector.load %arg4[%c8_42, %c0_43, %c0_44] : memref<27x8x8xf32, #tpu.memory_space<vmem>>, vector<1x8x8xf32>
    %47 = vector.shape_cast %46 : vector<1x8x8xf32> to vector<8x8xf32>
    %c0_45 = arith.constant 0 : index
    %c18 = arith.constant 18 : index
    %48 = vector.load %arg8[%c0_45, %c18] : memref<8x1280xf32, #tpu.memory_space<vmem>>, vector<8x1024xf32>
    %cst_46 = arith.constant dense<0.000000e+00> : vector<8x1024xf32>
    %49 = tpu.matmul %47, %48, %cst_46 {dimension_numbers = #tpu.dot_dimension_numbers<[1], [0], [0], [1], [0, 0, 1, 1], [], []>} : vector<8x8xf32>, vector<8x1024xf32>, vector<8x1024xf32> -> vector<8x1024xf32>
    %50 = arith.addf %45, %49 : vector<8x1024xf32>
    %c9_47 = arith.constant 9 : index
    %c0_48 = arith.constant 0 : index
    %c0_49 = arith.constant 0 : index
    %51 = vector.load %arg4[%c9_47, %c0_48, %c0_49] : memref<27x8x8xf32, #tpu.memory_space<vmem>>, vector<1x8x8xf32>
    %52 = vector.shape_cast %51 : vector<1x8x8xf32> to vector<8x8xf32>
    %c0_50 = arith.constant 0 : index
    %c64 = arith.constant 64 : index
    %53 = vector.load %arg8[%c0_50, %c64] : memref<8x1280xf32, #tpu.memory_space<vmem>>, vector<8x1024xf32>
    %cst_51 = arith.constant dense<0.000000e+00> : vector<8x1024xf32>
    %54 = tpu.matmul %52, %53, %cst_51 {dimension_numbers = #tpu.dot_dimension_numbers<[1], [0], [0], [1], [0, 0, 1, 1], [], []>} : vector<8x8xf32>, vector<8x1024xf32>, vector<8x1024xf32> -> vector<8x1024xf32>
    %55 = arith.addf %50, %54 : vector<8x1024xf32>
    %c10_52 = arith.constant 10 : index
    %c0_53 = arith.constant 0 : index
    %c0_54 = arith.constant 0 : index
    %56 = vector.load %arg4[%c10_52, %c0_53, %c0_54] : memref<27x8x8xf32, #tpu.memory_space<vmem>>, vector<1x8x8xf32>
    %57 = vector.shape_cast %56 : vector<1x8x8xf32> to vector<8x8xf32>
    %c0_55 = arith.constant 0 : index
    %c65 = arith.constant 65 : index
    %58 = vector.load %arg8[%c0_55, %c65] : memref<8x1280xf32, #tpu.memory_space<vmem>>, vector<8x1024xf32>
    %cst_56 = arith.constant dense<0.000000e+00> : vector<8x1024xf32>
    %59 = tpu.matmul %57, %58, %cst_56 {dimension_numbers = #tpu.dot_dimension_numbers<[1], [0], [0], [1], [0, 0, 1, 1], [], []>} : vector<8x8xf32>, vector<8x1024xf32>, vector<8x1024xf32> -> vector<8x1024xf32>
    %60 = arith.addf %55, %59 : vector<8x1024xf32>
    %c11 = arith.constant 11 : index
    %c0_57 = arith.constant 0 : index
    %c0_58 = arith.constant 0 : index
    %61 = vector.load %arg4[%c11, %c0_57, %c0_58] : memref<27x8x8xf32, #tpu.memory_space<vmem>>, vector<1x8x8xf32>
    %62 = vector.shape_cast %61 : vector<1x8x8xf32> to vector<8x8xf32>
    %c0_59 = arith.constant 0 : index
    %c66 = arith.constant 66 : index
    %63 = vector.load %arg8[%c0_59, %c66] : memref<8x1280xf32, #tpu.memory_space<vmem>>, vector<8x1024xf32>
    %cst_60 = arith.constant dense<0.000000e+00> : vector<8x1024xf32>
    %64 = tpu.matmul %62, %63, %cst_60 {dimension_numbers = #tpu.dot_dimension_numbers<[1], [0], [0], [1], [0, 0, 1, 1], [], []>} : vector<8x8xf32>, vector<8x1024xf32>, vector<8x1024xf32> -> vector<8x1024xf32>
    %65 = arith.addf %60, %64 : vector<8x1024xf32>
    %c12 = arith.constant 12 : index
    %c0_61 = arith.constant 0 : index
    %c0_62 = arith.constant 0 : index
    %66 = vector.load %arg4[%c12, %c0_61, %c0_62] : memref<27x8x8xf32, #tpu.memory_space<vmem>>, vector<1x8x8xf32>
    %67 = vector.shape_cast %66 : vector<1x8x8xf32> to vector<8x8xf32>
    %c0_63 = arith.constant 0 : index
    %c72 = arith.constant 72 : index
    %68 = vector.load %arg8[%c0_63, %c72] : memref<8x1280xf32, #tpu.memory_space<vmem>>, vector<8x1024xf32>
    %cst_64 = arith.constant dense<0.000000e+00> : vector<8x1024xf32>
    %69 = tpu.matmul %67, %68, %cst_64 {dimension_numbers = #tpu.dot_dimension_numbers<[1], [0], [0], [1], [0, 0, 1, 1], [], []>} : vector<8x8xf32>, vector<8x1024xf32>, vector<8x1024xf32> -> vector<8x1024xf32>
    %70 = arith.addf %65, %69 : vector<8x1024xf32>
    %c13 = arith.constant 13 : index
    %c0_65 = arith.constant 0 : index
    %c0_66 = arith.constant 0 : index
    %71 = vector.load %arg4[%c13, %c0_65, %c0_66] : memref<27x8x8xf32, #tpu.memory_space<vmem>>, vector<1x8x8xf32>
    %72 = vector.shape_cast %71 : vector<1x8x8xf32> to vector<8x8xf32>
    %c0_67 = arith.constant 0 : index
    %c73 = arith.constant 73 : index
    %73 = vector.load %arg8[%c0_67, %c73] : memref<8x1280xf32, #tpu.memory_space<vmem>>, vector<8x1024xf32>
    %cst_68 = arith.constant dense<0.000000e+00> : vector<8x1024xf32>
    %74 = tpu.matmul %72, %73, %cst_68 {dimension_numbers = #tpu.dot_dimension_numbers<[1], [0], [0], [1], [0, 0, 1, 1], [], []>} : vector<8x8xf32>, vector<8x1024xf32>, vector<8x1024xf32> -> vector<8x1024xf32>
    %75 = arith.addf %70, %74 : vector<8x1024xf32>
    %c14 = arith.constant 14 : index
    %c0_69 = arith.constant 0 : index
    %c0_70 = arith.constant 0 : index
    %76 = vector.load %arg4[%c14, %c0_69, %c0_70] : memref<27x8x8xf32, #tpu.memory_space<vmem>>, vector<1x8x8xf32>
    %77 = vector.shape_cast %76 : vector<1x8x8xf32> to vector<8x8xf32>
    %c0_71 = arith.constant 0 : index
    %c74 = arith.constant 74 : index
    %78 = vector.load %arg8[%c0_71, %c74] : memref<8x1280xf32, #tpu.memory_space<vmem>>, vector<8x1024xf32>
    %cst_72 = arith.constant dense<0.000000e+00> : vector<8x1024xf32>
    %79 = tpu.matmul %77, %78, %cst_72 {dimension_numbers = #tpu.dot_dimension_numbers<[1], [0], [0], [1], [0, 0, 1, 1], [], []>} : vector<8x8xf32>, vector<8x1024xf32>, vector<8x1024xf32> -> vector<8x1024xf32>
    %80 = arith.addf %75, %79 : vector<8x1024xf32>
    %c15 = arith.constant 15 : index
    %c0_73 = arith.constant 0 : index
    %c0_74 = arith.constant 0 : index
    %81 = vector.load %arg4[%c15, %c0_73, %c0_74] : memref<27x8x8xf32, #tpu.memory_space<vmem>>, vector<1x8x8xf32>
    %82 = vector.shape_cast %81 : vector<1x8x8xf32> to vector<8x8xf32>
    %c0_75 = arith.constant 0 : index
    %c80 = arith.constant 80 : index
    %83 = vector.load %arg8[%c0_75, %c80] : memref<8x1280xf32, #tpu.memory_space<vmem>>, vector<8x1024xf32>
    %cst_76 = arith.constant dense<0.000000e+00> : vector<8x1024xf32>
    %84 = tpu.matmul %82, %83, %cst_76 {dimension_numbers = #tpu.dot_dimension_numbers<[1], [0], [0], [1], [0, 0, 1, 1], [], []>} : vector<8x8xf32>, vector<8x1024xf32>, vector<8x1024xf32> -> vector<8x1024xf32>
    %85 = arith.addf %80, %84 : vector<8x1024xf32>
    %c16_77 = arith.constant 16 : index
    %c0_78 = arith.constant 0 : index
    %c0_79 = arith.constant 0 : index
    %86 = vector.load %arg4[%c16_77, %c0_78, %c0_79] : memref<27x8x8xf32, #tpu.memory_space<vmem>>, vector<1x8x8xf32>
    %87 = vector.shape_cast %86 : vector<1x8x8xf32> to vector<8x8xf32>
    %c0_80 = arith.constant 0 : index
    %c81 = arith.constant 81 : index
    %88 = vector.load %arg8[%c0_80, %c81] : memref<8x1280xf32, #tpu.memory_space<vmem>>, vector<8x1024xf32>
    %cst_81 = arith.constant dense<0.000000e+00> : vector<8x1024xf32>
    %89 = tpu.matmul %87, %88, %cst_81 {dimension_numbers = #tpu.dot_dimension_numbers<[1], [0], [0], [1], [0, 0, 1, 1], [], []>} : vector<8x8xf32>, vector<8x1024xf32>, vector<8x1024xf32> -> vector<8x1024xf32>
    %90 = arith.addf %85, %89 : vector<8x1024xf32>
    %c17_82 = arith.constant 17 : index
    %c0_83 = arith.constant 0 : index
    %c0_84 = arith.constant 0 : index
    %91 = vector.load %arg4[%c17_82, %c0_83, %c0_84] : memref<27x8x8xf32, #tpu.memory_space<vmem>>, vector<1x8x8xf32>
    %92 = vector.shape_cast %91 : vector<1x8x8xf32> to vector<8x8xf32>
    %c0_85 = arith.constant 0 : index
    %c82 = arith.constant 82 : index
    %93 = vector.load %arg8[%c0_85, %c82] : memref<8x1280xf32, #tpu.memory_space<vmem>>, vector<8x1024xf32>
    %cst_86 = arith.constant dense<0.000000e+00> : vector<8x1024xf32>
    %94 = tpu.matmul %92, %93, %cst_86 {dimension_numbers = #tpu.dot_dimension_numbers<[1], [0], [0], [1], [0, 0, 1, 1], [], []>} : vector<8x8xf32>, vector<8x1024xf32>, vector<8x1024xf32> -> vector<8x1024xf32>
    %95 = arith.addf %90, %94 : vector<8x1024xf32>
    %c18_87 = arith.constant 18 : index
    %c0_88 = arith.constant 0 : index
    %c0_89 = arith.constant 0 : index
    %96 = vector.load %arg4[%c18_87, %c0_88, %c0_89] : memref<27x8x8xf32, #tpu.memory_space<vmem>>, vector<1x8x8xf32>
    %97 = vector.shape_cast %96 : vector<1x8x8xf32> to vector<8x8xf32>
    %c0_90 = arith.constant 0 : index
    %c128 = arith.constant 128 : index
    %98 = vector.load %arg8[%c0_90, %c128] : memref<8x1280xf32, #tpu.memory_space<vmem>>, vector<8x1024xf32>
    %cst_91 = arith.constant dense<0.000000e+00> : vector<8x1024xf32>
    %99 = tpu.matmul %97, %98, %cst_91 {dimension_numbers = #tpu.dot_dimension_numbers<[1], [0], [0], [1], [0, 0, 1, 1], [], []>} : vector<8x8xf32>, vector<8x1024xf32>, vector<8x1024xf32> -> vector<8x1024xf32>
    %100 = arith.addf %95, %99 : vector<8x1024xf32>
    %c19 = arith.constant 19 : index
    %c0_92 = arith.constant 0 : index
    %c0_93 = arith.constant 0 : index
    %101 = vector.load %arg4[%c19, %c0_92, %c0_93] : memref<27x8x8xf32, #tpu.memory_space<vmem>>, vector<1x8x8xf32>
    %102 = vector.shape_cast %101 : vector<1x8x8xf32> to vector<8x8xf32>
    %c0_94 = arith.constant 0 : index
    %c129 = arith.constant 129 : index
    %103 = vector.load %arg8[%c0_94, %c129] : memref<8x1280xf32, #tpu.memory_space<vmem>>, vector<8x1024xf32>
    %cst_95 = arith.constant dense<0.000000e+00> : vector<8x1024xf32>
    %104 = tpu.matmul %102, %103, %cst_95 {dimension_numbers = #tpu.dot_dimension_numbers<[1], [0], [0], [1], [0, 0, 1, 1], [], []>} : vector<8x8xf32>, vector<8x1024xf32>, vector<8x1024xf32> -> vector<8x1024xf32>
    %105 = arith.addf %100, %104 : vector<8x1024xf32>
    %c20 = arith.constant 20 : index
    %c0_96 = arith.constant 0 : index
    %c0_97 = arith.constant 0 : index
    %106 = vector.load %arg4[%c20, %c0_96, %c0_97] : memref<27x8x8xf32, #tpu.memory_space<vmem>>, vector<1x8x8xf32>
    %107 = vector.shape_cast %106 : vector<1x8x8xf32> to vector<8x8xf32>
    %c0_98 = arith.constant 0 : index
    %c130 = arith.constant 130 : index
    %108 = vector.load %arg8[%c0_98, %c130] : memref<8x1280xf32, #tpu.memory_space<vmem>>, vector<8x1024xf32>
    %cst_99 = arith.constant dense<0.000000e+00> : vector<8x1024xf32>
    %109 = tpu.matmul %107, %108, %cst_99 {dimension_numbers = #tpu.dot_dimension_numbers<[1], [0], [0], [1], [0, 0, 1, 1], [], []>} : vector<8x8xf32>, vector<8x1024xf32>, vector<8x1024xf32> -> vector<8x1024xf32>
    %110 = arith.addf %105, %109 : vector<8x1024xf32>
    %c21 = arith.constant 21 : index
    %c0_100 = arith.constant 0 : index
    %c0_101 = arith.constant 0 : index
    %111 = vector.load %arg4[%c21, %c0_100, %c0_101] : memref<27x8x8xf32, #tpu.memory_space<vmem>>, vector<1x8x8xf32>
    %112 = vector.shape_cast %111 : vector<1x8x8xf32> to vector<8x8xf32>
    %c0_102 = arith.constant 0 : index
    %c136 = arith.constant 136 : index
    %113 = vector.load %arg8[%c0_102, %c136] : memref<8x1280xf32, #tpu.memory_space<vmem>>, vector<8x1024xf32>
    %cst_103 = arith.constant dense<0.000000e+00> : vector<8x1024xf32>
    %114 = tpu.matmul %112, %113, %cst_103 {dimension_numbers = #tpu.dot_dimension_numbers<[1], [0], [0], [1], [0, 0, 1, 1], [], []>} : vector<8x8xf32>, vector<8x1024xf32>, vector<8x1024xf32> -> vector<8x1024xf32>
    %115 = arith.addf %110, %114 : vector<8x1024xf32>
    %c22 = arith.constant 22 : index
    %c0_104 = arith.constant 0 : index
    %c0_105 = arith.constant 0 : index
    %116 = vector.load %arg4[%c22, %c0_104, %c0_105] : memref<27x8x8xf32, #tpu.memory_space<vmem>>, vector<1x8x8xf32>
    %117 = vector.shape_cast %116 : vector<1x8x8xf32> to vector<8x8xf32>
    %c0_106 = arith.constant 0 : index
    %c137 = arith.constant 137 : index
    %118 = vector.load %arg8[%c0_106, %c137] : memref<8x1280xf32, #tpu.memory_space<vmem>>, vector<8x1024xf32>
    %cst_107 = arith.constant dense<0.000000e+00> : vector<8x1024xf32>
    %119 = tpu.matmul %117, %118, %cst_107 {dimension_numbers = #tpu.dot_dimension_numbers<[1], [0], [0], [1], [0, 0, 1, 1], [], []>} : vector<8x8xf32>, vector<8x1024xf32>, vector<8x1024xf32> -> vector<8x1024xf32>
    %120 = arith.addf %115, %119 : vector<8x1024xf32>
    %c23 = arith.constant 23 : index
    %c0_108 = arith.constant 0 : index
    %c0_109 = arith.constant 0 : index
    %121 = vector.load %arg4[%c23, %c0_108, %c0_109] : memref<27x8x8xf32, #tpu.memory_space<vmem>>, vector<1x8x8xf32>
    %122 = vector.shape_cast %121 : vector<1x8x8xf32> to vector<8x8xf32>
    %c0_110 = arith.constant 0 : index
    %c138 = arith.constant 138 : index
    %123 = vector.load %arg8[%c0_110, %c138] : memref<8x1280xf32, #tpu.memory_space<vmem>>, vector<8x1024xf32>
    %cst_111 = arith.constant dense<0.000000e+00> : vector<8x1024xf32>
    %124 = tpu.matmul %122, %123, %cst_111 {dimension_numbers = #tpu.dot_dimension_numbers<[1], [0], [0], [1], [0, 0, 1, 1], [], []>} : vector<8x8xf32>, vector<8x1024xf32>, vector<8x1024xf32> -> vector<8x1024xf32>
    %125 = arith.addf %120, %124 : vector<8x1024xf32>
    %c24 = arith.constant 24 : index
    %c0_112 = arith.constant 0 : index
    %c0_113 = arith.constant 0 : index
    %126 = vector.load %arg4[%c24, %c0_112, %c0_113] : memref<27x8x8xf32, #tpu.memory_space<vmem>>, vector<1x8x8xf32>
    %127 = vector.shape_cast %126 : vector<1x8x8xf32> to vector<8x8xf32>
    %c0_114 = arith.constant 0 : index
    %c144 = arith.constant 144 : index
    %128 = vector.load %arg8[%c0_114, %c144] : memref<8x1280xf32, #tpu.memory_space<vmem>>, vector<8x1024xf32>
    %cst_115 = arith.constant dense<0.000000e+00> : vector<8x1024xf32>
    %129 = tpu.matmul %127, %128, %cst_115 {dimension_numbers = #tpu.dot_dimension_numbers<[1], [0], [0], [1], [0, 0, 1, 1], [], []>} : vector<8x8xf32>, vector<8x1024xf32>, vector<8x1024xf32> -> vector<8x1024xf32>
    %130 = arith.addf %125, %129 : vector<8x1024xf32>
    %c25 = arith.constant 25 : index
    %c0_116 = arith.constant 0 : index
    %c0_117 = arith.constant 0 : index
    %131 = vector.load %arg4[%c25, %c0_116, %c0_117] : memref<27x8x8xf32, #tpu.memory_space<vmem>>, vector<1x8x8xf32>
    %132 = vector.shape_cast %131 : vector<1x8x8xf32> to vector<8x8xf32>
    %c0_118 = arith.constant 0 : index
    %c145 = arith.constant 145 : index
    %133 = vector.load %arg8[%c0_118, %c145] : memref<8x1280xf32, #tpu.memory_space<vmem>>, vector<8x1024xf32>
    %cst_119 = arith.constant dense<0.000000e+00> : vector<8x1024xf32>
    %134 = tpu.matmul %132, %133, %cst_119 {dimension_numbers = #tpu.dot_dimension_numbers<[1], [0], [0], [1], [0, 0, 1, 1], [], []>} : vector<8x8xf32>, vector<8x1024xf32>, vector<8x1024xf32> -> vector<8x1024xf32>
    %135 = arith.addf %130, %134 : vector<8x1024xf32>
    %c26 = arith.constant 26 : index
    %c0_120 = arith.constant 0 : index
    %c0_121 = arith.constant 0 : index
    %136 = vector.load %arg4[%c26, %c0_120, %c0_121] : memref<27x8x8xf32, #tpu.memory_space<vmem>>, vector<1x8x8xf32>
    %137 = vector.shape_cast %136 : vector<1x8x8xf32> to vector<8x8xf32>
    %c0_122 = arith.constant 0 : index
    %c146 = arith.constant 146 : index
    %138 = vector.load %arg8[%c0_122, %c146] : memref<8x1280xf32, #tpu.memory_space<vmem>>, vector<8x1024xf32>
    %cst_123 = arith.constant dense<0.000000e+00> : vector<8x1024xf32>
    %139 = tpu.matmul %137, %138, %cst_123 {dimension_numbers = #tpu.dot_dimension_numbers<[1], [0], [0], [1], [0, 0, 1, 1], [], []>} : vector<8x8xf32>, vector<8x1024xf32>, vector<8x1024xf32> -> vector<8x1024xf32>
    %140 = arith.addf %135, %139 : vector<8x1024xf32>
    %141 = vector.extract_strided_slice %140 {offsets = [0, 0], sizes = [4, 1024], strides = [1, 1]} : vector<8x1024xf32> to vector<4x1024xf32>
    %c0_124 = arith.constant 0 : index
    %c0_125 = arith.constant 0 : index
    %142 = vector.load %arg5[%c0_124, %c0_125] : memref<4x1024xf32, #tpu.memory_space<vmem>>, vector<4x1024xf32>
    tpu.vector_store %arg5[%c0_124, %c0_125], %141 {strides = array<i32>} : memref<4x1024xf32, #tpu.memory_space<vmem>>, vector<4x1024xf32>,
    %143 = tpu.iota {dimensions = array<i32: 1>} : vector<1x1024xi32>
    %c0_126 = arith.constant 0 : index
    %c0_127 = arith.constant 0 : index
    %144 = vector.load %arg3[%c0_126, %c0_127] : memref<1x1024xf32, #tpu.memory_space<vmem>>, vector<1x1024xf32>
    %c1024_i32 = arith.constant 1024 : i32
    %145 = arith.muli %arg0, %c1024_i32 : i32
    %146 = vector.broadcast %145 : i32 to vector<1x1024xi32>
    %147 = arith.addi %143, %146 : vector<1x1024xi32>
    %c1024_i32_128 = arith.constant 1024 : i32
    %148 = vector.broadcast %c1024_i32_128 : i32 to vector<1x1024xi32>
    %149 = arith.cmpi slt, %147, %148 : vector<1x1024xi32>
    %150 = arith.extui %149 : vector<1x1024xi1> to vector<1x1024xi32>
    %151 = arith.sitofp %150 : vector<1x1024xi32> to vector<1x1024xf32>
    %152 = arith.mulf %144, %151 : vector<1x1024xf32>
    %153 = vector.broadcast %152 : vector<1x1024xf32> to vector<4x1024xf32>
    %154 = arith.mulf %141, %153 : vector<4x1024xf32>
    %c0_129 = arith.constant 0 : index
    %c0_130 = arith.constant 0 : index
    %155 = vector.load %arg6[%c0_129, %c0_130] : memref<4x1xf32, #tpu.memory_space<vmem>>, vector<4x1xf32>
    %cst_131 = arith.constant dense<0.000000e+00> : vector<4xf32>
    %156 = vector.multi_reduction <add>, %154, %cst_131 [1] : vector<4x1024xf32> to vector<4xf32>
    %157 = vector.shape_cast %156 : vector<4xf32> to vector<4x1xf32>
    %158 = arith.addf %155, %157 : vector<4x1xf32>
    %c0_132 = arith.constant 0 : index
    %c0_133 = arith.constant 0 : index
    %159 = vector.load %arg6[%c0_132, %c0_133] : memref<4x1xf32, #tpu.memory_space<vmem>>, vector<4x1xf32>
    tpu.vector_store %arg6[%c0_132, %c0_133], %158 {strides = array<i32>} : memref<4x1xf32, #tpu.memory_space<vmem>>, vector<4x1xf32>,
    %c0_134 = arith.constant 0 : index
    %c0_135 = arith.constant 0 : index
    %160 = vector.load %arg7[%c0_134, %c0_135] : memref<4x1xf32, #tpu.memory_space<vmem>>, vector<4x1xf32>
    %161 = arith.mulf %154, %154 : vector<4x1024xf32>
    %cst_136 = arith.constant dense<0.000000e+00> : vector<4xf32>
    %162 = vector.multi_reduction <add>, %161, %cst_136 [1] : vector<4x1024xf32> to vector<4xf32>
    %163 = vector.shape_cast %162 : vector<4xf32> to vector<4x1xf32>
    %164 = arith.addf %160, %163 : vector<4x1xf32>
    %c0_137 = arith.constant 0 : index
    %c0_138 = arith.constant 0 : index
    %165 = vector.load %arg7[%c0_137, %c0_138] : memref<4x1xf32, #tpu.memory_space<vmem>>, vector<4x1xf32>
    tpu.vector_store %arg7[%c0_137, %c0_138], %164 {strides = array<i32>} : memref<4x1xf32, #tpu.memory_space<vmem>>, vector<4x1xf32>,
    return
  }
  func.func @transform_0(%arg0: i32) -> (i32, i32) {
    %c0_i32 = arith.constant 0 : i32
    %c0_i32_0 = arith.constant 0 : i32
    return %c0_i32, %arg0 : i32, i32
  }
  func.func @transform_1(%arg0: i32) -> (i32, i32) {
    %c1_i32 = arith.constant 1 : i32
    %0 = arith.addi %arg0, %c1_i32 : i32
    %c4_i32 = arith.constant 4 : i32
    %1 = arith.muli %0, %c4_i32 : i32
    %c0_i32 = arith.constant 0 : i32
    %c0_i32_0 = arith.constant 0 : i32
    return %c0_i32, %1 : i32, i32
  }
  func.func @transform_2(%arg0: i32) -> (i32, i32) {
    %c0_i32 = arith.constant 0 : i32
    %c0_i32_0 = arith.constant 0 : i32
    %c0_i32_1 = arith.constant 0 : i32
    return %c0_i32, %c0_i32_0 : i32, i32
  }
  func.func @transform_3(%arg0: i32) -> (i32, i32, i32) {
    %c0_i32 = arith.constant 0 : i32
    %c0_i32_0 = arith.constant 0 : i32
    %c0_i32_1 = arith.constant 0 : i32
    %c0_i32_2 = arith.constant 0 : i32
    return %c0_i32, %c0_i32_0, %c0_i32_1 : i32, i32, i32
  }
  func.func @transform_4(%arg0: i32) -> (i32, i32) {
    %c0_i32 = arith.constant 0 : i32
    %c0_i32_0 = arith.constant 0 : i32
    return %c0_i32, %arg0 : i32, i32
  }
  func.func @transform_5(%arg0: i32) -> (i32, i32) {
    %c0_i32 = arith.constant 0 : i32
    %c0_i32_0 = arith.constant 0 : i32
    %c0_i32_1 = arith.constant 0 : i32
    return %c0_i32, %c0_i32_0 : i32, i32
  }
  func.func @transform_6(%arg0: i32) -> (i32, i32) {
    %c0_i32 = arith.constant 0 : i32
    %c0_i32_0 = arith.constant 0 : i32
    %c0_i32_1 = arith.constant 0 : i32
    return %c0_i32, %c0_i32_0 : i32, i32
  }
}

</mosaic_0001>

<llo_original>
// kernel: tpu_custom_call.1
$region0: #{tpu_custom_call.1}
  #allocation0 [shape = 'u32[]', space=smem, size = 0x4, offset = 0x4, fixed_abs, tag = 'smem constant byte address 0x4 - core index']
  #allocation1 [shape = 'u32[72,128]{1,0:T(1,128)}', space=vmem, size = 0x9000, scoped, tag = 'internal scratch']
  #allocation2 [shape = 'f32[8,1280]{1,0:T(8,128)}', space=vmem, size = 0xa000, scoped, tag = 'scratch operand']
  %s0 = inlined_call_operand.vmem [shape: f32[4,1280], index: 0, kind: input, shape index: {}]
  %s1 = inlined_call_operand.vmem [shape: f32[4,1280], index: 1, kind: input, shape index: {}]
  %s2 = inlined_call_operand.vmem [shape: f32[1,1024], index: 2, kind: input, shape index: {}]
  %s3 = inlined_call_operand.vmem [shape: f32[27,8,8], index: 3, kind: input, shape index: {}]
  %s4 = inlined_call_operand.hbm [shape: f32[4,1024], index: 4, kind: output, shape index: {0}]
  %s5 = inlined_call_operand.vmem [shape: f32[4,1], index: 5, kind: output, shape index: {1}]
  %s6 = inlined_call_operand.vmem [shape: f32[4,1], index: 6, kind: output, shape index: {2}]
  %7 = xla_tuple %s4, %s5, %s6
  %s8 = sld [smem:[#allocation0]]
  $region46: #{tpu_custom_call.1} parent=0
    _
  %s10 = ssub.s32 1, %s8
  %s11 = scalar_select 0, %s10, %s8
  $region1: #{tpu_custom_call.1} parent=0
    #allocation3 [shape = 'u8[16384]{0}', space=vmem, size = 0x4000, scoped, tag = 'output window, operand 0, single buffered']
    #allocation4 [shape = 's32[1]{0}', space=sflag, size = 0x4, scoped, tag = 'scoped memory for tpu_custom_call.1']
    %12 = vsyncpa [#allocation4], 0
    // Predicated region
    $region2: #{tpu_custom_call.1} parent=1 // pred_check
      _
    $region3: #{tpu_custom_call.1} parent=1 // pred_check_branch
      %14 = sbr.rel (0) target = $region5
    $region4: #{tpu_custom_call.1} parent=1 // pred_region
      _
    $region5: #{tpu_custom_call.1} parent=1 // pred_fallthru
      _
    // Predicated region
    $region6: #{tpu_custom_call.1} parent=1 // pred_check
      _
    $region7: #{tpu_custom_call.1} parent=1 // pred_check_branch
      %16 = sbr.rel (0) target = $region9
    $region8: #{tpu_custom_call.1} parent=1 // pred_region
      %s17 = sadd.s32 0, 1
      %s18 = smul.u32 %s17, 4
      %s19 = smul.u32 2, %s18
      %p20 = scmp.lt.s32.totalorder %s19, 9
      %s21 = scalar_select %p20, %s19, 9
      %s22 = smul.addr %s21, 4
      %s23 = scalar_lea.vmem %s1, %s22
      %s24 = sadd.s32 0, 1
      %s25 = smul.u32 %s24, 4
      %s26 = smul.u32 2, %s25
    $region9: #{tpu_custom_call.1} parent=1 // pred_fallthru
      _
    // Predicated region
    $region10: #{tpu_custom_call.1} parent=1 // pred_check
      _
    $region11: #{tpu_custom_call.1} parent=1 // pred_check_branch
      %28 = sbr.rel (0) target = $region13
    $region12: #{tpu_custom_call.1} parent=1 // pred_region
      _
    $region13: #{tpu_custom_call.1} parent=1 // pred_fallthru
      _
    // Predicated region
    $region14: #{tpu_custom_call.1} parent=1 // pred_check
      _
    $region15: #{tpu_custom_call.1} parent=1 // pred_check_branch
      %30 = sbr.rel (0) target = $region17
    $region16: #{tpu_custom_call.1} parent=1 // pred_region
      _
    $region17: #{tpu_custom_call.1} parent=1 // pred_fallthru
      _
    %s31 = sadd.s32 0, 1
    %s32 = smul.u32 %s31, 4
    %s33 = smul.u32 2, %s32
    %p34 = scmp.lt.s32.totalorder %s33, 9
    %s35 = scalar_select %p34, %s33, 9
    %s36 = smul.addr %s35, 4
    %s37 = scalar_lea.vmem %s1, %s36
    %s38 = sadd.s32 0, 1
    %s39 = smul.u32 %s38, 4
    %s40 = smul.u32 2, %s39
    %p41 = scmp.lt.s32.totalorder %s40, 9
    %s42 = scalar_select %p41, %s40, 9
    %s43 = smul.addr %s42, 4
    %s44 = scalar_lea.vmem %s1, %s43
    %s45 = sadd.s32 0, 1
    %s46 = smul.u32 %s45, 4
    %s47 = smul.u32 2, %s46
    %p48 = scmp.eq.s32.totalorder 0, 0
    // Predicated region
    $region18: #{tpu_custom_call.1} parent=1 // pred_check
      %p49 = pneg %p48
    $region19: #{tpu_custom_call.1} parent=1 // pred_check_branch
      %51 = sbr.rel (%p49) target = $region21
    $region20: #{tpu_custom_call.1} parent=1 // pred_region
      %vm52 = vcmask 3072
      %53 = vst.msk [vmem:[%s5] sm:$0xf] %vm52, 0.0
      %54 = vst.msk [vmem:[%s6] sm:$0xf] %vm52, 0.0
      %55 = vst [vmem:[#allocation2] sm:$0xf0] 0.0
      %56 = vst [vmem:[#allocation2 + $0x8] sm:$0xf0] 0.0
      %57 = vst [vmem:[#allocation2 + $0x10] sm:$0xf0] 0.0
      %58 = vst [vmem:[#allocation2 + $0x18] sm:$0xf0] 0.0
      %59 = vst [vmem:[#allocation2 + $0x20] sm:$0xf0] 0.0
      %60 = vst [vmem:[#allocation2 + $0x28] sm:$0xf0] 0.0
      %61 = vst [vmem:[#allocation2 + $0x30] sm:$0xf0] 0.0
      %62 = vst [vmem:[#allocation2 + $0x38] sm:$0xf0] 0.0
      %63 = vst [vmem:[#allocation2 + $0x40] sm:$0xf0] 0.0
      %64 = vst [vmem:[#allocation2 + $0x48] sm:$0xf0] 0.0
    $region21: #{tpu_custom_call.1} parent=1 // pred_fallthru
      _
    %v65 = vld [vmem:[%s0] sm:$0xff]
    %v66 = vld [vmem:[%s0 + $0x8] sm:$0xff]
    %v67 = vld [vmem:[%s0 + $0x10] sm:$0xff]
    %v68 = vld [vmem:[%s0 + $0x18] sm:$0xff]
    %73 = vst [vmem:[#allocation1] ss:$2 sm:$0xff] %v65
    %s74 = scalar_lea.vmem [#allocation1], 16
    %75 = vst [vmem:[%s74] ss:$2 sm:$0xff] %v66
    %s76 = scalar_lea.vmem [#allocation1], 32
    %77 = vst [vmem:[%s76] ss:$2 sm:$0xff] %v67
    %s78 = scalar_lea.vmem [#allocation1], 48
    %79 = vst [vmem:[%s78] ss:$2 sm:$0xff] %v68
    %v80 = vld.sshfl [vmem:[#allocation1] sm:$0xff pattern:$0x75316420]
    %v81 = vld.sshfl [vmem:[#allocation1 + $0x8] sm:$0xff pattern:$0x75316420]
    %v82 = vld.sshfl [vmem:[#allocation1 + $0x10] sm:$0xff pattern:$0x75316420]
    %v83 = vld.sshfl [vmem:[#allocation1 + $0x18] sm:$0xff pattern:$0x75316420]
    %v84 = vld.sshfl [vmem:[#allocation1 + $0x20] sm:$0xff pattern:$0x75316420]
    %v85 = vld.sshfl [vmem:[#allocation1 + $0x28] sm:$0xff pattern:$0x75316420]
    %v86 = vld.sshfl [vmem:[#allocation1 + $0x30] sm:$0xff pattern:$0x75316420]
    %v87 = vld.sshfl [vmem:[#allocation1 + $0x38] sm:$0xff pattern:$0x75316420]
    %96 = vst [vmem:[#allocation2] sm:$0xf] %v80
    %97 = vst [vmem:[#allocation2 + $0x8] sm:$0xf] %v81
    %98 = vst [vmem:[#allocation2 + $0x10] sm:$0xf] %v82
    %99 = vst [vmem:[#allocation2 + $0x18] sm:$0xf] %v83
    %100 = vst [vmem:[#allocation2 + $0x20] sm:$0xf] %v84
    %101 = vst [vmem:[#allocation2 + $0x28] sm:$0xf] %v85
    %102 = vst [vmem:[#allocation2 + $0x30] sm:$0xf] %v86
    %103 = vst [vmem:[#allocation2 + $0x38] sm:$0xf] %v87
    %v104 = vld [vmem:[%s44] sm:$0xff]
    %106 = vst [vmem:[#allocation1] ss:$2 sm:$0xff] %v104
    %v107 = vld.sshfl [vmem:[#allocation1] sm:$0xff pattern:$0x75316420]
    %v108 = vld.sshfl [vmem:[#allocation1 + $0x8] sm:$0xff pattern:$0x75316420]
    %111 = vst [vmem:[#allocation2 + $0x40] sm:$0xf] %v107
    %112 = vst [vmem:[#allocation2 + $0x48] sm:$0xf] %v108
    %v113 = vld [vmem:[%s3] sm:$0xff]
    %v114 = vld [vmem:[#allocation2] sm:$0xff]
    %v115 = vld [vmem:[#allocation2 + $0x8] sm:$0xff]
    %v116 = vld [vmem:[#allocation2 + $0x10] sm:$0xff]
    %v117 = vld [vmem:[#allocation2 + $0x18] sm:$0xff]
    %v118 = vld [vmem:[#allocation2 + $0x20] sm:$0xff]
    %v119 = vld [vmem:[#allocation2 + $0x28] sm:$0xff]
    %v120 = vld [vmem:[#allocation2 + $0x30] sm:$0xff]
    %v121 = vld [vmem:[#allocation2 + $0x38] sm:$0xff]
    %s122 = scalar_lea.vmem %s3, 8
    %v123 = vld [vmem:[%s122] sm:$0xff]
    %v124 = vld [vmem:[#allocation2 + $0x40] sm:$0xff]
    %134 = vrot.lane.b32.xlu0 %v114, 127
    %v135 = vpop.permute.xlu0 %134
    %136 = vrot.lane.b32.xlu0 %v115, 127
    %v137 = vpop.permute.xlu0 %136
    %138 = vrot.lane.b32.xlu0 %v116, 127
    %v139 = vpop.permute.xlu0 %138
    %140 = vrot.lane.b32.xlu0 %v117, 127
    %v141 = vpop.permute.xlu0 %140
    %142 = vrot.lane.b32.xlu0 %v118, 127
    %v143 = vpop.permute.xlu0 %142
    %144 = vrot.lane.b32.xlu0 %v119, 127
    %v145 = vpop.permute.xlu0 %144
    %146 = vrot.lane.b32.xlu0 %v120, 127
    %v147 = vpop.permute.xlu0 %146
    %148 = vrot.lane.b32.xlu0 %v121, 127
    %v149 = vpop.permute.xlu0 %148
    %150 = vrot.lane.b32.xlu0 %v124, 127
    %v151 = vpop.permute.xlu0 %150
    %vm152 = vcmask 1039360
    %v153 = vsel %vm152, %v135, %v137
    %v154 = vsel %vm152, %v137, %v139
    %v155 = vsel %vm152, %v139, %v141
    %v156 = vsel %vm152, %v141, %v143
    %v157 = vsel %vm152, %v143, %v145
    %v158 = vsel %vm152, %v145, %v147
    %v159 = vsel %vm152, %v147, %v149
    %v160 = vsel %vm152, %v149, %v151
    %vm169 = vcmask 64512
    %v171 = vsel %vm169, %v123, 0
    %173 = vmatpush.msra.mxu0 0.0
    %174 = vmatpush.msra.mxu0 0.0
    %175 = vmatpush.msra.mxu0 0.0
    %176 = vmatpush.msra.mxu0 0.0
    %177 = vmatpush.msra.mxu0 0.0
    %178 = vmatpush.msra.mxu0 0.0
    %179 = vmatpush.msra.mxu0 0.0
    %180 = vmatpush.msra.mxu0 0.0
    %181 = vmatpush.msra.mxu0 0.0
    %182 = vmatpush.msra.mxu0 0.0
    %183 = vmatpush.msra.mxu0 0.0
    %184 = vmatpush.msra.mxu0 0.0
    %185 = vmatpush.msra.mxu0 0.0
    %186 = vmatpush.msra.mxu0 0.0
    %187 = vmatpush.msra.mxu0 0.0
    %188 = vmatpush.msra.mxu0 %v153
    %189 = vmatmul.f32.gmra.mxu0 %v171
    %v190 = vpop.f32.mrf.mxu0
    %v191 = vadd.f32 0.0, %v190
    %192 = vdwg.mxu0
    %193 = vmatpush.msra.mxu0 0.0
    %194 = vmatpush.msra.mxu0 0.0
    %195 = vmatpush.msra.mxu0 0.0
    %196 = vmatpush.msra.mxu0 0.0
    %197 = vmatpush.msra.mxu0 0.0
    %198 = vmatpush.msra.mxu0 0.0
    %199 = vmatpush.msra.mxu0 0.0
    %200 = vmatpush.msra.mxu0 0.0
    %201 = vmatpush.msra.mxu0 0.0
    %202 = vmatpush.msra.mxu0 0.0
    %203 = vmatpush.msra.mxu0 0.0
    %204 = vmatpush.msra.mxu0 0.0
    %205 = vmatpush.msra.mxu0 0.0
    %206 = vmatpush.msra.mxu0 0.0
    %207 = vmatpush.msra.mxu0 0.0
    %208 = vmatpush.msra.mxu0 %v154
    %209 = vmatmul.f32.gmra.mxu0 %v171
    %v210 = vpop.f32.mrf.mxu0
    %v211 = vadd.f32 0.0, %v210
    %212 = vdwg.mxu0
    %213 = vmatpush.msra.mxu0 0.0
    %214 = vmatpush.msra.mxu0 0.0
    %215 = vmatpush.msra.mxu0 0.0
    %216 = vmatpush.msra.mxu0 0.0
    %217 = vmatpush.msra.mxu0 0.0
    %218 = vmatpush.msra.mxu0 0.0
    %219 = vmatpush.msra.mxu0 0.0
    %220 = vmatpush.msra.mxu0 0.0
    %221 = vmatpush.msra.mxu0 0.0
    %222 = vmatpush.msra.mxu0 0.0
    %223 = vmatpush.msra.mxu0 0.0
    %224 = vmatpush.msra.mxu0 0.0
    %225 = vmatpush.msra.mxu0 0.0
    %226 = vmatpush.msra.mxu0 0.0
    %227 = vmatpush.msra.mxu0 0.0
    %228 = vmatpush.msra.mxu0 %v155
    %229 = vmatmul.f32.gmra.mxu0 %v171
    %v230 = vpop.f32.mrf.mxu0
    %v231 = vadd.f32 0.0, %v230
    %232 = vdwg.mxu0
    %233 = vmatpush.msra.mxu0 0.0
    %234 = vmatpush.msra.mxu0 0.0
    %235 = vmatpush.msra.mxu0 0.0
    %236 = vmatpush.msra.mxu0 0.0
    %237 = vmatpush.msra.mxu0 0.0
    %238 = vmatpush.msra.mxu0 0.0
    %239 = vmatpush.msra.mxu0 0.0
    %240 = vmatpush.msra.mxu0 0.0
    %241 = vmatpush.msra.mxu0 0.0
    %242 = vmatpush.msra.mxu0 0.0
    %243 = vmatpush.msra.mxu0 0.0
    %244 = vmatpush.msra.mxu0 0.0
    %245 = vmatpush.msra.mxu0 0.0
    %246 = vmatpush.msra.mxu0 0.0
    %247 = vmatpush.msra.mxu0 0.0
    %248 = vmatpush.msra.mxu0 %v156
    %249 = vmatmul.f32.gmra.mxu0 %v171
    %v250 = vpop.f32.mrf.mxu0
    %v251 = vadd.f32 0.0, %v250
    %252 = vdwg.mxu0
    %253 = vmatpush.msra.mxu0 0.0
    %254 = vmatpush.msra.mxu0 0.0
    %255 = vmatpush.msra.mxu0 0.0
    %256 = vmatpush.msra.mxu0 0.0
    %257 = vmatpush.msra.mxu0 0.0
    %258 = vmatpush.msra.mxu0 0.0
    %259 = vmatpush.msra.mxu0 0.0
    %260 = vmatpush.msra.mxu0 0.0
    %261 = vmatpush.msra.mxu0 0.0
    %262 = vmatpush.msra.mxu0 0.0
    %263 = vmatpush.msra.mxu0 0.0
    %264 = vmatpush.msra.mxu0 0.0
    %265 = vmatpush.msra.mxu0 0.0
    %266 = vmatpush.msra.mxu0 0.0
    %267 = vmatpush.msra.mxu0 0.0
    %268 = vmatpush.msra.mxu0 %v157
    %269 = vmatmul.f32.gmra.mxu0 %v171
    %v270 = vpop.f32.mrf.mxu0
    %v271 = vadd.f32 0.0, %v270
    %272 = vdwg.mxu0
    %273 = vmatpush.msra.mxu0 0.0
    %274 = vmatpush.msra.mxu0 0.0
    %275 = vmatpush.msra.mxu0 0.0
    %276 = vmatpush.msra.mxu0 0.0
    %277 = vmatpush.msra.mxu0 0.0
    %278 = vmatpush.msra.mxu0 0.0
    %279 = vmatpush.msra.mxu0 0.0
    %280 = vmatpush.msra.mxu0 0.0
    %281 = vmatpush.msra.mxu0 0.0
    %282 = vmatpush.msra.mxu0 0.0
    %283 = vmatpush.msra.mxu0 0.0
    %284 = vmatpush.msra.mxu0 0.0
    %285 = vmatpush.msra.mxu0 0.0
    %286 = vmatpush.msra.mxu0 0.0
    %287 = vmatpush.msra.mxu0 0.0
    %288 = vmatpush.msra.mxu0 %v158
    %289 = vmatmul.f32.gmra.mxu0 %v171
    %v290 = vpop.f32.mrf.mxu0
    %v291 = vadd.f32 0.0, %v290
    %292 = vdwg.mxu0
    %293 = vmatpush.msra.mxu0 0.0
    %294 = vmatpush.msra.mxu0 0.0
    %295 = vmatpush.msra.mxu0 0.0
    %296 = vmatpush.msra.mxu0 0.0
    %297 = vmatpush.msra.mxu0 0.0
    %298 = vmatpush.msra.mxu0 0.0
    %299 = vmatpush.msra.mxu0 0.0
    %300 = vmatpush.msra.mxu0 0.0
    %301 = vmatpush.msra.mxu0 0.0
    %302 = vmatpush.msra.mxu0 0.0
    %303 = vmatpush.msra.mxu0 0.0
    %304 = vmatpush.msra.mxu0 0.0
    %305 = vmatpush.msra.mxu0 0.0
    %306 = vmatpush.msra.mxu0 0.0
    %307 = vmatpush.msra.mxu0 0.0
    %308 = vmatpush.msra.mxu0 %v159
    %309 = vmatmul.f32.gmra.mxu0 %v171
    %v310 = vpop.f32.mrf.mxu0
    %v311 = vadd.f32 0.0, %v310
    %312 = vdwg.mxu0
    %313 = vmatpush.msra.mxu0 0.0
    %314 = vmatpush.msra.mxu0 0.0
    %315 = vmatpush.msra.mxu0 0.0
    %316 = vmatpush.msra.mxu0 0.0
    %317 = vmatpush.msra.mxu0 0.0
    %318 = vmatpush.msra.mxu0 0.0
    %319 = vmatpush.msra.mxu0 0.0
    %320 = vmatpush.msra.mxu0 0.0
    %321 = vmatpush.msra.mxu0 0.0
    %322 = vmatpush.msra.mxu0 0.0
    %323 = vmatpush.msra.mxu0 0.0
    %324 = vmatpush.msra.mxu0 0.0
    %325 = vmatpush.msra.mxu0 0.0
    %326 = vmatpush.msra.mxu0 0.0
    %327 = vmatpush.msra.mxu0 0.0
    %328 = vmatpush.msra.mxu0 %v160
    %329 = vmatmul.f32.gmra.mxu0 %v171
    %v330 = vpop.f32.mrf.mxu0
    %v331 = vadd.f32 0.0, %v330
    %332 = vdwg.mxu0
    %v334 = vsel %vm169, %v113, 0
    %336 = vmatpush.msra.mxu0 0.0
    %337 = vmatpush.msra.mxu0 0.0
    %338 = vmatpush.msra.mxu0 0.0
    %339 = vmatpush.msra.mxu0 0.0
    %340 = vmatpush.msra.mxu0 0.0
    %341 = vmatpush.msra.mxu0 0.0
    %342 = vmatpush.msra.mxu0 0.0
    %343 = vmatpush.msra.mxu0 0.0
    %344 = vmatpush.msra.mxu0 0.0
    %345 = vmatpush.msra.mxu0 0.0
    %346 = vmatpush.msra.mxu0 0.0
    %347 = vmatpush.msra.mxu0 0.0
    %348 = vmatpush.msra.mxu0 0.0
    %349 = vmatpush.msra.mxu0 0.0
    %350 = vmatpush.msra.mxu0 0.0
    %351 = vmatpush.msra.mxu0 %v114
    %352 = vmatmul.f32.gmra.mxu0 %v334
    %v353 = vpop.f32.mrf.mxu0
    %v354 = vadd.f32 %v191, %v353
    %355 = vdwg.mxu0
    %356 = vmatpush.msra.mxu0 0.0
    %357 = vmatpush.msra.mxu0 0.0
    %358 = vmatpush.msra.mxu0 0.0
    %359 = vmatpush.msra.mxu0 0.0
    %360 = vmatpush.msra.mxu0 0.0
    %361 = vmatpush.msra.mxu0 0.0
    %362 = vmatpush.msra.mxu0 0.0
    %363 = vmatpush.msra.mxu0 0.0
    %364 = vmatpush.msra.mxu0 0.0
    %365 = vmatpush.msra.mxu0 0.0
    %366 = vmatpush.msra.mxu0 0.0
    %367 = vmatpush.msra.mxu0 0.0
    %368 = vmatpush.msra.mxu0 0.0
    %369 = vmatpush.msra.mxu0 0.0
    %370 = vmatpush.msra.mxu0 0.0
    %371 = vmatpush.msra.mxu0 %v115
    %372 = vmatmul.f32.gmra.mxu0 %v334
    %v373 = vpop.f32.mrf.mxu0
    %v374 = vadd.f32 %v211, %v373
    %375 = vdwg.mxu0
    %376 = vmatpush.msra.mxu0 0.0
    %377 = vmatpush.msra.mxu0 0.0
    %378 = vmatpush.msra.mxu0 0.0
    %379 = vmatpush.msra.mxu0 0.0
    %380 = vmatpush.msra.mxu0 0.0
    %381 = vmatpush.msra.mxu0 0.0
    %382 = vmatpush.msra.mxu0 0.0
    %383 = vmatpush.msra.mxu0 0.0
    %384 = vmatpush.msra.mxu0 0.0
    %385 = vmatpush.msra.mxu0 0.0
    %386 = vmatpush.msra.mxu0 0.0
    %387 = vmatpush.msra.mxu0 0.0
    %388 = vmatpush.msra.mxu0 0.0
    %389 = vmatpush.msra.mxu0 0.0
    %390 = vmatpush.msra.mxu0 0.0
    %391 = vmatpush.msra.mxu0 %v116
    %392 = vmatmul.f32.gmra.mxu0 %v334
    %v393 = vpop.f32.mrf.mxu0
    %v394 = vadd.f32 %v231, %v393
    %395 = vdwg.mxu0
    %396 = vmatpush.msra.mxu0 0.0
    %397 = vmatpush.msra.mxu0 0.0
    %398 = vmatpush.msra.mxu0 0.0
    %399 = vmatpush.msra.mxu0 0.0
    %400 = vmatpush.msra.mxu0 0.0
    %401 = vmatpush.msra.mxu0 0.0
    %402 = vmatpush.msra.mxu0 0.0
    %403 = vmatpush.msra.mxu0 0.0
    %404 = vmatpush.msra.mxu0 0.0
    %405 = vmatpush.msra.mxu0 0.0
    %406 = vmatpush.msra.mxu0 0.0
    %407 = vmatpush.msra.mxu0 0.0
    %408 = vmatpush.msra.mxu0 0.0
    %409 = vmatpush.msra.mxu0 0.0
    %410 = vmatpush.msra.mxu0 0.0
    %411 = vmatpush.msra.mxu0 %v117
    %412 = vmatmul.f32.gmra.mxu0 %v334
    %v413 = vpop.f32.mrf.mxu0
    %v414 = vadd.f32 %v251, %v413
    %415 = vdwg.mxu0
    %416 = vmatpush.msra.mxu0 0.0
    %417 = vmatpush.msra.mxu0 0.0
    %418 = vmatpush.msra.mxu0 0.0
    %419 = vmatpush.msra.mxu0 0.0
    %420 = vmatpush.msra.mxu0 0.0
    %421 = vmatpush.msra.mxu0 0.0
    %422 = vmatpush.msra.mxu0 0.0
    %423 = vmatpush.msra.mxu0 0.0
    %424 = vmatpush.msra.mxu0 0.0
    %425 = vmatpush.msra.mxu0 0.0
    %426 = vmatpush.msra.mxu0 0.0
    %427 = vmatpush.msra.mxu0 0.0
    %428 = vmatpush.msra.mxu0 0.0
    %429 = vmatpush.msra.mxu0 0.0
    %430 = vmatpush.msra.mxu0 0.0
    %431 = vmatpush.msra.mxu0 %v118
    %432 = vmatmul.f32.gmra.mxu0 %v334
    %v433 = vpop.f32.mrf.mxu0
    %v434 = vadd.f32 %v271, %v433
    %435 = vdwg.mxu0
    %436 = vmatpush.msra.mxu0 0.0
    %437 = vmatpush.msra.mxu0 0.0
    %438 = vmatpush.msra.mxu0 0.0
    %439 = vmatpush.msra.mxu0 0.0
    %440 = vmatpush.msra.mxu0 0.0
    %441 = vmatpush.msra.mxu0 0.0
    %442 = vmatpush.msra.mxu0 0.0
    %443 = vmatpush.msra.mxu0 0.0
    %444 = vmatpush.msra.mxu0 0.0
    %445 = vmatpush.msra.mxu0 0.0
    %446 = vmatpush.msra.mxu0 0.0
    %447 = vmatpush.msra.mxu0 0.0
    %448 = vmatpush.msra.mxu0 0.0
    %449 = vmatpush.msra.mxu0 0.0
    %450 = vmatpush.msra.mxu0 0.0
    %451 = vmatpush.msra.mxu0 %v119
    %452 = vmatmul.f32.gmra.mxu0 %v334
    %v453 = vpop.f32.mrf.mxu0
    %v454 = vadd.f32 %v291, %v453
    %455 = vdwg.mxu0
    %456 = vmatpush.msra.mxu0 0.0
    %457 = vmatpush.msra.mxu0 0.0
    %458 = vmatpush.msra.mxu0 0.0
    %459 = vmatpush.msra.mxu0 0.0
    %460 = vmatpush.msra.mxu0 0.0
    %461 = vmatpush.msra.mxu0 0.0
    %462 = vmatpush.msra.mxu0 0.0
    %463 = vmatpush.msra.mxu0 0.0
    %464 = vmatpush.msra.mxu0 0.0
    %465 = vmatpush.msra.mxu0 0.0
    %466 = vmatpush.msra.mxu0 0.0
    %467 = vmatpush.msra.mxu0 0.0
    %468 = vmatpush.msra.mxu0 0.0
    %469 = vmatpush.msra.mxu0 0.0
    %470 = vmatpush.msra.mxu0 0.0
    %471 = vmatpush.msra.mxu0 %v120
    %472 = vmatmul.f32.gmra.mxu0 %v334
    %v473 = vpop.f32.mrf.mxu0
    %v474 = vadd.f32 %v311, %v473
    %475 = vdwg.mxu0
    %476 = vmatpush.msra.mxu0 0.0
    %477 = vmatpush.msra.mxu0 0.0
    %478 = vmatpush.msra.mxu0 0.0
    %479 = vmatpush.msra.mxu0 0.0
    %480 = vmatpush.msra.mxu0 0.0
    %481 = vmatpush.msra.mxu0 0.0
    %482 = vmatpush.msra.mxu0 0.0
    %483 = vmatpush.msra.mxu0 0.0
    %484 = vmatpush.msra.mxu0 0.0
    %485 = vmatpush.msra.mxu0 0.0
    %486 = vmatpush.msra.mxu0 0.0
    %487 = vmatpush.msra.mxu0 0.0
    %488 = vmatpush.msra.mxu0 0.0
    %489 = vmatpush.msra.mxu0 0.0
    %490 = vmatpush.msra.mxu0 0.0
    %491 = vmatpush.msra.mxu0 %v121
    %492 = vmatmul.f32.gmra.mxu0 %v334
    %v493 = vpop.f32.mrf.mxu0
    %v494 = vadd.f32 %v331, %v493
    %495 = vdwg.mxu0
    %s496 = scalar_lea.vmem %s3, 16
    %v497 = vld [vmem:[%s496] sm:$0xff]
    %498 = vrot.lane.b32.xlu0 %v114, 126
    %v499 = vpop.permute.xlu0 %498
    %500 = vrot.lane.b32.xlu0 %v115, 126
    %v501 = vpop.permute.xlu0 %500
    %502 = vrot.lane.b32.xlu0 %v116, 126
    %v503 = vpop.permute.xlu0 %502
    %504 = vrot.lane.b32.xlu0 %v117, 126
    %v505 = vpop.permute.xlu0 %504
    %506 = vrot.lane.b32.xlu0 %v118, 126
    %v507 = vpop.permute.xlu0 %506
    %508 = vrot.lane.b32.xlu0 %v119, 126
    %v509 = vpop.permute.xlu0 %508
    %510 = vrot.lane.b32.xlu0 %v120, 126
    %v511 = vpop.permute.xlu0 %510
    %512 = vrot.lane.b32.xlu0 %v121, 126
    %v513 = vpop.permute.xlu0 %512
    %514 = vrot.lane.b32.xlu0 %v124, 126
    %v515 = vpop.permute.xlu0 %514
    %vm516 = vcmask 1031168
    %v517 = vsel %vm516, %v499, %v501
    %v518 = vsel %vm516, %v501, %v503
    %v519 = vsel %vm516, %v503, %v505
    %v520 = vsel %vm516, %v505, %v507
    %v521 = vsel %vm516, %v507, %v509
    %v522 = vsel %vm516, %v509, %v511
    %v523 = vsel %vm516, %v511, %v513
    %v524 = vsel %vm516, %v513, %v515
    %v534 = vsel %vm169, %v497, 0
    %536 = vmatpush.msra.mxu0 0.0
    %537 = vmatpush.msra.mxu0 0.0
    %538 = vmatpush.msra.mxu0 0.0
    %539 = vmatpush.msra.mxu0 0.0
    %540 = vmatpush.msra.mxu0 0.0
    %541 = vmatpush.msra.mxu0 0.0
    %542 = vmatpush.msra.mxu0 0.0
    %543 = vmatpush.msra.mxu0 0.0
    %544 = vmatpush.msra.mxu0 0.0
    %545 = vmatpush.msra.mxu0 0.0
    %546 = vmatpush.msra.mxu0 0.0
    %547 = vmatpush.msra.mxu0 0.0
    %548 = vmatpush.msra.mxu0 0.0
    %549 = vmatpush.msra.mxu0 0.0
    %550 = vmatpush.msra.mxu0 0.0
    %551 = vmatpush.msra.mxu0 %v517
    %552 = vmatmul.f32.gmra.mxu0 %v534
    %v553 = vpop.f32.mrf.mxu0
    %v554 = vadd.f32 0.0, %v553
    %555 = vdwg.mxu0
    %556 = vmatpush.msra.mxu0 0.0
    %557 = vmatpush.msra.mxu0 0.0
    %558 = vmatpush.msra.mxu0 0.0
    %559 = vmatpush.msra.mxu0 0.0
    %560 = vmatpush.msra.mxu0 0.0
    %561 = vmatpush.msra.mxu0 0.0
    %562 = vmatpush.msra.mxu0 0.0
    %563 = vmatpush.msra.mxu0 0.0
    %564 = vmatpush.msra.mxu0 0.0
    %565 = vmatpush.msra.mxu0 0.0
    %566 = vmatpush.msra.mxu0 0.0
    %567 = vmatpush.msra.mxu0 0.0
    %568 = vmatpush.msra.mxu0 0.0
    %569 = vmatpush.msra.mxu0 0.0
    %570 = vmatpush.msra.mxu0 0.0
    %571 = vmatpush.msra.mxu0 %v518
    %572 = vmatmul.f32.gmra.mxu0 %v534
    %v573 = vpop.f32.mrf.mxu0
    %v574 = vadd.f32 0.0, %v573
    %575 = vdwg.mxu0
    %576 = vmatpush.msra.mxu0 0.0
    %577 = vmatpush.msra.mxu0 0.0
    %578 = vmatpush.msra.mxu0 0.0
    %579 = vmatpush.msra.mxu0 0.0
    %580 = vmatpush.msra.mxu0 0.0
    %581 = vmatpush.msra.mxu0 0.0
    %582 = vmatpush.msra.mxu0 0.0
    %583 = vmatpush.msra.mxu0 0.0
    %584 = vmatpush.msra.mxu0 0.0
    %585 = vmatpush.msra.mxu0 0.0
    %586 = vmatpush.msra.mxu0 0.0
    %587 = vmatpush.msra.mxu0 0.0
    %588 = vmatpush.msra.mxu0 0.0
    %589 = vmatpush.msra.mxu0 0.0
    %590 = vmatpush.msra.mxu0 0.0
    %591 = vmatpush.msra.mxu0 %v519
    %592 = vmatmul.f32.gmra.mxu0 %v534
    %v593 = vpop.f32.mrf.mxu0
    %v594 = vadd.f32 0.0, %v593
    %595 = vdwg.mxu0
    %596 = vmatpush.msra.mxu0 0.0
    %597 = vmatpush.msra.mxu0 0.0
    %598 = vmatpush.msra.mxu0 0.0
    %599 = vmatpush.msra.mxu0 0.0
    %600 = vmatpush.msra.mxu0 0.0
    %601 = vmatpush.msra.mxu0 0.0
    %602 = vmatpush.msra.mxu0 0.0
    %603 = vmatpush.msra.mxu0 0.0
    %604 = vmatpush.msra.mxu0 0.0
    %605 = vmatpush.msra.mxu0 0.0
    %606 = vmatpush.msra.mxu0 0.0
    %607 = vmatpush.msra.mxu0 0.0
    %608 = vmatpush.msra.mxu0 0.0
    %609 = vmatpush.msra.mxu0 0.0
    %610 = vmatpush.msra.mxu0 0.0
    %611 = vmatpush.msra.mxu0 %v520
    %612 = vmatmul.f32.gmra.mxu0 %v534
    %v613 = vpop.f32.mrf.mxu0
    %v614 = vadd.f32 0.0, %v613
    %615 = vdwg.mxu0
    %616 = vmatpush.msra.mxu0 0.0
    %617 = vmatpush.msra.mxu0 0.0
    %618 = vmatpush.msra.mxu0 0.0
    %619 = vmatpush.msra.mxu0 0.0
    %620 = vmatpush.msra.mxu0 0.0
    %621 = vmatpush.msra.mxu0 0.0
    %622 = vmatpush.msra.mxu0 0.0
    %623 = vmatpush.msra.mxu0 0.0
    %624 = vmatpush.msra.mxu0 0.0
    %625 = vmatpush.msra.mxu0 0.0
    %626 = vmatpush.msra.mxu0 0.0
    %627 = vmatpush.msra.mxu0 0.0
    %628 = vmatpush.msra.mxu0 0.0
    %629 = vmatpush.msra.mxu0 0.0
    %630 = vmatpush.msra.mxu0 0.0
    %631 = vmatpush.msra.mxu0 %v521
    %632 = vmatmul.f32.gmra.mxu0 %v534
    %v633 = vpop.f32.mrf.mxu0
    %v634 = vadd.f32 0.0, %v633
    %635 = vdwg.mxu0
    %636 = vmatpush.msra.mxu0 0.0
    %637 = vmatpush.msra.mxu0 0.0
    %638 = vmatpush.msra.mxu0 0.0
    %639 = vmatpush.msra.mxu0 0.0
    %640 = vmatpush.msra.mxu0 0.0
    %641 = vmatpush.msra.mxu0 0.0
    %642 = vmatpush.msra.mxu0 0.0
    %643 = vmatpush.msra.mxu0 0.0
    %644 = vmatpush.msra.mxu0 0.0
    %645 = vmatpush.msra.mxu0 0.0
    %646 = vmatpush.msra.mxu0 0.0
    %647 = vmatpush.msra.mxu0 0.0
    %648 = vmatpush.msra.mxu0 0.0
    %649 = vmatpush.msra.mxu0 0.0
    %650 = vmatpush.msra.mxu0 0.0
    %651 = vmatpush.msra.mxu0 %v522
    %652 = vmatmul.f32.gmra.mxu0 %v534
    %v653 = vpop.f32.mrf.mxu0
    %v654 = vadd.f32 0.0, %v653
    %655 = vdwg.mxu0
    %656 = vmatpush.msra.mxu0 0.0
    %657 = vmatpush.msra.mxu0 0.0
    %658 = vmatpush.msra.mxu0 0.0
    %659 = vmatpush.msra.mxu0 0.0
    %660 = vmatpush.msra.mxu0 0.0
    %661 = vmatpush.msra.mxu0 0.0
    %662 = vmatpush.msra.mxu0 0.0
    %663 = vmatpush.msra.mxu0 0.0
    %664 = vmatpush.msra.mxu0 0.0
    %665 = vmatpush.msra.mxu0 0.0
    %666 = vmatpush.msra.mxu0 0.0
    %667 = vmatpush.msra.mxu0 0.0
    %668 = vmatpush.msra.mxu0 0.0
    %669 = vmatpush.msra.mxu0 0.0
    %670 = vmatpush.msra.mxu0 0.0
    %671 = vmatpush.msra.mxu0 %v523
    %672 = vmatmul.f32.gmra.mxu0 %v534
    %v673 = vpop.f32.mrf.mxu0
    %v674 = vadd.f32 0.0, %v673
    %675 = vdwg.mxu0
    %676 = vmatpush.msra.mxu0 0.0
    %677 = vmatpush.msra.mxu0 0.0
    %678 = vmatpush.msra.mxu0 0.0
    %679 = vmatpush.msra.mxu0 0.0
    %680 = vmatpush.msra.mxu0 0.0
    %681 = vmatpush.msra.mxu0 0.0
    %682 = vmatpush.msra.mxu0 0.0
    %683 = vmatpush.msra.mxu0 0.0
    %684 = vmatpush.msra.mxu0 0.0
    %685 = vmatpush.msra.mxu0 0.0
    %686 = vmatpush.msra.mxu0 0.0
    %687 = vmatpush.msra.mxu0 0.0
    %688 = vmatpush.msra.mxu0 0.0
    %689 = vmatpush.msra.mxu0 0.0
    %690 = vmatpush.msra.mxu0 0.0
    %691 = vmatpush.msra.mxu0 %v524
    %692 = vmatmul.f32.gmra.mxu0 %v534
    %v693 = vpop.f32.mrf.mxu0
    %v694 = vadd.f32 0.0, %v693
    %695 = vdwg.mxu0
    %v696 = vadd.f32 %v354, %v554
    %v697 = vadd.f32 %v374, %v574
    %v698 = vadd.f32 %v394, %v594
    %v699 = vadd.f32 %v414, %v614
    %v700 = vadd.f32 %v434, %v634
    %v701 = vadd.f32 %v454, %v654
    %v702 = vadd.f32 %v474, %v674
    %v703 = vadd.f32 %v494, %v694
    %s704 = scalar_lea.vmem %s3, 24
    %v705 = vld [vmem:[%s704] sm:$0xff]
    %706 = vrot.lane.b32.xlu0 %v114, 120
    %v707 = vpop.permute.xlu0 %706
    %708 = vrot.lane.b32.xlu0 %v115, 120
    %v709 = vpop.permute.xlu0 %708
    %710 = vrot.lane.b32.xlu0 %v116, 120
    %v711 = vpop.permute.xlu0 %710
    %712 = vrot.lane.b32.xlu0 %v117, 120
    %v713 = vpop.permute.xlu0 %712
    %714 = vrot.lane.b32.xlu0 %v118, 120
    %v715 = vpop.permute.xlu0 %714
    %716 = vrot.lane.b32.xlu0 %v119, 120
    %v717 = vpop.permute.xlu0 %716
    %718 = vrot.lane.b32.xlu0 %v120, 120
    %v719 = vpop.permute.xlu0 %718
    %720 = vrot.lane.b32.xlu0 %v121, 120
    %v721 = vpop.permute.xlu0 %720
    %722 = vrot.lane.b32.xlu0 %v124, 120
    %v723 = vpop.permute.xlu0 %722
    %vm724 = vcmask 982016
    %v725 = vsel %vm724, %v707, %v709
    %v726 = vsel %vm724, %v709, %v711
    %v727 = vsel %vm724, %v711, %v713
    %v728 = vsel %vm724, %v713, %v715
    %v729 = vsel %vm724, %v715, %v717
    %v730 = vsel %vm724, %v717, %v719
    %v731 = vsel %vm724, %v719, %v721
    %v732 = vsel %vm724, %v721, %v723
    %v742 = vsel %vm169, %v705, 0
    %744 = vmatpush.msra.mxu0 0.0
    %745 = vmatpush.msra.mxu0 0.0
    %746 = vmatpush.msra.mxu0 0.0
    %747 = vmatpush.msra.mxu0 0.0
    %748 = vmatpush.msra.mxu0 0.0
    %749 = vmatpush.msra.mxu0 0.0
    %750 = vmatpush.msra.mxu0 0.0
    %751 = vmatpush.msra.mxu0 0.0
    %752 = vmatpush.msra.mxu0 0.0
    %753 = vmatpush.msra.mxu0 0.0
    %754 = vmatpush.msra.mxu0 0.0
    %755 = vmatpush.msra.mxu0 0.0
    %756 = vmatpush.msra.mxu0 0.0
    %757 = vmatpush.msra.mxu0 0.0
    %758 = vmatpush.msra.mxu0 0.0
    %759 = vmatpush.msra.mxu0 %v725
    %760 = vmatmul.f32.gmra.mxu0 %v742
    %v761 = vpop.f32.mrf.mxu0
    %v762 = vadd.f32 0.0, %v761
    %763 = vdwg.mxu0
    %764 = vmatpush.msra.mxu0 0.0
    %765 = vmatpush.msra.mxu0 0.0
    %766 = vmatpush.msra.mxu0 0.0
    %767 = vmatpush.msra.mxu0 0.0
    %768 = vmatpush.msra.mxu0 0.0
    %769 = vmatpush.msra.mxu0 0.0
    %770 = vmatpush.msra.mxu0 0.0
    %771 = vmatpush.msra.mxu0 0.0
    %772 = vmatpush.msra.mxu0 0.0
    %773 = vmatpush.msra.mxu0 0.0
    %774 = vmatpush.msra.mxu0 0.0
    %775 = vmatpush.msra.mxu0 0.0
    %776 = vmatpush.msra.mxu0 0.0
    %777 = vmatpush.msra.mxu0 0.0
    %778 = vmatpush.msra.mxu0 0.0
    %779 = vmatpush.msra.mxu0 %v726
    %780 = vmatmul.f32.gmra.mxu0 %v742
    %v781 = vpop.f32.mrf.mxu0
    %v782 = vadd.f32 0.0, %v781
    %783 = vdwg.mxu0
    %784 = vmatpush.msra.mxu0 0.0
    %785 = vmatpush.msra.mxu0 0.0
    %786 = vmatpush.msra.mxu0 0.0
    %787 = vmatpush.msra.mxu0 0.0
    %788 = vmatpush.msra.mxu0 0.0
    %789 = vmatpush.msra.mxu0 0.0
    %790 = vmatpush.msra.mxu0 0.0
    %791 = vmatpush.msra.mxu0 0.0
    %792 = vmatpush.msra.mxu0 0.0
    %793 = vmatpush.msra.mxu0 0.0
    %794 = vmatpush.msra.mxu0 0.0
    %795 = vmatpush.msra.mxu0 0.0
    %796 = vmatpush.msra.mxu0 0.0
    %797 = vmatpush.msra.mxu0 0.0
    %798 = vmatpush.msra.mxu0 0.0
    %799 = vmatpush.msra.mxu0 %v727
    %800 = vmatmul.f32.gmra.mxu0 %v742
    %v801 = vpop.f32.mrf.mxu0
    %v802 = vadd.f32 0.0, %v801
    %803 = vdwg.mxu0
    %804 = vmatpush.msra.mxu0 0.0
    %805 = vmatpush.msra.mxu0 0.0
    %806 = vmatpush.msra.mxu0 0.0
    %807 = vmatpush.msra.mxu0 0.0
    %808 = vmatpush.msra.mxu0 0.0
    %809 = vmatpush.msra.mxu0 0.0
    %810 = vmatpush.msra.mxu0 0.0
    %811 = vmatpush.msra.mxu0 0.0
    %812 = vmatpush.msra.mxu0 0.0
    %813 = vmatpush.msra.mxu0 0.0
    %814 = vmatpush.msra.mxu0 0.0
    %815 = vmatpush.msra.mxu0 0.0
    %816 = vmatpush.msra.mxu0 0.0
    %817 = vmatpush.msra.mxu0 0.0
    %818 = vmatpush.msra.mxu0 0.0
    %819 = vmatpush.msra.mxu0 %v728
    %820 = vmatmul.f32.gmra.mxu0 %v742
    %v821 = vpop.f32.mrf.mxu0
    %v822 = vadd.f32 0.0, %v821
    %823 = vdwg.mxu0
    %824 = vmatpush.msra.mxu0 0.0
    %825 = vmatpush.msra.mxu0 0.0
    %826 = vmatpush.msra.mxu0 0.0
    %827 = vmatpush.msra.mxu0 0.0
    %828 = vmatpush.msra.mxu0 0.0
    %829 = vmatpush.msra.mxu0 0.0
    %830 = vmatpush.msra.mxu0 0.0
    %831 = vmatpush.msra.mxu0 0.0
    %832 = vmatpush.msra.mxu0 0.0
    %833 = vmatpush.msra.mxu0 0.0
    %834 = vmatpush.msra.mxu0 0.0
    %835 = vmatpush.msra.mxu0 0.0
    %836 = vmatpush.msra.mxu0 0.0
    %837 = vmatpush.msra.mxu0 0.0
    %838 = vmatpush.msra.mxu0 0.0
    %839 = vmatpush.msra.mxu0 %v729
    %840 = vmatmul.f32.gmra.mxu0 %v742
    %v841 = vpop.f32.mrf.mxu0
    %v842 = vadd.f32 0.0, %v841
    %843 = vdwg.mxu0
    %844 = vmatpush.msra.mxu0 0.0
    %845 = vmatpush.msra.mxu0 0.0
    %846 = vmatpush.msra.mxu0 0.0
    %847 = vmatpush.msra.mxu0 0.0
    %848 = vmatpush.msra.mxu0 0.0
    %849 = vmatpush.msra.mxu0 0.0
    %850 = vmatpush.msra.mxu0 0.0
    %851 = vmatpush.msra.mxu0 0.0
    %852 = vmatpush.msra.mxu0 0.0
    %853 = vmatpush.msra.mxu0 0.0
    %854 = vmatpush.msra.mxu0 0.0
    %855 = vmatpush.msra.mxu0 0.0
    %856 = vmatpush.msra.mxu0 0.0
    %857 = vmatpush.msra.mxu0 0.0
    %858 = vmatpush.msra.mxu0 0.0
    %859 = vmatpush.msra.mxu0 %v730
    %860 = vmatmul.f32.gmra.mxu0 %v742
    %v861 = vpop.f32.mrf.mxu0
    %v862 = vadd.f32 0.0, %v861
    %863 = vdwg.mxu0
    %864 = vmatpush.msra.mxu0 0.0
    %865 = vmatpush.msra.mxu0 0.0
    %866 = vmatpush.msra.mxu0 0.0
    %867 = vmatpush.msra.mxu0 0.0
    %868 = vmatpush.msra.mxu0 0.0
    %869 = vmatpush.msra.mxu0 0.0
    %870 = vmatpush.msra.mxu0 0.0
    %871 = vmatpush.msra.mxu0 0.0
    %872 = vmatpush.msra.mxu0 0.0
    %873 = vmatpush.msra.mxu0 0.0
    %874 = vmatpush.msra.mxu0 0.0
    %875 = vmatpush.msra.mxu0 0.0
    %876 = vmatpush.msra.mxu0 0.0
    %877 = vmatpush.msra.mxu0 0.0
    %878 = vmatpush.msra.mxu0 0.0
    %879 = vmatpush.msra.mxu0 %v731
    %880 = vmatmul.f32.gmra.mxu0 %v742
    %v881 = vpop.f32.mrf.mxu0
    %v882 = vadd.f32 0.0, %v881
    %883 = vdwg.mxu0
    %884 = vmatpush.msra.mxu0 0.0
    %885 = vmatpush.msra.mxu0 0.0
    %886 = vmatpush.msra.mxu0 0.0
    %887 = vmatpush.msra.mxu0 0.0
    %888 = vmatpush.msra.mxu0 0.0
    %889 = vmatpush.msra.mxu0 0.0
    %890 = vmatpush.msra.mxu0 0.0
    %891 = vmatpush.msra.mxu0 0.0
    %892 = vmatpush.msra.mxu0 0.0
    %893 = vmatpush.msra.mxu0 0.0
    %894 = vmatpush.msra.mxu0 0.0
    %895 = vmatpush.msra.mxu0 0.0
    %896 = vmatpush.msra.mxu0 0.0
    %897 = vmatpush.msra.mxu0 0.0
    %898 = vmatpush.msra.mxu0 0.0
    %899 = vmatpush.msra.mxu0 %v732
    %900 = vmatmul.f32.gmra.mxu0 %v742
    %v901 = vpop.f32.mrf.mxu0
    %v902 = vadd.f32 0.0, %v901
    %903 = vdwg.mxu0
    %v904 = vadd.f32 %v696, %v762
    %v905 = vadd.f32 %v697, %v782
    %v906 = vadd.f32 %v698, %v802
    %v907 = vadd.f32 %v699, %v822
    %v908 = vadd.f32 %v700, %v842
    %v909 = vadd.f32 %v701, %v862
    %v910 = vadd.f32 %v702, %v882
    %v911 = vadd.f32 %v703, %v902
    %s912 = scalar_lea.vmem %s3, 32
    %v913 = vld [vmem:[%s912] sm:$0xff]
    %914 = vrot.lane.b32.xlu0 %v114, 119
    %v915 = vpop.permute.xlu0 %914
    %916 = vrot.lane.b32.xlu0 %v115, 119
    %v917 = vpop.permute.xlu0 %916
    %918 = vrot.lane.b32.xlu0 %v116, 119
    %v919 = vpop.permute.xlu0 %918
    %920 = vrot.lane.b32.xlu0 %v117, 119
    %v921 = vpop.permute.xlu0 %920
    %922 = vrot.lane.b32.xlu0 %v118, 119
    %v923 = vpop.permute.xlu0 %922
    %924 = vrot.lane.b32.xlu0 %v119, 119
    %v925 = vpop.permute.xlu0 %924
    %926 = vrot.lane.b32.xlu0 %v120, 119
    %v927 = vpop.permute.xlu0 %926
    %928 = vrot.lane.b32.xlu0 %v121, 119
    %v929 = vpop.permute.xlu0 %928
    %930 = vrot.lane.b32.xlu0 %v124, 119
    %v931 = vpop.permute.xlu0 %930
    %vm932 = vcmask 973824
    %v933 = vsel %vm932, %v915, %v917
    %v934 = vsel %vm932, %v917, %v919
    %v935 = vsel %vm932, %v919, %v921
    %v936 = vsel %vm932, %v921, %v923
    %v937 = vsel %vm932, %v923, %v925
    %v938 = vsel %vm932, %v925, %v927
    %v939 = vsel %vm932, %v927, %v929
    %v940 = vsel %vm932, %v929, %v931
    %v950 = vsel %vm169, %v913, 0
    %952 = vmatpush.msra.mxu0 0.0
    %953 = vmatpush.msra.mxu0 0.0
    %954 = vmatpush.msra.mxu0 0.0
    %955 = vmatpush.msra.mxu0 0.0
    %956 = vmatpush.msra.mxu0 0.0
    %957 = vmatpush.msra.mxu0 0.0
    %958 = vmatpush.msra.mxu0 0.0
    %959 = vmatpush.msra.mxu0 0.0
    %960 = vmatpush.msra.mxu0 0.0
    %961 = vmatpush.msra.mxu0 0.0
    %962 = vmatpush.msra.mxu0 0.0
    %963 = vmatpush.msra.mxu0 0.0
    %964 = vmatpush.msra.mxu0 0.0
    %965 = vmatpush.msra.mxu0 0.0
    %966 = vmatpush.msra.mxu0 0.0
    %967 = vmatpush.msra.mxu0 %v933
    %968 = vmatmul.f32.gmra.mxu0 %v950
    %v969 = vpop.f32.mrf.mxu0
    %v970 = vadd.f32 0.0, %v969
    %971 = vdwg.mxu0
    %972 = vmatpush.msra.mxu0 0.0
    %973 = vmatpush.msra.mxu0 0.0
    %974 = vmatpush.msra.mxu0 0.0
    %975 = vmatpush.msra.mxu0 0.0
    %976 = vmatpush.msra.mxu0 0.0
    %977 = vmatpush.msra.mxu0 0.0
    %978 = vmatpush.msra.mxu0 0.0
    %979 = vmatpush.msra.mxu0 0.0
    %980 = vmatpush.msra.mxu0 0.0
    %981 = vmatpush.msra.mxu0 0.0
    %982 = vmatpush.msra.mxu0 0.0
    %983 = vmatpush.msra.mxu0 0.0
    %984 = vmatpush.msra.mxu0 0.0
    %985 = vmatpush.msra.mxu0 0.0
    %986 = vmatpush.msra.mxu0 0.0
    %987 = vmatpush.msra.mxu0 %v934
    %988 = vmatmul.f32.gmra.mxu0 %v950
    %v989 = vpop.f32.mrf.mxu0
    %v990 = vadd.f32 0.0, %v989
    %991 = vdwg.mxu0
    %992 = vmatpush.msra.mxu0 0.0
    %993 = vmatpush.msra.mxu0 0.0
    %994 = vmatpush.msra.mxu0 0.0
    %995 = vmatpush.msra.mxu0 0.0
    %996 = vmatpush.msra.mxu0 0.0
    %997 = vmatpush.msra.mxu0 0.0
    %998 = vmatpush.msra.mxu0 0.0
    %999 = vmatpush.msra.mxu0 0.0
    %1000 = vmatpush.msra.mxu0 0.0
    %1001 = vmatpush.msra.mxu0 0.0
    %1002 = vmatpush.msra.mxu0 0.0
    %1003 = vmatpush.msra.mxu0 0.0
    %1004 = vmatpush.msra.mxu0 0.0
    %1005 = vmatpush.msra.mxu0 0.0
    %1006 = vmatpush.msra.mxu0 0.0
    %1007 = vmatpush.msra.mxu0 %v935
    %1008 = vmatmul.f32.gmra.mxu0 %v950
    %v1009 = vpop.f32.mrf.mxu0
    %v1010 = vadd.f32 0.0, %v1009
    %1011 = vdwg.mxu0
    %1012 = vmatpush.msra.mxu0 0.0
    %1013 = vmatpush.msra.mxu0 0.0
    %1014 = vmatpush.msra.mxu0 0.0
    %1015 = vmatpush.msra.mxu0 0.0
    %1016 = vmatpush.msra.mxu0 0.0
    %1017 = vmatpush.msra.mxu0 0.0
    %1018 = vmatpush.msra.mxu0 0.0
    %1019 = vmatpush.msra.mxu0 0.0
    %1020 = vmatpush.msra.mxu0 0.0
    %1021 = vmatpush.msra.mxu0 0.0
    %1022 = vmatpush.msra.mxu0 0.0
    %1023 = vmatpush.msra.mxu0 0.0
    %1024 = vmatpush.msra.mxu0 0.0
    %1025 = vmatpush.msra.mxu0 0.0
    %1026 = vmatpush.msra.mxu0 0.0
    %1027 = vmatpush.msra.mxu0 %v936
    %1028 = vmatmul.f32.gmra.mxu0 %v950
    %v1029 = vpop.f32.mrf.mxu0
    %v1030 = vadd.f32 0.0, %v1029
    %1031 = vdwg.mxu0
    %1032 = vmatpush.msra.mxu0 0.0
    %1033 = vmatpush.msra.mxu0 0.0
    %1034 = vmatpush.msra.mxu0 0.0
    %1035 = vmatpush.msra.mxu0 0.0
    %1036 = vmatpush.msra.mxu0 0.0
    %1037 = vmatpush.msra.mxu0 0.0
    %1038 = vmatpush.msra.mxu0 0.0
    %1039 = vmatpush.msra.mxu0 0.0
    %1040 = vmatpush.msra.mxu0 0.0
    %1041 = vmatpush.msra.mxu0 0.0
    %1042 = vmatpush.msra.mxu0 0.0
    %1043 = vmatpush.msra.mxu0 0.0
    %1044 = vmatpush.msra.mxu0 0.0
    %1045 = vmatpush.msra.mxu0 0.0
    %1046 = vmatpush.msra.mxu0 0.0
    %1047 = vmatpush.msra.mxu0 %v937
    %1048 = vmatmul.f32.gmra.mxu0 %v950
    %v1049 = vpop.f32.mrf.mxu0
    %v1050 = vadd.f32 0.0, %v1049
    %1051 = vdwg.mxu0
    %1052 = vmatpush.msra.mxu0 0.0
    %1053 = vmatpush.msra.mxu0 0.0
    %1054 = vmatpush.msra.mxu0 0.0
    %1055 = vmatpush.msra.mxu0 0.0
    %1056 = vmatpush.msra.mxu0 0.0
    %1057 = vmatpush.msra.mxu0 0.0
    %1058 = vmatpush.msra.mxu0 0.0
    %1059 = vmatpush.msra.mxu0 0.0
    %1060 = vmatpush.msra.mxu0 0.0
    %1061 = vmatpush.msra.mxu0 0.0
    %1062 = vmatpush.msra.mxu0 0.0
    %1063 = vmatpush.msra.mxu0 0.0
    %1064 = vmatpush.msra.mxu0 0.0
    %1065 = vmatpush.msra.mxu0 0.0
    %1066 = vmatpush.msra.mxu0 0.0
    %1067 = vmatpush.msra.mxu0 %v938
    %1068 = vmatmul.f32.gmra.mxu0 %v950
    %v1069 = vpop.f32.mrf.mxu0
    %v1070 = vadd.f32 0.0, %v1069
    %1071 = vdwg.mxu0
    %1072 = vmatpush.msra.mxu0 0.0
    %1073 = vmatpush.msra.mxu0 0.0
    %1074 = vmatpush.msra.mxu0 0.0
    %1075 = vmatpush.msra.mxu0 0.0
    %1076 = vmatpush.msra.mxu0 0.0
    %1077 = vmatpush.msra.mxu0 0.0
    %1078 = vmatpush.msra.mxu0 0.0
    %1079 = vmatpush.msra.mxu0 0.0
    %1080 = vmatpush.msra.mxu0 0.0
    %1081 = vmatpush.msra.mxu0 0.0
    %1082 = vmatpush.msra.mxu0 0.0
    %1083 = vmatpush.msra.mxu0 0.0
    %1084 = vmatpush.msra.mxu0 0.0
    %1085 = vmatpush.msra.mxu0 0.0
    %1086 = vmatpush.msra.mxu0 0.0
    %1087 = vmatpush.msra.mxu0 %v939
    %1088 = vmatmul.f32.gmra.mxu0 %v950
    %v1089 = vpop.f32.mrf.mxu0
    %v1090 = vadd.f32 0.0, %v1089
    %1091 = vdwg.mxu0
    %1092 = vmatpush.msra.mxu0 0.0
    %1093 = vmatpush.msra.mxu0 0.0
    %1094 = vmatpush.msra.mxu0 0.0
    %1095 = vmatpush.msra.mxu0 0.0
    %1096 = vmatpush.msra.mxu0 0.0
    %1097 = vmatpush.msra.mxu0 0.0
    %1098 = vmatpush.msra.mxu0 0.0
    %1099 = vmatpush.msra.mxu0 0.0
    %1100 = vmatpush.msra.mxu0 0.0
    %1101 = vmatpush.msra.mxu0 0.0
    %1102 = vmatpush.msra.mxu0 0.0
    %1103 = vmatpush.msra.mxu0 0.0
    %1104 = vmatpush.msra.mxu0 0.0
    %1105 = vmatpush.msra.mxu0 0.0
    %1106 = vmatpush.msra.mxu0 0.0
    %1107 = vmatpush.msra.mxu0 %v940
    %1108 = vmatmul.f32.gmra.mxu0 %v950
    %v1109 = vpop.f32.mrf.mxu0
    %v1110 = vadd.f32 0.0, %v1109
    %1111 = vdwg.mxu0
    %v1112 = vadd.f32 %v904, %v970
    %v1113 = vadd.f32 %v905, %v990
    %v1114 = vadd.f32 %v906, %v1010
    %v1115 = vadd.f32 %v907, %v1030
    %v1116 = vadd.f32 %v908, %v1050
    %v1117 = vadd.f32 %v909, %v1070
    %v1118 = vadd.f32 %v910, %v1090
    %v1119 = vadd.f32 %v911, %v1110
    %s1120 = scalar_lea.vmem %s3, 40
    %v1121 = vld [vmem:[%s1120] sm:$0xff]
    %1122 = vrot.lane.b32.xlu0 %v114, 118
    %v1123 = vpop.permute.xlu0 %1122
    %1124 = vrot.lane.b32.xlu0 %v115, 118
    %v1125 = vpop.permute.xlu0 %1124
    %1126 = vrot.lane.b32.xlu0 %v116, 118
    %v1127 = vpop.permute.xlu0 %1126
    %1128 = vrot.lane.b32.xlu0 %v117, 118
    %v1129 = vpop.permute.xlu0 %1128
    %1130 = vrot.lane.b32.xlu0 %v118, 118
    %v1131 = vpop.permute.xlu0 %1130
    %1132 = vrot.lane.b32.xlu0 %v119, 118
    %v1133 = vpop.permute.xlu0 %1132
    %1134 = vrot.lane.b32.xlu0 %v120, 118
    %v1135 = vpop.permute.xlu0 %1134
    %1136 = vrot.lane.b32.xlu0 %v121, 118
    %v1137 = vpop.permute.xlu0 %1136
    %1138 = vrot.lane.b32.xlu0 %v124, 118
    %v1139 = vpop.permute.xlu0 %1138
    %vm1140 = vcmask 965632
    %v1141 = vsel %vm1140, %v1123, %v1125
    %v1142 = vsel %vm1140, %v1125, %v1127
    %v1143 = vsel %vm1140, %v1127, %v1129
    %v1144 = vsel %vm1140, %v1129, %v1131
    %v1145 = vsel %vm1140, %v1131, %v1133
    %v1146 = vsel %vm1140, %v1133, %v1135
    %v1147 = vsel %vm1140, %v1135, %v1137
    %v1148 = vsel %vm1140, %v1137, %v1139
    %v1158 = vsel %vm169, %v1121, 0
    %1160 = vmatpush.msra.mxu0 0.0
    %1161 = vmatpush.msra.mxu0 0.0
    %1162 = vmatpush.msra.mxu0 0.0
    %1163 = vmatpush.msra.mxu0 0.0
    %1164 = vmatpush.msra.mxu0 0.0
    %1165 = vmatpush.msra.mxu0 0.0
    %1166 = vmatpush.msra.mxu0 0.0
    %1167 = vmatpush.msra.mxu0 0.0
    %1168 = vmatpush.msra.mxu0 0.0
    %1169 = vmatpush.msra.mxu0 0.0
    %1170 = vmatpush.msra.mxu0 0.0
    %1171 = vmatpush.msra.mxu0 0.0
    %1172 = vmatpush.msra.mxu0 0.0
    %1173 = vmatpush.msra.mxu0 0.0
    %1174 = vmatpush.msra.mxu0 0.0
    %1175 = vmatpush.msra.mxu0 %v1141
    %1176 = vmatmul.f32.gmra.mxu0 %v1158
    %v1177 = vpop.f32.mrf.mxu0
    %v1178 = vadd.f32 0.0, %v1177
    %1179 = vdwg.mxu0
    %1180 = vmatpush.msra.mxu0 0.0
    %1181 = vmatpush.msra.mxu0 0.0
    %1182 = vmatpush.msra.mxu0 0.0
    %1183 = vmatpush.msra.mxu0 0.0
    %1184 = vmatpush.msra.mxu0 0.0
    %1185 = vmatpush.msra.mxu0 0.0
    %1186 = vmatpush.msra.mxu0 0.0
    %1187 = vmatpush.msra.mxu0 0.0
    %1188 = vmatpush.msra.mxu0 0.0
    %1189 = vmatpush.msra.mxu0 0.0
    %1190 = vmatpush.msra.mxu0 0.0
    %1191 = vmatpush.msra.mxu0 0.0
    %1192 = vmatpush.msra.mxu0 0.0
    %1193 = vmatpush.msra.mxu0 0.0
    %1194 = vmatpush.msra.mxu0 0.0
    %1195 = vmatpush.msra.mxu0 %v1142
    %1196 = vmatmul.f32.gmra.mxu0 %v1158
    %v1197 = vpop.f32.mrf.mxu0
    %v1198 = vadd.f32 0.0, %v1197
    %1199 = vdwg.mxu0
    %1200 = vmatpush.msra.mxu0 0.0
    %1201 = vmatpush.msra.mxu0 0.0
    %1202 = vmatpush.msra.mxu0 0.0
    %1203 = vmatpush.msra.mxu0 0.0
    %1204 = vmatpush.msra.mxu0 0.0
    %1205 = vmatpush.msra.mxu0 0.0
    %1206 = vmatpush.msra.mxu0 0.0
    %1207 = vmatpush.msra.mxu0 0.0
    %1208 = vmatpush.msra.mxu0 0.0
    %1209 = vmatpush.msra.mxu0 0.0
    %1210 = vmatpush.msra.mxu0 0.0
    %1211 = vmatpush.msra.mxu0 0.0
    %1212 = vmatpush.msra.mxu0 0.0
    %1213 = vmatpush.msra.mxu0 0.0
    %1214 = vmatpush.msra.mxu0 0.0
    %1215 = vmatpush.msra.mxu0 %v1143
    %1216 = vmatmul.f32.gmra.mxu0 %v1158
    %v1217 = vpop.f32.mrf.mxu0
    %v1218 = vadd.f32 0.0, %v1217
    %1219 = vdwg.mxu0
    %1220 = vmatpush.msra.mxu0 0.0
    %1221 = vmatpush.msra.mxu0 0.0
    %1222 = vmatpush.msra.mxu0 0.0
    %1223 = vmatpush.msra.mxu0 0.0
    %1224 = vmatpush.msra.mxu0 0.0
    %1225 = vmatpush.msra.mxu0 0.0
    %1226 = vmatpush.msra.mxu0 0.0
    %1227 = vmatpush.msra.mxu0 0.0
    %1228 = vmatpush.msra.mxu0 0.0
    %1229 = vmatpush.msra.mxu0 0.0
    %1230 = vmatpush.msra.mxu0 0.0
    %1231 = vmatpush.msra.mxu0 0.0
    %1232 = vmatpush.msra.mxu0 0.0
    %1233 = vmatpush.msra.mxu0 0.0
    %1234 = vmatpush.msra.mxu0 0.0
    %1235 = vmatpush.msra.mxu0 %v1144
    %1236 = vmatmul.f32.gmra.mxu0 %v1158
    %v1237 = vpop.f32.mrf.mxu0
    %v1238 = vadd.f32 0.0, %v1237
    %1239 = vdwg.mxu0
    %1240 = vmatpush.msra.mxu0 0.0
    %1241 = vmatpush.msra.mxu0 0.0
    %1242 = vmatpush.msra.mxu0 0.0
    %1243 = vmatpush.msra.mxu0 0.0
    %1244 = vmatpush.msra.mxu0 0.0
    %1245 = vmatpush.msra.mxu0 0.0
    %1246 = vmatpush.msra.mxu0 0.0
    %1247 = vmatpush.msra.mxu0 0.0
    %1248 = vmatpush.msra.mxu0 0.0
    %1249 = vmatpush.msra.mxu0 0.0
    %1250 = vmatpush.msra.mxu0 0.0
    %1251 = vmatpush.msra.mxu0 0.0
    %1252 = vmatpush.msra.mxu0 0.0
    %1253 = vmatpush.msra.mxu0 0.0
    %1254 = vmatpush.msra.mxu0 0.0
    %1255 = vmatpush.msra.mxu0 %v1145
    %1256 = vmatmul.f32.gmra.mxu0 %v1158
    %v1257 = vpop.f32.mrf.mxu0
    %v1258 = vadd.f32 0.0, %v1257
    %1259 = vdwg.mxu0
    %1260 = vmatpush.msra.mxu0 0.0
    %1261 = vmatpush.msra.mxu0 0.0
    %1262 = vmatpush.msra.mxu0 0.0
    %1263 = vmatpush.msra.mxu0 0.0
    %1264 = vmatpush.msra.mxu0 0.0
    %1265 = vmatpush.msra.mxu0 0.0
    %1266 = vmatpush.msra.mxu0 0.0
    %1267 = vmatpush.msra.mxu0 0.0
    %1268 = vmatpush.msra.mxu0 0.0
    %1269 = vmatpush.msra.mxu0 0.0
    %1270 = vmatpush.msra.mxu0 0.0
    %1271 = vmatpush.msra.mxu0 0.0
    %1272 = vmatpush.msra.mxu0 0.0
    %1273 = vmatpush.msra.mxu0 0.0
    %1274 = vmatpush.msra.mxu0 0.0
    %1275 = vmatpush.msra.mxu0 %v1146
    %1276 = vmatmul.f32.gmra.mxu0 %v1158
    %v1277 = vpop.f32.mrf.mxu0
    %v1278 = vadd.f32 0.0, %v1277
    %1279 = vdwg.mxu0
    %1280 = vmatpush.msra.mxu0 0.0
    %1281 = vmatpush.msra.mxu0 0.0
    %1282 = vmatpush.msra.mxu0 0.0
    %1283 = vmatpush.msra.mxu0 0.0
    %1284 = vmatpush.msra.mxu0 0.0
    %1285 = vmatpush.msra.mxu0 0.0
    %1286 = vmatpush.msra.mxu0 0.0
    %1287 = vmatpush.msra.mxu0 0.0
    %1288 = vmatpush.msra.mxu0 0.0
    %1289 = vmatpush.msra.mxu0 0.0
    %1290 = vmatpush.msra.mxu0 0.0
    %1291 = vmatpush.msra.mxu0 0.0
    %1292 = vmatpush.msra.mxu0 0.0
    %1293 = vmatpush.msra.mxu0 0.0
    %1294 = vmatpush.msra.mxu0 0.0
    %1295 = vmatpush.msra.mxu0 %v1147
    %1296 = vmatmul.f32.gmra.mxu0 %v1158
    %v1297 = vpop.f32.mrf.mxu0
    %v1298 = vadd.f32 0.0, %v1297
    %1299 = vdwg.mxu0
    %1300 = vmatpush.msra.mxu0 0.0
    %1301 = vmatpush.msra.mxu0 0.0
    %1302 = vmatpush.msra.mxu0 0.0
    %1303 = vmatpush.msra.mxu0 0.0
    %1304 = vmatpush.msra.mxu0 0.0
    %1305 = vmatpush.msra.mxu0 0.0
    %1306 = vmatpush.msra.mxu0 0.0
    %1307 = vmatpush.msra.mxu0 0.0
    %1308 = vmatpush.msra.mxu0 0.0
    %1309 = vmatpush.msra.mxu0 0.0
    %1310 = vmatpush.msra.mxu0 0.0
    %1311 = vmatpush.msra.mxu0 0.0
    %1312 = vmatpush.msra.mxu0 0.0
    %1313 = vmatpush.msra.mxu0 0.0
    %1314 = vmatpush.msra.mxu0 0.0
    %1315 = vmatpush.msra.mxu0 %v1148
    %1316 = vmatmul.f32.gmra.mxu0 %v1158
    %v1317 = vpop.f32.mrf.mxu0
    %v1318 = vadd.f32 0.0, %v1317
    %1319 = vdwg.mxu0
    %v1320 = vadd.f32 %v1112, %v1178
    %v1321 = vadd.f32 %v1113, %v1198
    %v1322 = vadd.f32 %v1114, %v1218
    %v1323 = vadd.f32 %v1115, %v1238
    %v1324 = vadd.f32 %v1116, %v1258
    %v1325 = vadd.f32 %v1117, %v1278
    %v1326 = vadd.f32 %v1118, %v1298
    %v1327 = vadd.f32 %v1119, %v1318
    %s1328 = scalar_lea.vmem %s3, 48
    %v1329 = vld [vmem:[%s1328] sm:$0xff]
    %1330 = vrot.lane.b32.xlu0 %v114, 112
    %v1331 = vpop.permute.xlu0 %1330
    %1332 = vrot.lane.b32.xlu0 %v115, 112
    %v1333 = vpop.permute.xlu0 %1332
    %1334 = vrot.lane.b32.xlu0 %v116, 112
    %v1335 = vpop.permute.xlu0 %1334
    %1336 = vrot.lane.b32.xlu0 %v117, 112
    %v1337 = vpop.permute.xlu0 %1336
    %1338 = vrot.lane.b32.xlu0 %v118, 112
    %v1339 = vpop.permute.xlu0 %1338
    %1340 = vrot.lane.b32.xlu0 %v119, 112
    %v1341 = vpop.permute.xlu0 %1340
    %1342 = vrot.lane.b32.xlu0 %v120, 112
    %v1343 = vpop.permute.xlu0 %1342
    %1344 = vrot.lane.b32.xlu0 %v121, 112
    %v1345 = vpop.permute.xlu0 %1344
    %1346 = vrot.lane.b32.xlu0 %v124, 112
    %v1347 = vpop.permute.xlu0 %1346
    %vm1348 = vcmask 916480
    %v1349 = vsel %vm1348, %v1331, %v1333
    %v1350 = vsel %vm1348, %v1333, %v1335
    %v1351 = vsel %vm1348, %v1335, %v1337
    %v1352 = vsel %vm1348, %v1337, %v1339
    %v1353 = vsel %vm1348, %v1339, %v1341
    %v1354 = vsel %vm1348, %v1341, %v1343
    %v1355 = vsel %vm1348, %v1343, %v1345
    %v1356 = vsel %vm1348, %v1345, %v1347
    %v1366 = vsel %vm169, %v1329, 0
    %1368 = vmatpush.msra.mxu0 0.0
    %1369 = vmatpush.msra.mxu0 0.0
    %1370 = vmatpush.msra.mxu0 0.0
    %1371 = vmatpush.msra.mxu0 0.0
    %1372 = vmatpush.msra.mxu0 0.0
    %1373 = vmatpush.msra.mxu0 0.0
    %1374 = vmatpush.msra.mxu0 0.0
    %1375 = vmatpush.msra.mxu0 0.0
    %1376 = vmatpush.msra.mxu0 0.0
    %1377 = vmatpush.msra.mxu0 0.0
    %1378 = vmatpush.msra.mxu0 0.0
    %1379 = vmatpush.msra.mxu0 0.0
    %1380 = vmatpush.msra.mxu0 0.0
    %1381 = vmatpush.msra.mxu0 0.0
    %1382 = vmatpush.msra.mxu0 0.0
    %1383 = vmatpush.msra.mxu0 %v1349
    %1384 = vmatmul.f32.gmra.mxu0 %v1366
    %v1385 = vpop.f32.mrf.mxu0
    %v1386 = vadd.f32 0.0, %v1385
    %1387 = vdwg.mxu0
    %1388 = vmatpush.msra.mxu0 0.0
    %1389 = vmatpush.msra.mxu0 0.0
    %1390 = vmatpush.msra.mxu0 0.0
    %1391 = vmatpush.msra.mxu0 0.0
    %1392 = vmatpush.msra.mxu0 0.0
    %1393 = vmatpush.msra.mxu0 0.0
    %1394 = vmatpush.msra.mxu0 0.0
    %1395 = vmatpush.msra.mxu0 0.0
    %1396 = vmatpush.msra.mxu0 0.0
    %1397 = vmatpush.msra.mxu0 0.0
    %1398 = vmatpush.msra.mxu0 0.0
    %1399 = vmatpush.msra.mxu0 0.0
    %1400 = vmatpush.msra.mxu0 0.0
    %1401 = vmatpush.msra.mxu0 0.0
    %1402 = vmatpush.msra.mxu0 0.0
    %1403 = vmatpush.msra.mxu0 %v1350
    %1404 = vmatmul.f32.gmra.mxu0 %v1366
    %v1405 = vpop.f32.mrf.mxu0
    %v1406 = vadd.f32 0.0, %v1405
    %1407 = vdwg.mxu0
    %1408 = vmatpush.msra.mxu0 0.0
    %1409 = vmatpush.msra.mxu0 0.0
    %1410 = vmatpush.msra.mxu0 0.0
    %1411 = vmatpush.msra.mxu0 0.0
    %1412 = vmatpush.msra.mxu0 0.0
    %1413 = vmatpush.msra.mxu0 0.0
    %1414 = vmatpush.msra.mxu0 0.0
    %1415 = vmatpush.msra.mxu0 0.0
    %1416 = vmatpush.msra.mxu0 0.0
    %1417 = vmatpush.msra.mxu0 0.0
    %1418 = vmatpush.msra.mxu0 0.0
    %1419 = vmatpush.msra.mxu0 0.0
    %1420 = vmatpush.msra.mxu0 0.0
    %1421 = vmatpush.msra.mxu0 0.0
    %1422 = vmatpush.msra.mxu0 0.0
    %1423 = vmatpush.msra.mxu0 %v1351
    %1424 = vmatmul.f32.gmra.mxu0 %v1366
    %v1425 = vpop.f32.mrf.mxu0
    %v1426 = vadd.f32 0.0, %v1425
    %1427 = vdwg.mxu0
    %1428 = vmatpush.msra.mxu0 0.0
    %1429 = vmatpush.msra.mxu0 0.0
    %1430 = vmatpush.msra.mxu0 0.0
    %1431 = vmatpush.msra.mxu0 0.0
    %1432 = vmatpush.msra.mxu0 0.0
    %1433 = vmatpush.msra.mxu0 0.0
    %1434 = vmatpush.msra.mxu0 0.0
    %1435 = vmatpush.msra.mxu0 0.0
    %1436 = vmatpush.msra.mxu0 0.0
    %1437 = vmatpush.msra.mxu0 0.0
    %1438 = vmatpush.msra.mxu0 0.0
    %1439 = vmatpush.msra.mxu0 0.0
    %1440 = vmatpush.msra.mxu0 0.0
    %1441 = vmatpush.msra.mxu0 0.0
    %1442 = vmatpush.msra.mxu0 0.0
    %1443 = vmatpush.msra.mxu0 %v1352
    %1444 = vmatmul.f32.gmra.mxu0 %v1366
    %v1445 = vpop.f32.mrf.mxu0
    %v1446 = vadd.f32 0.0, %v1445
    %1447 = vdwg.mxu0
    %1448 = vmatpush.msra.mxu0 0.0
    %1449 = vmatpush.msra.mxu0 0.0
    %1450 = vmatpush.msra.mxu0 0.0
    %1451 = vmatpush.msra.mxu0 0.0
    %1452 = vmatpush.msra.mxu0 0.0
    %1453 = vmatpush.msra.mxu0 0.0
    %1454 = vmatpush.msra.mxu0 0.0
    %1455 = vmatpush.msra.mxu0 0.0
    %1456 = vmatpush.msra.mxu0 0.0
    %1457 = vmatpush.msra.mxu0 0.0
    %1458 = vmatpush.msra.mxu0 0.0
    %1459 = vmatpush.msra.mxu0 0.0
    %1460 = vmatpush.msra.mxu0 0.0
    %1461 = vmatpush.msra.mxu0 0.0
    %1462 = vmatpush.msra.mxu0 0.0
    %1463 = vmatpush.msra.mxu0 %v1353
    %1464 = vmatmul.f32.gmra.mxu0 %v1366
    %v1465 = vpop.f32.mrf.mxu0
    %v1466 = vadd.f32 0.0, %v1465
    %1467 = vdwg.mxu0
    %1468 = vmatpush.msra.mxu0 0.0
    %1469 = vmatpush.msra.mxu0 0.0
    %1470 = vmatpush.msra.mxu0 0.0
    %1471 = vmatpush.msra.mxu0 0.0
    %1472 = vmatpush.msra.mxu0 0.0
    %1473 = vmatpush.msra.mxu0 0.0
    %1474 = vmatpush.msra.mxu0 0.0
    %1475 = vmatpush.msra.mxu0 0.0
    %1476 = vmatpush.msra.mxu0 0.0
    %1477 = vmatpush.msra.mxu0 0.0
    %1478 = vmatpush.msra.mxu0 0.0
    %1479 = vmatpush.msra.mxu0 0.0
    %1480 = vmatpush.msra.mxu0 0.0
    %1481 = vmatpush.msra.mxu0 0.0
    %1482 = vmatpush.msra.mxu0 0.0
    %1483 = vmatpush.msra.mxu0 %v1354
    %1484 = vmatmul.f32.gmra.mxu0 %v1366
    %v1485 = vpop.f32.mrf.mxu0
    %v1486 = vadd.f32 0.0, %v1485
    %1487 = vdwg.mxu0
    %1488 = vmatpush.msra.mxu0 0.0
    %1489 = vmatpush.msra.mxu0 0.0
    %1490 = vmatpush.msra.mxu0 0.0
    %1491 = vmatpush.msra.mxu0 0.0
    %1492 = vmatpush.msra.mxu0 0.0
    %1493 = vmatpush.msra.mxu0 0.0
    %1494 = vmatpush.msra.mxu0 0.0
    %1495 = vmatpush.msra.mxu0 0.0
    %1496 = vmatpush.msra.mxu0 0.0
    %1497 = vmatpush.msra.mxu0 0.0
    %1498 = vmatpush.msra.mxu0 0.0
    %1499 = vmatpush.msra.mxu0 0.0
    %1500 = vmatpush.msra.mxu0 0.0
    %1501 = vmatpush.msra.mxu0 0.0
    %1502 = vmatpush.msra.mxu0 0.0
    %1503 = vmatpush.msra.mxu0 %v1355
    %1504 = vmatmul.f32.gmra.mxu0 %v1366
    %v1505 = vpop.f32.mrf.mxu0
    %v1506 = vadd.f32 0.0, %v1505
    %1507 = vdwg.mxu0
    %1508 = vmatpush.msra.mxu0 0.0
    %1509 = vmatpush.msra.mxu0 0.0
    %1510 = vmatpush.msra.mxu0 0.0
    %1511 = vmatpush.msra.mxu0 0.0
    %1512 = vmatpush.msra.mxu0 0.0
    %1513 = vmatpush.msra.mxu0 0.0
    %1514 = vmatpush.msra.mxu0 0.0
    %1515 = vmatpush.msra.mxu0 0.0
    %1516 = vmatpush.msra.mxu0 0.0
    %1517 = vmatpush.msra.mxu0 0.0
    %1518 = vmatpush.msra.mxu0 0.0
    %1519 = vmatpush.msra.mxu0 0.0
    %1520 = vmatpush.msra.mxu0 0.0
    %1521 = vmatpush.msra.mxu0 0.0
    %1522 = vmatpush.msra.mxu0 0.0
    %1523 = vmatpush.msra.mxu0 %v1356
    %1524 = vmatmul.f32.gmra.mxu0 %v1366
    %v1525 = vpop.f32.mrf.mxu0
    %v1526 = vadd.f32 0.0, %v1525
    %1527 = vdwg.mxu0
    %v1528 = vadd.f32 %v1320, %v1386
    %v1529 = vadd.f32 %v1321, %v1406
    %v1530 = vadd.f32 %v1322, %v1426
    %v1531 = vadd.f32 %v1323, %v1446
    %v1532 = vadd.f32 %v1324, %v1466
    %v1533 = vadd.f32 %v1325, %v1486
    %v1534 = vadd.f32 %v1326, %v1506
    %v1535 = vadd.f32 %v1327, %v1526
    %s1536 = scalar_lea.vmem %s3, 56
    %v1537 = vld [vmem:[%s1536] sm:$0xff]
    %1538 = vrot.lane.b32.xlu0 %v114, 111
    %v1539 = vpop.permute.xlu0 %1538
    %1540 = vrot.lane.b32.xlu0 %v115, 111
    %v1541 = vpop.permute.xlu0 %1540
    %1542 = vrot.lane.b32.xlu0 %v116, 111
    %v1543 = vpop.permute.xlu0 %1542
    %1544 = vrot.lane.b32.xlu0 %v117, 111
    %v1545 = vpop.permute.xlu0 %1544
    %1546 = vrot.lane.b32.xlu0 %v118, 111
    %v1547 = vpop.permute.xlu0 %1546
    %1548 = vrot.lane.b32.xlu0 %v119, 111
    %v1549 = vpop.permute.xlu0 %1548
    %1550 = vrot.lane.b32.xlu0 %v120, 111
    %v1551 = vpop.permute.xlu0 %1550
    %1552 = vrot.lane.b32.xlu0 %v121, 111
    %v1553 = vpop.permute.xlu0 %1552
    %1554 = vrot.lane.b32.xlu0 %v124, 111
    %v1555 = vpop.permute.xlu0 %1554
    %vm1556 = vcmask 908288
    %v1557 = vsel %vm1556, %v1539, %v1541
    %v1558 = vsel %vm1556, %v1541, %v1543
    %v1559 = vsel %vm1556, %v1543, %v1545
    %v1560 = vsel %vm1556, %v1545, %v1547
    %v1561 = vsel %vm1556, %v1547, %v1549
    %v1562 = vsel %vm1556, %v1549, %v1551
    %v1563 = vsel %vm1556, %v1551, %v1553
    %v1564 = vsel %vm1556, %v1553, %v1555
    %v1574 = vsel %vm169, %v1537, 0
    %1576 = vmatpush.msra.mxu0 0.0
    %1577 = vmatpush.msra.mxu0 0.0
    %1578 = vmatpush.msra.mxu0 0.0
    %1579 = vmatpush.msra.mxu0 0.0
    %1580 = vmatpush.msra.mxu0 0.0
    %1581 = vmatpush.msra.mxu0 0.0
    %1582 = vmatpush.msra.mxu0 0.0
    %1583 = vmatpush.msra.mxu0 0.0
    %1584 = vmatpush.msra.mxu0 0.0
    %1585 = vmatpush.msra.mxu0 0.0
    %1586 = vmatpush.msra.mxu0 0.0
    %1587 = vmatpush.msra.mxu0 0.0
    %1588 = vmatpush.msra.mxu0 0.0
    %1589 = vmatpush.msra.mxu0 0.0
    %1590 = vmatpush.msra.mxu0 0.0
    %1591 = vmatpush.msra.mxu0 %v1557
    %1592 = vmatmul.f32.gmra.mxu0 %v1574
    %v1593 = vpop.f32.mrf.mxu0
    %v1594 = vadd.f32 0.0, %v1593
    %1595 = vdwg.mxu0
    %1596 = vmatpush.msra.mxu0 0.0
    %1597 = vmatpush.msra.mxu0 0.0
    %1598 = vmatpush.msra.mxu0 0.0
    %1599 = vmatpush.msra.mxu0 0.0
    %1600 = vmatpush.msra.mxu0 0.0
    %1601 = vmatpush.msra.mxu0 0.0
    %1602 = vmatpush.msra.mxu0 0.0
    %1603 = vmatpush.msra.mxu0 0.0
    %1604 = vmatpush.msra.mxu0 0.0
    %1605 = vmatpush.msra.mxu0 0.0
    %1606 = vmatpush.msra.mxu0 0.0
    %1607 = vmatpush.msra.mxu0 0.0
    %1608 = vmatpush.msra.mxu0 0.0
    %1609 = vmatpush.msra.mxu0 0.0
    %1610 = vmatpush.msra.mxu0 0.0
    %1611 = vmatpush.msra.mxu0 %v1558
    %1612 = vmatmul.f32.gmra.mxu0 %v1574
    %v1613 = vpop.f32.mrf.mxu0
    %v1614 = vadd.f32 0.0, %v1613
    %1615 = vdwg.mxu0
    %1616 = vmatpush.msra.mxu0 0.0
    %1617 = vmatpush.msra.mxu0 0.0
    %1618 = vmatpush.msra.mxu0 0.0
    %1619 = vmatpush.msra.mxu0 0.0
    %1620 = vmatpush.msra.mxu0 0.0
    %1621 = vmatpush.msra.mxu0 0.0
    %1622 = vmatpush.msra.mxu0 0.0
    %1623 = vmatpush.msra.mxu0 0.0
    %1624 = vmatpush.msra.mxu0 0.0
    %1625 = vmatpush.msra.mxu0 0.0
    %1626 = vmatpush.msra.mxu0 0.0
    %1627 = vmatpush.msra.mxu0 0.0
    %1628 = vmatpush.msra.mxu0 0.0
    %1629 = vmatpush.msra.mxu0 0.0
    %1630 = vmatpush.msra.mxu0 0.0
    %1631 = vmatpush.msra.mxu0 %v1559
    %1632 = vmatmul.f32.gmra.mxu0 %v1574
    %v1633 = vpop.f32.mrf.mxu0
    %v1634 = vadd.f32 0.0, %v1633
    %1635 = vdwg.mxu0
    %1636 = vmatpush.msra.mxu0 0.0
    %1637 = vmatpush.msra.mxu0 0.0
    %1638 = vmatpush.msra.mxu0 0.0
    %1639 = vmatpush.msra.mxu0 0.0
    %1640 = vmatpush.msra.mxu0 0.0
    %1641 = vmatpush.msra.mxu0 0.0
    %1642 = vmatpush.msra.mxu0 0.0
    %1643 = vmatpush.msra.mxu0 0.0
    %1644 = vmatpush.msra.mxu0 0.0
    %1645 = vmatpush.msra.mxu0 0.0
    %1646 = vmatpush.msra.mxu0 0.0
    %1647 = vmatpush.msra.mxu0 0.0
    %1648 = vmatpush.msra.mxu0 0.0
    %1649 = vmatpush.msra.mxu0 0.0
    %1650 = vmatpush.msra.mxu0 0.0
    %1651 = vmatpush.msra.mxu0 %v1560
    %1652 = vmatmul.f32.gmra.mxu0 %v1574
    %v1653 = vpop.f32.mrf.mxu0
    %v1654 = vadd.f32 0.0, %v1653
    %1655 = vdwg.mxu0
    %1656 = vmatpush.msra.mxu0 0.0
    %1657 = vmatpush.msra.mxu0 0.0
    %1658 = vmatpush.msra.mxu0 0.0
    %1659 = vmatpush.msra.mxu0 0.0
    %1660 = vmatpush.msra.mxu0 0.0
    %1661 = vmatpush.msra.mxu0 0.0
    %1662 = vmatpush.msra.mxu0 0.0
    %1663 = vmatpush.msra.mxu0 0.0
    %1664 = vmatpush.msra.mxu0 0.0
    %1665 = vmatpush.msra.mxu0 0.0
    %1666 = vmatpush.msra.mxu0 0.0
    %1667 = vmatpush.msra.mxu0 0.0
    %1668 = vmatpush.msra.mxu0 0.0
    %1669 = vmatpush.msra.mxu0 0.0
    %1670 = vmatpush.msra.mxu0 0.0
    %1671 = vmatpush.msra.mxu0 %v1561
    %1672 = vmatmul.f32.gmra.mxu0 %v1574
    %v1673 = vpop.f32.mrf.mxu0
    %v1674 = vadd.f32 0.0, %v1673
    %1675 = vdwg.mxu0
    %1676 = vmatpush.msra.mxu0 0.0
    %1677 = vmatpush.msra.mxu0 0.0
    %1678 = vmatpush.msra.mxu0 0.0
    %1679 = vmatpush.msra.mxu0 0.0
    %1680 = vmatpush.msra.mxu0 0.0
    %1681 = vmatpush.msra.mxu0 0.0
    %1682 = vmatpush.msra.mxu0 0.0
    %1683 = vmatpush.msra.mxu0 0.0
    %1684 = vmatpush.msra.mxu0 0.0
    %1685 = vmatpush.msra.mxu0 0.0
    %1686 = vmatpush.msra.mxu0 0.0
    %1687 = vmatpush.msra.mxu0 0.0
    %1688 = vmatpush.msra.mxu0 0.0
    %1689 = vmatpush.msra.mxu0 0.0
    %1690 = vmatpush.msra.mxu0 0.0
    %1691 = vmatpush.msra.mxu0 %v1562
    %1692 = vmatmul.f32.gmra.mxu0 %v1574
    %v1693 = vpop.f32.mrf.mxu0
    %v1694 = vadd.f32 0.0, %v1693
    %1695 = vdwg.mxu0
    %1696 = vmatpush.msra.mxu0 0.0
    %1697 = vmatpush.msra.mxu0 0.0
    %1698 = vmatpush.msra.mxu0 0.0
    %1699 = vmatpush.msra.mxu0 0.0
    %1700 = vmatpush.msra.mxu0 0.0
    %1701 = vmatpush.msra.mxu0 0.0
    %1702 = vmatpush.msra.mxu0 0.0
    %1703 = vmatpush.msra.mxu0 0.0
    %1704 = vmatpush.msra.mxu0 0.0
    %1705 = vmatpush.msra.mxu0 0.0
    %1706 = vmatpush.msra.mxu0 0.0
    %1707 = vmatpush.msra.mxu0 0.0
    %1708 = vmatpush.msra.mxu0 0.0
    %1709 = vmatpush.msra.mxu0 0.0
    %1710 = vmatpush.msra.mxu0 0.0
    %1711 = vmatpush.msra.mxu0 %v1563
    %1712 = vmatmul.f32.gmra.mxu0 %v1574
    %v1713 = vpop.f32.mrf.mxu0
    %v1714 = vadd.f32 0.0, %v1713
    %1715 = vdwg.mxu0
    %1716 = vmatpush.msra.mxu0 0.0
    %1717 = vmatpush.msra.mxu0 0.0
    %1718 = vmatpush.msra.mxu0 0.0
    %1719 = vmatpush.msra.mxu0 0.0
    %1720 = vmatpush.msra.mxu0 0.0
    %1721 = vmatpush.msra.mxu0 0.0
    %1722 = vmatpush.msra.mxu0 0.0
    %1723 = vmatpush.msra.mxu0 0.0
    %1724 = vmatpush.msra.mxu0 0.0
    %1725 = vmatpush.msra.mxu0 0.0
    %1726 = vmatpush.msra.mxu0 0.0
    %1727 = vmatpush.msra.mxu0 0.0
    %1728 = vmatpush.msra.mxu0 0.0
    %1729 = vmatpush.msra.mxu0 0.0
    %1730 = vmatpush.msra.mxu0 0.0
    %1731 = vmatpush.msra.mxu0 %v1564
    %1732 = vmatmul.f32.gmra.mxu0 %v1574
    %v1733 = vpop.f32.mrf.mxu0
    %v1734 = vadd.f32 0.0, %v1733
    %1735 = vdwg.mxu0
    %v1736 = vadd.f32 %v1528, %v1594
    %v1737 = vadd.f32 %v1529, %v1614
    %v1738 = vadd.f32 %v1530, %v1634
    %v1739 = vadd.f32 %v1531, %v1654
    %v1740 = vadd.f32 %v1532, %v1674
    %v1741 = vadd.f32 %v1533, %v1694
    %v1742 = vadd.f32 %v1534, %v1714
    %v1743 = vadd.f32 %v1535, %v1734
    %s1744 = scalar_lea.vmem %s3, 64
    %v1745 = vld [vmem:[%s1744] sm:$0xff]
    %1746 = vrot.lane.b32.xlu0 %v114, 110
    %v1747 = vpop.permute.xlu0 %1746
    %1748 = vrot.lane.b32.xlu0 %v115, 110
    %v1749 = vpop.permute.xlu0 %1748
    %1750 = vrot.lane.b32.xlu0 %v116, 110
    %v1751 = vpop.permute.xlu0 %1750
    %1752 = vrot.lane.b32.xlu0 %v117, 110
    %v1753 = vpop.permute.xlu0 %1752
    %1754 = vrot.lane.b32.xlu0 %v118, 110
    %v1755 = vpop.permute.xlu0 %1754
    %1756 = vrot.lane.b32.xlu0 %v119, 110
    %v1757 = vpop.permute.xlu0 %1756
    %1758 = vrot.lane.b32.xlu0 %v120, 110
    %v1759 = vpop.permute.xlu0 %1758
    %1760 = vrot.lane.b32.xlu0 %v121, 110
    %v1761 = vpop.permute.xlu0 %1760
    %1762 = vrot.lane.b32.xlu0 %v124, 110
    %v1763 = vpop.permute.xlu0 %1762
    %vm1764 = vcmask 900096
    %v1765 = vsel %vm1764, %v1747, %v1749
    %v1766 = vsel %vm1764, %v1749, %v1751
    %v1767 = vsel %vm1764, %v1751, %v1753
    %v1768 = vsel %vm1764, %v1753, %v1755
    %v1769 = vsel %vm1764, %v1755, %v1757
    %v1770 = vsel %vm1764, %v1757, %v1759
    %v1771 = vsel %vm1764, %v1759, %v1761
    %v1772 = vsel %vm1764, %v1761, %v1763
    %v1782 = vsel %vm169, %v1745, 0
    %1784 = vmatpush.msra.mxu0 0.0
    %1785 = vmatpush.msra.mxu0 0.0
    %1786 = vmatpush.msra.mxu0 0.0
    %1787 = vmatpush.msra.mxu0 0.0
    %1788 = vmatpush.msra.mxu0 0.0
    %1789 = vmatpush.msra.mxu0 0.0
    %1790 = vmatpush.msra.mxu0 0.0
    %1791 = vmatpush.msra.mxu0 0.0
    %1792 = vmatpush.msra.mxu0 0.0
    %1793 = vmatpush.msra.mxu0 0.0
    %1794 = vmatpush.msra.mxu0 0.0
    %1795 = vmatpush.msra.mxu0 0.0
    %1796 = vmatpush.msra.mxu0 0.0
    %1797 = vmatpush.msra.mxu0 0.0
    %1798 = vmatpush.msra.mxu0 0.0
    %1799 = vmatpush.msra.mxu0 %v1765
    %1800 = vmatmul.f32.gmra.mxu0 %v1782
    %v1801 = vpop.f32.mrf.mxu0
    %v1802 = vadd.f32 0.0, %v1801
    %1803 = vdwg.mxu0
    %1804 = vmatpush.msra.mxu0 0.0
    %1805 = vmatpush.msra.mxu0 0.0
    %1806 = vmatpush.msra.mxu0 0.0
    %1807 = vmatpush.msra.mxu0 0.0
    %1808 = vmatpush.msra.mxu0 0.0
    %1809 = vmatpush.msra.mxu0 0.0
    %1810 = vmatpush.msra.mxu0 0.0
    %1811 = vmatpush.msra.mxu0 0.0
    %1812 = vmatpush.msra.mxu0 0.0
    %1813 = vmatpush.msra.mxu0 0.0
    %1814 = vmatpush.msra.mxu0 0.0
    %1815 = vmatpush.msra.mxu0 0.0
    %1816 = vmatpush.msra.mxu0 0.0
    %1817 = vmatpush.msra.mxu0 0.0
    %1818 = vmatpush.msra.mxu0 0.0
    %1819 = vmatpush.msra.mxu0 %v1766
    %1820 = vmatmul.f32.gmra.mxu0 %v1782
    %v1821 = vpop.f32.mrf.mxu0
    %v1822 = vadd.f32 0.0, %v1821
    %1823 = vdwg.mxu0
    %1824 = vmatpush.msra.mxu0 0.0
    %1825 = vmatpush.msra.mxu0 0.0
    %1826 = vmatpush.msra.mxu0 0.0
    %1827 = vmatpush.msra.mxu0 0.0
    %1828 = vmatpush.msra.mxu0 0.0
    %1829 = vmatpush.msra.mxu0 0.0
    %1830 = vmatpush.msra.mxu0 0.0
    %1831 = vmatpush.msra.mxu0 0.0
    %1832 = vmatpush.msra.mxu0 0.0
    %1833 = vmatpush.msra.mxu0 0.0
    %1834 = vmatpush.msra.mxu0 0.0
    %1835 = vmatpush.msra.mxu0 0.0
    %1836 = vmatpush.msra.mxu0 0.0
    %1837 = vmatpush.msra.mxu0 0.0
    %1838 = vmatpush.msra.mxu0 0.0
    %1839 = vmatpush.msra.mxu0 %v1767
    %1840 = vmatmul.f32.gmra.mxu0 %v1782
    %v1841 = vpop.f32.mrf.mxu0
    %v1842 = vadd.f32 0.0, %v1841
    %1843 = vdwg.mxu0
    %1844 = vmatpush.msra.mxu0 0.0
    %1845 = vmatpush.msra.mxu0 0.0
    %1846 = vmatpush.msra.mxu0 0.0
    %1847 = vmatpush.msra.mxu0 0.0
    %1848 = vmatpush.msra.mxu0 0.0
    %1849 = vmatpush.msra.mxu0 0.0
    %1850 = vmatpush.msra.mxu0 0.0
    %1851 = vmatpush.msra.mxu0 0.0
    %1852 = vmatpush.msra.mxu0 0.0
    %1853 = vmatpush.msra.mxu0 0.0
    %1854 = vmatpush.msra.mxu0 0.0
    %1855 = vmatpush.msra.mxu0 0.0
    %1856 = vmatpush.msra.mxu0 0.0
    %1857 = vmatpush.msra.mxu0 0.0
    %1858 = vmatpush.msra.mxu0 0.0
    %1859 = vmatpush.msra.mxu0 %v1768
    %1860 = vmatmul.f32.gmra.mxu0 %v1782
    %v1861 = vpop.f32.mrf.mxu0
    %v1862 = vadd.f32 0.0, %v1861
    %1863 = vdwg.mxu0
    %1864 = vmatpush.msra.mxu0 0.0
    %1865 = vmatpush.msra.mxu0 0.0
    %1866 = vmatpush.msra.mxu0 0.0
    %1867 = vmatpush.msra.mxu0 0.0
    %1868 = vmatpush.msra.mxu0 0.0
    %1869 = vmatpush.msra.mxu0 0.0
    %1870 = vmatpush.msra.mxu0 0.0
    %1871 = vmatpush.msra.mxu0 0.0
    %1872 = vmatpush.msra.mxu0 0.0
    %1873 = vmatpush.msra.mxu0 0.0
    %1874 = vmatpush.msra.mxu0 0.0
    %1875 = vmatpush.msra.mxu0 0.0
    %1876 = vmatpush.msra.mxu0 0.0
    %1877 = vmatpush.msra.mxu0 0.0
    %1878 = vmatpush.msra.mxu0 0.0
    %1879 = vmatpush.msra.mxu0 %v1769
    %1880 = vmatmul.f32.gmra.mxu0 %v1782
    %v1881 = vpop.f32.mrf.mxu0
    %v1882 = vadd.f32 0.0, %v1881
    %1883 = vdwg.mxu0
    %1884 = vmatpush.msra.mxu0 0.0
    %1885 = vmatpush.msra.mxu0 0.0
    %1886 = vmatpush.msra.mxu0 0.0
    %1887 = vmatpush.msra.mxu0 0.0
    %1888 = vmatpush.msra.mxu0 0.0
    %1889 = vmatpush.msra.mxu0 0.0
    %1890 = vmatpush.msra.mxu0 0.0
    %1891 = vmatpush.msra.mxu0 0.0
    %1892 = vmatpush.msra.mxu0 0.0
    %1893 = vmatpush.msra.mxu0 0.0
    %1894 = vmatpush.msra.mxu0 0.0
    %1895 = vmatpush.msra.mxu0 0.0
    %1896 = vmatpush.msra.mxu0 0.0
    %1897 = vmatpush.msra.mxu0 0.0
    %1898 = vmatpush.msra.mxu0 0.0
    %1899 = vmatpush.msra.mxu0 %v1770
    %1900 = vmatmul.f32.gmra.mxu0 %v1782
    %v1901 = vpop.f32.mrf.mxu0
    %v1902 = vadd.f32 0.0, %v1901
    %1903 = vdwg.mxu0
    %1904 = vmatpush.msra.mxu0 0.0
    %1905 = vmatpush.msra.mxu0 0.0
    %1906 = vmatpush.msra.mxu0 0.0
    %1907 = vmatpush.msra.mxu0 0.0
    %1908 = vmatpush.msra.mxu0 0.0
    %1909 = vmatpush.msra.mxu0 0.0
    %1910 = vmatpush.msra.mxu0 0.0
    %1911 = vmatpush.msra.mxu0 0.0
    %1912 = vmatpush.msra.mxu0 0.0
    %1913 = vmatpush.msra.mxu0 0.0
    %1914 = vmatpush.msra.mxu0 0.0
    %1915 = vmatpush.msra.mxu0 0.0
    %1916 = vmatpush.msra.mxu0 0.0
    %1917 = vmatpush.msra.mxu0 0.0
    %1918 = vmatpush.msra.mxu0 0.0
    %1919 = vmatpush.msra.mxu0 %v1771
    %1920 = vmatmul.f32.gmra.mxu0 %v1782
    %v1921 = vpop.f32.mrf.mxu0
    %v1922 = vadd.f32 0.0, %v1921
    %1923 = vdwg.mxu0
    %1924 = vmatpush.msra.mxu0 0.0
    %1925 = vmatpush.msra.mxu0 0.0
    %1926 = vmatpush.msra.mxu0 0.0
    %1927 = vmatpush.msra.mxu0 0.0
    %1928 = vmatpush.msra.mxu0 0.0
    %1929 = vmatpush.msra.mxu0 0.0
    %1930 = vmatpush.msra.mxu0 0.0
    %1931 = vmatpush.msra.mxu0 0.0
    %1932 = vmatpush.msra.mxu0 0.0
    %1933 = vmatpush.msra.mxu0 0.0
    %1934 = vmatpush.msra.mxu0 0.0
    %1935 = vmatpush.msra.mxu0 0.0
    %1936 = vmatpush.msra.mxu0 0.0
    %1937 = vmatpush.msra.mxu0 0.0
    %1938 = vmatpush.msra.mxu0 0.0
    %1939 = vmatpush.msra.mxu0 %v1772
    %1940 = vmatmul.f32.gmra.mxu0 %v1782
    %v1941 = vpop.f32.mrf.mxu0
    %v1942 = vadd.f32 0.0, %v1941
    %1943 = vdwg.mxu0
    %v1944 = vadd.f32 %v1736, %v1802
    %v1945 = vadd.f32 %v1737, %v1822
    %v1946 = vadd.f32 %v1738, %v1842
    %v1947 = vadd.f32 %v1739, %v1862
    %v1948 = vadd.f32 %v1740, %v1882
    %v1949 = vadd.f32 %v1741, %v1902
    %v1950 = vadd.f32 %v1742, %v1922
    %v1951 = vadd.f32 %v1743, %v1942
    %s1952 = scalar_lea.vmem %s3, 72
    %v1953 = vld [vmem:[%s1952] sm:$0xff]
    %1954 = vrot.lane.b32.xlu0 %v114, 64
    %v1955 = vpop.permute.xlu0 %1954
    %1956 = vrot.lane.b32.xlu0 %v115, 64
    %v1957 = vpop.permute.xlu0 %1956
    %1958 = vrot.lane.b32.xlu0 %v116, 64
    %v1959 = vpop.permute.xlu0 %1958
    %1960 = vrot.lane.b32.xlu0 %v117, 64
    %v1961 = vpop.permute.xlu0 %1960
    %1962 = vrot.lane.b32.xlu0 %v118, 64
    %v1963 = vpop.permute.xlu0 %1962
    %1964 = vrot.lane.b32.xlu0 %v119, 64
    %v1965 = vpop.permute.xlu0 %1964
    %1966 = vrot.lane.b32.xlu0 %v120, 64
    %v1967 = vpop.permute.xlu0 %1966
    %1968 = vrot.lane.b32.xlu0 %v121, 64
    %v1969 = vpop.permute.xlu0 %1968
    %1970 = vrot.lane.b32.xlu0 %v124, 64
    %v1971 = vpop.permute.xlu0 %1970
    %vm1972 = vcmask 523264
    %v1973 = vsel %vm1972, %v1955, %v1957
    %v1974 = vsel %vm1972, %v1957, %v1959
    %v1975 = vsel %vm1972, %v1959, %v1961
    %v1976 = vsel %vm1972, %v1961, %v1963
    %v1977 = vsel %vm1972, %v1963, %v1965
    %v1978 = vsel %vm1972, %v1965, %v1967
    %v1979 = vsel %vm1972, %v1967, %v1969
    %v1980 = vsel %vm1972, %v1969, %v1971
    %v1990 = vsel %vm169, %v1953, 0
    %1992 = vmatpush.msra.mxu0 0.0
    %1993 = vmatpush.msra.mxu0 0.0
    %1994 = vmatpush.msra.mxu0 0.0
    %1995 = vmatpush.msra.mxu0 0.0
    %1996 = vmatpush.msra.mxu0 0.0
    %1997 = vmatpush.msra.mxu0 0.0
    %1998 = vmatpush.msra.mxu0 0.0
    %1999 = vmatpush.msra.mxu0 0.0
    %2000 = vmatpush.msra.mxu0 0.0
    %2001 = vmatpush.msra.mxu0 0.0
    %2002 = vmatpush.msra.mxu0 0.0
    %2003 = vmatpush.msra.mxu0 0.0
    %2004 = vmatpush.msra.mxu0 0.0
    %2005 = vmatpush.msra.mxu0 0.0
    %2006 = vmatpush.msra.mxu0 0.0
    %2007 = vmatpush.msra.mxu0 %v1973
    %2008 = vmatmul.f32.gmra.mxu0 %v1990
    %v2009 = vpop.f32.mrf.mxu0
    %v2010 = vadd.f32 0.0, %v2009
    %2011 = vdwg.mxu0
    %2012 = vmatpush.msra.mxu0 0.0
    %2013 = vmatpush.msra.mxu0 0.0
    %2014 = vmatpush.msra.mxu0 0.0
    %2015 = vmatpush.msra.mxu0 0.0
    %2016 = vmatpush.msra.mxu0 0.0
    %2017 = vmatpush.msra.mxu0 0.0
    %2018 = vmatpush.msra.mxu0 0.0
    %2019 = vmatpush.msra.mxu0 0.0
    %2020 = vmatpush.msra.mxu0 0.0
    %2021 = vmatpush.msra.mxu0 0.0
    %2022 = vmatpush.msra.mxu0 0.0
    %2023 = vmatpush.msra.mxu0 0.0
    %2024 = vmatpush.msra.mxu0 0.0
    %2025 = vmatpush.msra.mxu0 0.0
    %2026 = vmatpush.msra.mxu0 0.0
    %2027 = vmatpush.msra.mxu0 %v1974
    %2028 = vmatmul.f32.gmra.mxu0 %v1990
    %v2029 = vpop.f32.mrf.mxu0
    %v2030 = vadd.f32 0.0, %v2029
    %2031 = vdwg.mxu0
    %2032 = vmatpush.msra.mxu0 0.0
    %2033 = vmatpush.msra.mxu0 0.0
    %2034 = vmatpush.msra.mxu0 0.0
    %2035 = vmatpush.msra.mxu0 0.0
    %2036 = vmatpush.msra.mxu0 0.0
    %2037 = vmatpush.msra.mxu0 0.0
    %2038 = vmatpush.msra.mxu0 0.0
    %2039 = vmatpush.msra.mxu0 0.0
    %2040 = vmatpush.msra.mxu0 0.0
    %2041 = vmatpush.msra.mxu0 0.0
    %2042 = vmatpush.msra.mxu0 0.0
    %2043 = vmatpush.msra.mxu0 0.0
    %2044 = vmatpush.msra.mxu0 0.0
    %2045 = vmatpush.msra.mxu0 0.0
    %2046 = vmatpush.msra.mxu0 0.0
    %2047 = vmatpush.msra.mxu0 %v1975
    %2048 = vmatmul.f32.gmra.mxu0 %v1990
    %v2049 = vpop.f32.mrf.mxu0
    %v2050 = vadd.f32 0.0, %v2049
    %2051 = vdwg.mxu0
    %2052 = vmatpush.msra.mxu0 0.0
    %2053 = vmatpush.msra.mxu0 0.0
    %2054 = vmatpush.msra.mxu0 0.0
    %2055 = vmatpush.msra.mxu0 0.0
    %2056 = vmatpush.msra.mxu0 0.0
    %2057 = vmatpush.msra.mxu0 0.0
    %2058 = vmatpush.msra.mxu0 0.0
    %2059 = vmatpush.msra.mxu0 0.0
    %2060 = vmatpush.msra.mxu0 0.0
    %2061 = vmatpush.msra.mxu0 0.0
    %2062 = vmatpush.msra.mxu0 0.0
    %2063 = vmatpush.msra.mxu0 0.0
    %2064 = vmatpush.msra.mxu0 0.0
    %2065 = vmatpush.msra.mxu0 0.0
    %2066 = vmatpush.msra.mxu0 0.0
    %2067 = vmatpush.msra.mxu0 %v1976
    %2068 = vmatmul.f32.gmra.mxu0 %v1990
    %v2069 = vpop.f32.mrf.mxu0
    %v2070 = vadd.f32 0.0, %v2069
    %2071 = vdwg.mxu0
    %2072 = vmatpush.msra.mxu0 0.0
    %2073 = vmatpush.msra.mxu0 0.0
    %2074 = vmatpush.msra.mxu0 0.0
    %2075 = vmatpush.msra.mxu0 0.0
    %2076 = vmatpush.msra.mxu0 0.0
    %2077 = vmatpush.msra.mxu0 0.0
    %2078 = vmatpush.msra.mxu0 0.0
    %2079 = vmatpush.msra.mxu0 0.0
    %2080 = vmatpush.msra.mxu0 0.0
    %2081 = vmatpush.msra.mxu0 0.0
    %2082 = vmatpush.msra.mxu0 0.0
    %2083 = vmatpush.msra.mxu0 0.0
    %2084 = vmatpush.msra.mxu0 0.0
    %2085 = vmatpush.msra.mxu0 0.0
    %2086 = vmatpush.msra.mxu0 0.0
    %2087 = vmatpush.msra.mxu0 %v1977
    %2088 = vmatmul.f32.gmra.mxu0 %v1990
    %v2089 = vpop.f32.mrf.mxu0
    %v2090 = vadd.f32 0.0, %v2089
    %2091 = vdwg.mxu0
    %2092 = vmatpush.msra.mxu0 0.0
    %2093 = vmatpush.msra.mxu0 0.0
    %2094 = vmatpush.msra.mxu0 0.0
    %2095 = vmatpush.msra.mxu0 0.0
    %2096 = vmatpush.msra.mxu0 0.0
    %2097 = vmatpush.msra.mxu0 0.0
    %2098 = vmatpush.msra.mxu0 0.0
    %2099 = vmatpush.msra.mxu0 0.0
    %2100 = vmatpush.msra.mxu0 0.0
    %2101 = vmatpush.msra.mxu0 0.0
    %2102 = vmatpush.msra.mxu0 0.0
    %2103 = vmatpush.msra.mxu0 0.0
    %2104 = vmatpush.msra.mxu0 0.0
    %2105 = vmatpush.msra.mxu0 0.0
    %2106 = vmatpush.msra.mxu0 0.0
    %2107 = vmatpush.msra.mxu0 %v1978
    %2108 = vmatmul.f32.gmra.mxu0 %v1990
    %v2109 = vpop.f32.mrf.mxu0
    %v2110 = vadd.f32 0.0, %v2109
    %2111 = vdwg.mxu0
    %2112 = vmatpush.msra.mxu0 0.0
    %2113 = vmatpush.msra.mxu0 0.0
    %2114 = vmatpush.msra.mxu0 0.0
    %2115 = vmatpush.msra.mxu0 0.0
    %2116 = vmatpush.msra.mxu0 0.0
    %2117 = vmatpush.msra.mxu0 0.0
    %2118 = vmatpush.msra.mxu0 0.0
    %2119 = vmatpush.msra.mxu0 0.0
    %2120 = vmatpush.msra.mxu0 0.0
    %2121 = vmatpush.msra.mxu0 0.0
    %2122 = vmatpush.msra.mxu0 0.0
    %2123 = vmatpush.msra.mxu0 0.0
    %2124 = vmatpush.msra.mxu0 0.0
    %2125 = vmatpush.msra.mxu0 0.0
    %2126 = vmatpush.msra.mxu0 0.0
    %2127 = vmatpush.msra.mxu0 %v1979
    %2128 = vmatmul.f32.gmra.mxu0 %v1990
    %v2129 = vpop.f32.mrf.mxu0
    %v2130 = vadd.f32 0.0, %v2129
    %2131 = vdwg.mxu0
    %2132 = vmatpush.msra.mxu0 0.0
    %2133 = vmatpush.msra.mxu0 0.0
    %2134 = vmatpush.msra.mxu0 0.0
    %2135 = vmatpush.msra.mxu0 0.0
    %2136 = vmatpush.msra.mxu0 0.0
    %2137 = vmatpush.msra.mxu0 0.0
    %2138 = vmatpush.msra.mxu0 0.0
    %2139 = vmatpush.msra.mxu0 0.0
    %2140 = vmatpush.msra.mxu0 0.0
    %2141 = vmatpush.msra.mxu0 0.0
    %2142 = vmatpush.msra.mxu0 0.0
    %2143 = vmatpush.msra.mxu0 0.0
    %2144 = vmatpush.msra.mxu0 0.0
    %2145 = vmatpush.msra.mxu0 0.0
    %2146 = vmatpush.msra.mxu0 0.0
    %2147 = vmatpush.msra.mxu0 %v1980
    %2148 = vmatmul.f32.gmra.mxu0 %v1990
    %v2149 = vpop.f32.mrf.mxu0
    %v2150 = vadd.f32 0.0, %v2149
    %2151 = vdwg.mxu0
    %v2152 = vadd.f32 %v1944, %v2010
    %v2153 = vadd.f32 %v1945, %v2030
    %v2154 = vadd.f32 %v1946, %v2050
    %v2155 = vadd.f32 %v1947, %v2070
    %v2156 = vadd.f32 %v1948, %v2090
    %v2157 = vadd.f32 %v1949, %v2110
    %v2158 = vadd.f32 %v1950, %v2130
    %v2159 = vadd.f32 %v1951, %v2150
    %s2160 = scalar_lea.vmem %s3, 80
    %v2161 = vld [vmem:[%s2160] sm:$0xff]
    %2162 = vrot.lane.b32.xlu0 %v114, 63
    %v2163 = vpop.permute.xlu0 %2162
    %2164 = vrot.lane.b32.xlu0 %v115, 63
    %v2165 = vpop.permute.xlu0 %2164
    %2166 = vrot.lane.b32.xlu0 %v116, 63
    %v2167 = vpop.permute.xlu0 %2166
    %2168 = vrot.lane.b32.xlu0 %v117, 63
    %v2169 = vpop.permute.xlu0 %2168
    %2170 = vrot.lane.b32.xlu0 %v118, 63
    %v2171 = vpop.permute.xlu0 %2170
    %2172 = vrot.lane.b32.xlu0 %v119, 63
    %v2173 = vpop.permute.xlu0 %2172
    %2174 = vrot.lane.b32.xlu0 %v120, 63
    %v2175 = vpop.permute.xlu0 %2174
    %2176 = vrot.lane.b32.xlu0 %v121, 63
    %v2177 = vpop.permute.xlu0 %2176
    %2178 = vrot.lane.b32.xlu0 %v124, 63
    %v2179 = vpop.permute.xlu0 %2178
    %vm2180 = vcmask 515072
    %v2181 = vsel %vm2180, %v2163, %v2165
    %v2182 = vsel %vm2180, %v2165, %v2167
    %v2183 = vsel %vm2180, %v2167, %v2169
    %v2184 = vsel %vm2180, %v2169, %v2171
    %v2185 = vsel %vm2180, %v2171, %v2173
    %v2186 = vsel %vm2180, %v2173, %v2175
    %v2187 = vsel %vm2180, %v2175, %v2177
    %v2188 = vsel %vm2180, %v2177, %v2179
    %v2198 = vsel %vm169, %v2161, 0
    %2200 = vmatpush.msra.mxu0 0.0
    %2201 = vmatpush.msra.mxu0 0.0
    %2202 = vmatpush.msra.mxu0 0.0
    %2203 = vmatpush.msra.mxu0 0.0
    %2204 = vmatpush.msra.mxu0 0.0
    %2205 = vmatpush.msra.mxu0 0.0
    %2206 = vmatpush.msra.mxu0 0.0
    %2207 = vmatpush.msra.mxu0 0.0
    %2208 = vmatpush.msra.mxu0 0.0
    %2209 = vmatpush.msra.mxu0 0.0
    %2210 = vmatpush.msra.mxu0 0.0
    %2211 = vmatpush.msra.mxu0 0.0
    %2212 = vmatpush.msra.mxu0 0.0
    %2213 = vmatpush.msra.mxu0 0.0
    %2214 = vmatpush.msra.mxu0 0.0
    %2215 = vmatpush.msra.mxu0 %v2181
    %2216 = vmatmul.f32.gmra.mxu0 %v2198
    %v2217 = vpop.f32.mrf.mxu0
    %v2218 = vadd.f32 0.0, %v2217
    %2219 = vdwg.mxu0
    %2220 = vmatpush.msra.mxu0 0.0
    %2221 = vmatpush.msra.mxu0 0.0
    %2222 = vmatpush.msra.mxu0 0.0
    %2223 = vmatpush.msra.mxu0 0.0
    %2224 = vmatpush.msra.mxu0 0.0
    %2225 = vmatpush.msra.mxu0 0.0
    %2226 = vmatpush.msra.mxu0 0.0
    %2227 = vmatpush.msra.mxu0 0.0
    %2228 = vmatpush.msra.mxu0 0.0
    %2229 = vmatpush.msra.mxu0 0.0
    %2230 = vmatpush.msra.mxu0 0.0
    %2231 = vmatpush.msra.mxu0 0.0
    %2232 = vmatpush.msra.mxu0 0.0
    %2233 = vmatpush.msra.mxu0 0.0
    %2234 = vmatpush.msra.mxu0 0.0
    %2235 = vmatpush.msra.mxu0 %v2182
    %2236 = vmatmul.f32.gmra.mxu0 %v2198
    %v2237 = vpop.f32.mrf.mxu0
    %v2238 = vadd.f32 0.0, %v2237
    %2239 = vdwg.mxu0
    %2240 = vmatpush.msra.mxu0 0.0
    %2241 = vmatpush.msra.mxu0 0.0
    %2242 = vmatpush.msra.mxu0 0.0
    %2243 = vmatpush.msra.mxu0 0.0
    %2244 = vmatpush.msra.mxu0 0.0
    %2245 = vmatpush.msra.mxu0 0.0
    %2246 = vmatpush.msra.mxu0 0.0
    %2247 = vmatpush.msra.mxu0 0.0
    %2248 = vmatpush.msra.mxu0 0.0
    %2249 = vmatpush.msra.mxu0 0.0
    %2250 = vmatpush.msra.mxu0 0.0
    %2251 = vmatpush.msra.mxu0 0.0
    %2252 = vmatpush.msra.mxu0 0.0
    %2253 = vmatpush.msra.mxu0 0.0
    %2254 = vmatpush.msra.mxu0 0.0
    %2255 = vmatpush.msra.mxu0 %v2183
    %2256 = vmatmul.f32.gmra.mxu0 %v2198
    %v2257 = vpop.f32.mrf.mxu0
    %v2258 = vadd.f32 0.0, %v2257
    %2259 = vdwg.mxu0
    %2260 = vmatpush.msra.mxu0 0.0
    %2261 = vmatpush.msra.mxu0 0.0
    %2262 = vmatpush.msra.mxu0 0.0
    %2263 = vmatpush.msra.mxu0 0.0
    %2264 = vmatpush.msra.mxu0 0.0
    %2265 = vmatpush.msra.mxu0 0.0
    %2266 = vmatpush.msra.mxu0 0.0
    %2267 = vmatpush.msra.mxu0 0.0
    %2268 = vmatpush.msra.mxu0 0.0
    %2269 = vmatpush.msra.mxu0 0.0
    %2270 = vmatpush.msra.mxu0 0.0
    %2271 = vmatpush.msra.mxu0 0.0
    %2272 = vmatpush.msra.mxu0 0.0
    %2273 = vmatpush.msra.mxu0 0.0
    %2274 = vmatpush.msra.mxu0 0.0
    %2275 = vmatpush.msra.mxu0 %v2184
    %2276 = vmatmul.f32.gmra.mxu0 %v2198
    %v2277 = vpop.f32.mrf.mxu0
    %v2278 = vadd.f32 0.0, %v2277
    %2279 = vdwg.mxu0
    %2280 = vmatpush.msra.mxu0 0.0
    %2281 = vmatpush.msra.mxu0 0.0
    %2282 = vmatpush.msra.mxu0 0.0
    %2283 = vmatpush.msra.mxu0 0.0
    %2284 = vmatpush.msra.mxu0 0.0
    %2285 = vmatpush.msra.mxu0 0.0
    %2286 = vmatpush.msra.mxu0 0.0
    %2287 = vmatpush.msra.mxu0 0.0
    %2288 = vmatpush.msra.mxu0 0.0
    %2289 = vmatpush.msra.mxu0 0.0
    %2290 = vmatpush.msra.mxu0 0.0
    %2291 = vmatpush.msra.mxu0 0.0
    %2292 = vmatpush.msra.mxu0 0.0
    %2293 = vmatpush.msra.mxu0 0.0
    %2294 = vmatpush.msra.mxu0 0.0
    %2295 = vmatpush.msra.mxu0 %v2185
    %2296 = vmatmul.f32.gmra.mxu0 %v2198
    %v2297 = vpop.f32.mrf.mxu0
    %v2298 = vadd.f32 0.0, %v2297
    %2299 = vdwg.mxu0
    %2300 = vmatpush.msra.mxu0 0.0
    %2301 = vmatpush.msra.mxu0 0.0
    %2302 = vmatpush.msra.mxu0 0.0
    %2303 = vmatpush.msra.mxu0 0.0
    %2304 = vmatpush.msra.mxu0 0.0
    %2305 = vmatpush.msra.mxu0 0.0
    %2306 = vmatpush.msra.mxu0 0.0
    %2307 = vmatpush.msra.mxu0 0.0
    %2308 = vmatpush.msra.mxu0 0.0
    %2309 = vmatpush.msra.mxu0 0.0
    %2310 = vmatpush.msra.mxu0 0.0
    %2311 = vmatpush.msra.mxu0 0.0
    %2312 = vmatpush.msra.mxu0 0.0
    %2313 = vmatpush.msra.mxu0 0.0
    %2314 = vmatpush.msra.mxu0 0.0
    %2315 = vmatpush.msra.mxu0 %v2186
    %2316 = vmatmul.f32.gmra.mxu0 %v2198
    %v2317 = vpop.f32.mrf.mxu0
    %v2318 = vadd.f32 0.0, %v2317
    %2319 = vdwg.mxu0
    %2320 = vmatpush.msra.mxu0 0.0
    %2321 = vmatpush.msra.mxu0 0.0
    %2322 = vmatpush.msra.mxu0 0.0
    %2323 = vmatpush.msra.mxu0 0.0
    %2324 = vmatpush.msra.mxu0 0.0
    %2325 = vmatpush.msra.mxu0 0.0
    %2326 = vmatpush.msra.mxu0 0.0
    %2327 = vmatpush.msra.mxu0 0.0
    %2328 = vmatpush.msra.mxu0 0.0
    %2329 = vmatpush.msra.mxu0 0.0
    %2330 = vmatpush.msra.mxu0 0.0
    %2331 = vmatpush.msra.mxu0 0.0
    %2332 = vmatpush.msra.mxu0 0.0
    %2333 = vmatpush.msra.mxu0 0.0
    %2334 = vmatpush.msra.mxu0 0.0
    %2335 = vmatpush.msra.mxu0 %v2187
    %2336 = vmatmul.f32.gmra.mxu0 %v2198
    %v2337 = vpop.f32.mrf.mxu0
    %v2338 = vadd.f32 0.0, %v2337
    %2339 = vdwg.mxu0
    %2340 = vmatpush.msra.mxu0 0.0
    %2341 = vmatpush.msra.mxu0 0.0
    %2342 = vmatpush.msra.mxu0 0.0
    %2343 = vmatpush.msra.mxu0 0.0
    %2344 = vmatpush.msra.mxu0 0.0
    %2345 = vmatpush.msra.mxu0 0.0
    %2346 = vmatpush.msra.mxu0 0.0
    %2347 = vmatpush.msra.mxu0 0.0
    %2348 = vmatpush.msra.mxu0 0.0
    %2349 = vmatpush.msra.mxu0 0.0
    %2350 = vmatpush.msra.mxu0 0.0
    %2351 = vmatpush.msra.mxu0 0.0
    %2352 = vmatpush.msra.mxu0 0.0
    %2353 = vmatpush.msra.mxu0 0.0
    %2354 = vmatpush.msra.mxu0 0.0
    %2355 = vmatpush.msra.mxu0 %v2188
    %2356 = vmatmul.f32.gmra.mxu0 %v2198
    %v2357 = vpop.f32.mrf.mxu0
    %v2358 = vadd.f32 0.0, %v2357
    %2359 = vdwg.mxu0
    %v2360 = vadd.f32 %v2152, %v2218
    %v2361 = vadd.f32 %v2153, %v2238
    %v2362 = vadd.f32 %v2154, %v2258
    %v2363 = vadd.f32 %v2155, %v2278
    %v2364 = vadd.f32 %v2156, %v2298
    %v2365 = vadd.f32 %v2157, %v2318
    %v2366 = vadd.f32 %v2158, %v2338
    %v2367 = vadd.f32 %v2159, %v2358
    %s2368 = scalar_lea.vmem %s3, 88
    %v2369 = vld [vmem:[%s2368] sm:$0xff]
    %2370 = vrot.lane.b32.xlu0 %v114, 62
    %v2371 = vpop.permute.xlu0 %2370
    %2372 = vrot.lane.b32.xlu0 %v115, 62
    %v2373 = vpop.permute.xlu0 %2372
    %2374 = vrot.lane.b32.xlu0 %v116, 62
    %v2375 = vpop.permute.xlu0 %2374
    %2376 = vrot.lane.b32.xlu0 %v117, 62
    %v2377 = vpop.permute.xlu0 %2376
    %2378 = vrot.lane.b32.xlu0 %v118, 62
    %v2379 = vpop.permute.xlu0 %2378
    %2380 = vrot.lane.b32.xlu0 %v119, 62
    %v2381 = vpop.permute.xlu0 %2380
    %2382 = vrot.lane.b32.xlu0 %v120, 62
    %v2383 = vpop.permute.xlu0 %2382
    %2384 = vrot.lane.b32.xlu0 %v121, 62
    %v2385 = vpop.permute.xlu0 %2384
    %2386 = vrot.lane.b32.xlu0 %v124, 62
    %v2387 = vpop.permute.xlu0 %2386
    %vm2388 = vcmask 506880
    %v2389 = vsel %vm2388, %v2371, %v2373
    %v2390 = vsel %vm2388, %v2373, %v2375
    %v2391 = vsel %vm2388, %v2375, %v2377
    %v2392 = vsel %vm2388, %v2377, %v2379
    %v2393 = vsel %vm2388, %v2379, %v2381
    %v2394 = vsel %vm2388, %v2381, %v2383
    %v2395 = vsel %vm2388, %v2383, %v2385
    %v2396 = vsel %vm2388, %v2385, %v2387
    %v2406 = vsel %vm169, %v2369, 0
    %2408 = vmatpush.msra.mxu0 0.0
    %2409 = vmatpush.msra.mxu0 0.0
    %2410 = vmatpush.msra.mxu0 0.0
    %2411 = vmatpush.msra.mxu0 0.0
    %2412 = vmatpush.msra.mxu0 0.0
    %2413 = vmatpush.msra.mxu0 0.0
    %2414 = vmatpush.msra.mxu0 0.0
    %2415 = vmatpush.msra.mxu0 0.0
    %2416 = vmatpush.msra.mxu0 0.0
    %2417 = vmatpush.msra.mxu0 0.0
    %2418 = vmatpush.msra.mxu0 0.0
    %2419 = vmatpush.msra.mxu0 0.0
    %2420 = vmatpush.msra.mxu0 0.0
    %2421 = vmatpush.msra.mxu0 0.0
    %2422 = vmatpush.msra.mxu0 0.0
    %2423 = vmatpush.msra.mxu0 %v2389
    %2424 = vmatmul.f32.gmra.mxu0 %v2406
    %v2425 = vpop.f32.mrf.mxu0
    %v2426 = vadd.f32 0.0, %v2425
    %2427 = vdwg.mxu0
    %2428 = vmatpush.msra.mxu0 0.0
    %2429 = vmatpush.msra.mxu0 0.0
    %2430 = vmatpush.msra.mxu0 0.0
    %2431 = vmatpush.msra.mxu0 0.0
    %2432 = vmatpush.msra.mxu0 0.0
    %2433 = vmatpush.msra.mxu0 0.0
    %2434 = vmatpush.msra.mxu0 0.0
    %2435 = vmatpush.msra.mxu0 0.0
    %2436 = vmatpush.msra.mxu0 0.0
    %2437 = vmatpush.msra.mxu0 0.0
    %2438 = vmatpush.msra.mxu0 0.0
    %2439 = vmatpush.msra.mxu0 0.0
    %2440 = vmatpush.msra.mxu0 0.0
    %2441 = vmatpush.msra.mxu0 0.0
    %2442 = vmatpush.msra.mxu0 0.0
    %2443 = vmatpush.msra.mxu0 %v2390
    %2444 = vmatmul.f32.gmra.mxu0 %v2406
    %v2445 = vpop.f32.mrf.mxu0
    %v2446 = vadd.f32 0.0, %v2445
    %2447 = vdwg.mxu0
    %2448 = vmatpush.msra.mxu0 0.0
    %2449 = vmatpush.msra.mxu0 0.0
    %2450 = vmatpush.msra.mxu0 0.0
    %2451 = vmatpush.msra.mxu0 0.0
    %2452 = vmatpush.msra.mxu0 0.0
    %2453 = vmatpush.msra.mxu0 0.0
    %2454 = vmatpush.msra.mxu0 0.0
    %2455 = vmatpush.msra.mxu0 0.0
    %2456 = vmatpush.msra.mxu0 0.0
    %2457 = vmatpush.msra.mxu0 0.0
    %2458 = vmatpush.msra.mxu0 0.0
    %2459 = vmatpush.msra.mxu0 0.0
    %2460 = vmatpush.msra.mxu0 0.0
    %2461 = vmatpush.msra.mxu0 0.0
    %2462 = vmatpush.msra.mxu0 0.0
    %2463 = vmatpush.msra.mxu0 %v2391
    %2464 = vmatmul.f32.gmra.mxu0 %v2406
    %v2465 = vpop.f32.mrf.mxu0
    %v2466 = vadd.f32 0.0, %v2465
    %2467 = vdwg.mxu0
    %2468 = vmatpush.msra.mxu0 0.0
    %2469 = vmatpush.msra.mxu0 0.0
    %2470 = vmatpush.msra.mxu0 0.0
    %2471 = vmatpush.msra.mxu0 0.0
    %2472 = vmatpush.msra.mxu0 0.0
    %2473 = vmatpush.msra.mxu0 0.0
    %2474 = vmatpush.msra.mxu0 0.0
    %2475 = vmatpush.msra.mxu0 0.0
    %2476 = vmatpush.msra.mxu0 0.0
    %2477 = vmatpush.msra.mxu0 0.0
    %2478 = vmatpush.msra.mxu0 0.0
    %2479 = vmatpush.msra.mxu0 0.0
    %2480 = vmatpush.msra.mxu0 0.0
    %2481 = vmatpush.msra.mxu0 0.0
    %2482 = vmatpush.msra.mxu0 0.0
    %2483 = vmatpush.msra.mxu0 %v2392
    %2484 = vmatmul.f32.gmra.mxu0 %v2406
    %v2485 = vpop.f32.mrf.mxu0
    %v2486 = vadd.f32 0.0, %v2485
    %2487 = vdwg.mxu0
    %2488 = vmatpush.msra.mxu0 0.0
    %2489 = vmatpush.msra.mxu0 0.0
    %2490 = vmatpush.msra.mxu0 0.0
    %2491 = vmatpush.msra.mxu0 0.0
    %2492 = vmatpush.msra.mxu0 0.0
    %2493 = vmatpush.msra.mxu0 0.0
    %2494 = vmatpush.msra.mxu0 0.0
    %2495 = vmatpush.msra.mxu0 0.0
    %2496 = vmatpush.msra.mxu0 0.0
    %2497 = vmatpush.msra.mxu0 0.0
    %2498 = vmatpush.msra.mxu0 0.0
    %2499 = vmatpush.msra.mxu0 0.0
    %2500 = vmatpush.msra.mxu0 0.0
    %2501 = vmatpush.msra.mxu0 0.0
    %2502 = vmatpush.msra.mxu0 0.0
    %2503 = vmatpush.msra.mxu0 %v2393
    %2504 = vmatmul.f32.gmra.mxu0 %v2406
    %v2505 = vpop.f32.mrf.mxu0
    %v2506 = vadd.f32 0.0, %v2505
    %2507 = vdwg.mxu0
    %2508 = vmatpush.msra.mxu0 0.0
    %2509 = vmatpush.msra.mxu0 0.0
    %2510 = vmatpush.msra.mxu0 0.0
    %2511 = vmatpush.msra.mxu0 0.0
    %2512 = vmatpush.msra.mxu0 0.0
    %2513 = vmatpush.msra.mxu0 0.0
    %2514 = vmatpush.msra.mxu0 0.0
    %2515 = vmatpush.msra.mxu0 0.0
    %2516 = vmatpush.msra.mxu0 0.0
    %2517 = vmatpush.msra.mxu0 0.0
    %2518 = vmatpush.msra.mxu0 0.0
    %2519 = vmatpush.msra.mxu0 0.0
    %2520 = vmatpush.msra.mxu0 0.0
    %2521 = vmatpush.msra.mxu0 0.0
    %2522 = vmatpush.msra.mxu0 0.0
    %2523 = vmatpush.msra.mxu0 %v2394
    %2524 = vmatmul.f32.gmra.mxu0 %v2406
    %v2525 = vpop.f32.mrf.mxu0
    %v2526 = vadd.f32 0.0, %v2525
    %2527 = vdwg.mxu0
    %2528 = vmatpush.msra.mxu0 0.0
    %2529 = vmatpush.msra.mxu0 0.0
    %2530 = vmatpush.msra.mxu0 0.0
    %2531 = vmatpush.msra.mxu0 0.0
    %2532 = vmatpush.msra.mxu0 0.0
    %2533 = vmatpush.msra.mxu0 0.0
    %2534 = vmatpush.msra.mxu0 0.0
    %2535 = vmatpush.msra.mxu0 0.0
    %2536 = vmatpush.msra.mxu0 0.0
    %2537 = vmatpush.msra.mxu0 0.0
    %2538 = vmatpush.msra.mxu0 0.0
    %2539 = vmatpush.msra.mxu0 0.0
    %2540 = vmatpush.msra.mxu0 0.0
    %2541 = vmatpush.msra.mxu0 0.0
    %2542 = vmatpush.msra.mxu0 0.0
    %2543 = vmatpush.msra.mxu0 %v2395
    %2544 = vmatmul.f32.gmra.mxu0 %v2406
    %v2545 = vpop.f32.mrf.mxu0
    %v2546 = vadd.f32 0.0, %v2545
    %2547 = vdwg.mxu0
    %2548 = vmatpush.msra.mxu0 0.0
    %2549 = vmatpush.msra.mxu0 0.0
    %2550 = vmatpush.msra.mxu0 0.0
    %2551 = vmatpush.msra.mxu0 0.0
    %2552 = vmatpush.msra.mxu0 0.0
    %2553 = vmatpush.msra.mxu0 0.0
    %2554 = vmatpush.msra.mxu0 0.0
    %2555 = vmatpush.msra.mxu0 0.0
    %2556 = vmatpush.msra.mxu0 0.0
    %2557 = vmatpush.msra.mxu0 0.0
    %2558 = vmatpush.msra.mxu0 0.0
    %2559 = vmatpush.msra.mxu0 0.0
    %2560 = vmatpush.msra.mxu0 0.0
    %2561 = vmatpush.msra.mxu0 0.0
    %2562 = vmatpush.msra.mxu0 0.0
    %2563 = vmatpush.msra.mxu0 %v2396
    %2564 = vmatmul.f32.gmra.mxu0 %v2406
    %v2565 = vpop.f32.mrf.mxu0
    %v2566 = vadd.f32 0.0, %v2565
    %2567 = vdwg.mxu0
    %v2568 = vadd.f32 %v2360, %v2426
    %v2569 = vadd.f32 %v2361, %v2446
    %v2570 = vadd.f32 %v2362, %v2466
    %v2571 = vadd.f32 %v2363, %v2486
    %v2572 = vadd.f32 %v2364, %v2506
    %v2573 = vadd.f32 %v2365, %v2526
    %v2574 = vadd.f32 %v2366, %v2546
    %v2575 = vadd.f32 %v2367, %v2566
    %s2576 = scalar_lea.vmem %s3, 96
    %v2577 = vld [vmem:[%s2576] sm:$0xff]
    %2578 = vrot.lane.b32.xlu0 %v114, 56
    %v2579 = vpop.permute.xlu0 %2578
    %2580 = vrot.lane.b32.xlu0 %v115, 56
    %v2581 = vpop.permute.xlu0 %2580
    %2582 = vrot.lane.b32.xlu0 %v116, 56
    %v2583 = vpop.permute.xlu0 %2582
    %2584 = vrot.lane.b32.xlu0 %v117, 56
    %v2585 = vpop.permute.xlu0 %2584
    %2586 = vrot.lane.b32.xlu0 %v118, 56
    %v2587 = vpop.permute.xlu0 %2586
    %2588 = vrot.lane.b32.xlu0 %v119, 56
    %v2589 = vpop.permute.xlu0 %2588
    %2590 = vrot.lane.b32.xlu0 %v120, 56
    %v2591 = vpop.permute.xlu0 %2590
    %2592 = vrot.lane.b32.xlu0 %v121, 56
    %v2593 = vpop.permute.xlu0 %2592
    %2594 = vrot.lane.b32.xlu0 %v124, 56
    %v2595 = vpop.permute.xlu0 %2594
    %vm2596 = vcmask 457728
    %v2597 = vsel %vm2596, %v2579, %v2581
    %v2598 = vsel %vm2596, %v2581, %v2583
    %v2599 = vsel %vm2596, %v2583, %v2585
    %v2600 = vsel %vm2596, %v2585, %v2587
    %v2601 = vsel %vm2596, %v2587, %v2589
    %v2602 = vsel %vm2596, %v2589, %v2591
    %v2603 = vsel %vm2596, %v2591, %v2593
    %v2604 = vsel %vm2596, %v2593, %v2595
    %v2614 = vsel %vm169, %v2577, 0
    %2616 = vmatpush.msra.mxu0 0.0
    %2617 = vmatpush.msra.mxu0 0.0
    %2618 = vmatpush.msra.mxu0 0.0
    %2619 = vmatpush.msra.mxu0 0.0
    %2620 = vmatpush.msra.mxu0 0.0
    %2621 = vmatpush.msra.mxu0 0.0
    %2622 = vmatpush.msra.mxu0 0.0
    %2623 = vmatpush.msra.mxu0 0.0
    %2624 = vmatpush.msra.mxu0 0.0
    %2625 = vmatpush.msra.mxu0 0.0
    %2626 = vmatpush.msra.mxu0 0.0
    %2627 = vmatpush.msra.mxu0 0.0
    %2628 = vmatpush.msra.mxu0 0.0
    %2629 = vmatpush.msra.mxu0 0.0
    %2630 = vmatpush.msra.mxu0 0.0
    %2631 = vmatpush.msra.mxu0 %v2597
    %2632 = vmatmul.f32.gmra.mxu0 %v2614
    %v2633 = vpop.f32.mrf.mxu0
    %v2634 = vadd.f32 0.0, %v2633
    %2635 = vdwg.mxu0
    %2636 = vmatpush.msra.mxu0 0.0
    %2637 = vmatpush.msra.mxu0 0.0
    %2638 = vmatpush.msra.mxu0 0.0
    %2639 = vmatpush.msra.mxu0 0.0
    %2640 = vmatpush.msra.mxu0 0.0
    %2641 = vmatpush.msra.mxu0 0.0
    %2642 = vmatpush.msra.mxu0 0.0
    %2643 = vmatpush.msra.mxu0 0.0
    %2644 = vmatpush.msra.mxu0 0.0
    %2645 = vmatpush.msra.mxu0 0.0
    %2646 = vmatpush.msra.mxu0 0.0
    %2647 = vmatpush.msra.mxu0 0.0
    %2648 = vmatpush.msra.mxu0 0.0
    %2649 = vmatpush.msra.mxu0 0.0
    %2650 = vmatpush.msra.mxu0 0.0
    %2651 = vmatpush.msra.mxu0 %v2598
    %2652 = vmatmul.f32.gmra.mxu0 %v2614
    %v2653 = vpop.f32.mrf.mxu0
    %v2654 = vadd.f32 0.0, %v2653
    %2655 = vdwg.mxu0
    %2656 = vmatpush.msra.mxu0 0.0
    %2657 = vmatpush.msra.mxu0 0.0
    %2658 = vmatpush.msra.mxu0 0.0
    %2659 = vmatpush.msra.mxu0 0.0
    %2660 = vmatpush.msra.mxu0 0.0
    %2661 = vmatpush.msra.mxu0 0.0
    %2662 = vmatpush.msra.mxu0 0.0
    %2663 = vmatpush.msra.mxu0 0.0
    %2664 = vmatpush.msra.mxu0 0.0
    %2665 = vmatpush.msra.mxu0 0.0
    %2666 = vmatpush.msra.mxu0 0.0
    %2667 = vmatpush.msra.mxu0 0.0
    %2668 = vmatpush.msra.mxu0 0.0
    %2669 = vmatpush.msra.mxu0 0.0
    %2670 = vmatpush.msra.mxu0 0.0
    %2671 = vmatpush.msra.mxu0 %v2599
    %2672 = vmatmul.f32.gmra.mxu0 %v2614
    %v2673 = vpop.f32.mrf.mxu0
    %v2674 = vadd.f32 0.0, %v2673
    %2675 = vdwg.mxu0
    %2676 = vmatpush.msra.mxu0 0.0
    %2677 = vmatpush.msra.mxu0 0.0
    %2678 = vmatpush.msra.mxu0 0.0
    %2679 = vmatpush.msra.mxu0 0.0
    %2680 = vmatpush.msra.mxu0 0.0
    %2681 = vmatpush.msra.mxu0 0.0
    %2682 = vmatpush.msra.mxu0 0.0
    %2683 = vmatpush.msra.mxu0 0.0
    %2684 = vmatpush.msra.mxu0 0.0
    %2685 = vmatpush.msra.mxu0 0.0
    %2686 = vmatpush.msra.mxu0 0.0
    %2687 = vmatpush.msra.mxu0 0.0
    %2688 = vmatpush.msra.mxu0 0.0
    %2689 = vmatpush.msra.mxu0 0.0
    %2690 = vmatpush.msra.mxu0 0.0
    %2691 = vmatpush.msra.mxu0 %v2600
    %2692 = vmatmul.f32.gmra.mxu0 %v2614
    %v2693 = vpop.f32.mrf.mxu0
    %v2694 = vadd.f32 0.0, %v2693
    %2695 = vdwg.mxu0
    %2696 = vmatpush.msra.mxu0 0.0
    %2697 = vmatpush.msra.mxu0 0.0
    %2698 = vmatpush.msra.mxu0 0.0
    %2699 = vmatpush.msra.mxu0 0.0
    %2700 = vmatpush.msra.mxu0 0.0
    %2701 = vmatpush.msra.mxu0 0.0
    %2702 = vmatpush.msra.mxu0 0.0
    %2703 = vmatpush.msra.mxu0 0.0
    %2704 = vmatpush.msra.mxu0 0.0
    %2705 = vmatpush.msra.mxu0 0.0
    %2706 = vmatpush.msra.mxu0 0.0
    %2707 = vmatpush.msra.mxu0 0.0
    %2708 = vmatpush.msra.mxu0 0.0
    %2709 = vmatpush.msra.mxu0 0.0
    %2710 = vmatpush.msra.mxu0 0.0
    %2711 = vmatpush.msra.mxu0 %v2601
    %2712 = vmatmul.f32.gmra.mxu0 %v2614
    %v2713 = vpop.f32.mrf.mxu0
    %v2714 = vadd.f32 0.0, %v2713
    %2715 = vdwg.mxu0
    %2716 = vmatpush.msra.mxu0 0.0
    %2717 = vmatpush.msra.mxu0 0.0
    %2718 = vmatpush.msra.mxu0 0.0
    %2719 = vmatpush.msra.mxu0 0.0
    %2720 = vmatpush.msra.mxu0 0.0
    %2721 = vmatpush.msra.mxu0 0.0
    %2722 = vmatpush.msra.mxu0 0.0
    %2723 = vmatpush.msra.mxu0 0.0
    %2724 = vmatpush.msra.mxu0 0.0
    %2725 = vmatpush.msra.mxu0 0.0
    %2726 = vmatpush.msra.mxu0 0.0
    %2727 = vmatpush.msra.mxu0 0.0
    %2728 = vmatpush.msra.mxu0 0.0
    %2729 = vmatpush.msra.mxu0 0.0
    %2730 = vmatpush.msra.mxu0 0.0
    %2731 = vmatpush.msra.mxu0 %v2602
    %2732 = vmatmul.f32.gmra.mxu0 %v2614
    %v2733 = vpop.f32.mrf.mxu0
    %v2734 = vadd.f32 0.0, %v2733
    %2735 = vdwg.mxu0
    %2736 = vmatpush.msra.mxu0 0.0
    %2737 = vmatpush.msra.mxu0 0.0
    %2738 = vmatpush.msra.mxu0 0.0
    %2739 = vmatpush.msra.mxu0 0.0
    %2740 = vmatpush.msra.mxu0 0.0
    %2741 = vmatpush.msra.mxu0 0.0
    %2742 = vmatpush.msra.mxu0 0.0
    %2743 = vmatpush.msra.mxu0 0.0
    %2744 = vmatpush.msra.mxu0 0.0
    %2745 = vmatpush.msra.mxu0 0.0
    %2746 = vmatpush.msra.mxu0 0.0
    %2747 = vmatpush.msra.mxu0 0.0
    %2748 = vmatpush.msra.mxu0 0.0
    %2749 = vmatpush.msra.mxu0 0.0
    %2750 = vmatpush.msra.mxu0 0.0
    %2751 = vmatpush.msra.mxu0 %v2603
    %2752 = vmatmul.f32.gmra.mxu0 %v2614
    %v2753 = vpop.f32.mrf.mxu0
    %v2754 = vadd.f32 0.0, %v2753
    %2755 = vdwg.mxu0
    %2756 = vmatpush.msra.mxu0 0.0
    %2757 = vmatpush.msra.mxu0 0.0
    %2758 = vmatpush.msra.mxu0 0.0
    %2759 = vmatpush.msra.mxu0 0.0
    %2760 = vmatpush.msra.mxu0 0.0
    %2761 = vmatpush.msra.mxu0 0.0
    %2762 = vmatpush.msra.mxu0 0.0
    %2763 = vmatpush.msra.mxu0 0.0
    %2764 = vmatpush.msra.mxu0 0.0
    %2765 = vmatpush.msra.mxu0 0.0
    %2766 = vmatpush.msra.mxu0 0.0
    %2767 = vmatpush.msra.mxu0 0.0
    %2768 = vmatpush.msra.mxu0 0.0
    %2769 = vmatpush.msra.mxu0 0.0
    %2770 = vmatpush.msra.mxu0 0.0
    %2771 = vmatpush.msra.mxu0 %v2604
    %2772 = vmatmul.f32.gmra.mxu0 %v2614
    %v2773 = vpop.f32.mrf.mxu0
    %v2774 = vadd.f32 0.0, %v2773
    %2775 = vdwg.mxu0
    %v2776 = vadd.f32 %v2568, %v2634
    %v2777 = vadd.f32 %v2569, %v2654
    %v2778 = vadd.f32 %v2570, %v2674
    %v2779 = vadd.f32 %v2571, %v2694
    %v2780 = vadd.f32 %v2572, %v2714
    %v2781 = vadd.f32 %v2573, %v2734
    %v2782 = vadd.f32 %v2574, %v2754
    %v2783 = vadd.f32 %v2575, %v2774
    %s2784 = scalar_lea.vmem %s3, 104
    %v2785 = vld [vmem:[%s2784] sm:$0xff]
    %2786 = vrot.lane.b32.xlu0 %v114, 55
    %v2787 = vpop.permute.xlu0 %2786
    %2788 = vrot.lane.b32.xlu0 %v115, 55
    %v2789 = vpop.permute.xlu0 %2788
    %2790 = vrot.lane.b32.xlu0 %v116, 55
    %v2791 = vpop.permute.xlu0 %2790
    %2792 = vrot.lane.b32.xlu0 %v117, 55
    %v2793 = vpop.permute.xlu0 %2792
    %2794 = vrot.lane.b32.xlu0 %v118, 55
    %v2795 = vpop.permute.xlu0 %2794
    %2796 = vrot.lane.b32.xlu0 %v119, 55
    %v2797 = vpop.permute.xlu0 %2796
    %2798 = vrot.lane.b32.xlu0 %v120, 55
    %v2799 = vpop.permute.xlu0 %2798
    %2800 = vrot.lane.b32.xlu0 %v121, 55
    %v2801 = vpop.permute.xlu0 %2800
    %2802 = vrot.lane.b32.xlu0 %v124, 55
    %v2803 = vpop.permute.xlu0 %2802
    %vm2804 = vcmask 449536
    %v2805 = vsel %vm2804, %v2787, %v2789
    %v2806 = vsel %vm2804, %v2789, %v2791
    %v2807 = vsel %vm2804, %v2791, %v2793
    %v2808 = vsel %vm2804, %v2793, %v2795
    %v2809 = vsel %vm2804, %v2795, %v2797
    %v2810 = vsel %vm2804, %v2797, %v2799
    %v2811 = vsel %vm2804, %v2799, %v2801
    %v2812 = vsel %vm2804, %v2801, %v2803
    %v2822 = vsel %vm169, %v2785, 0
    %2824 = vmatpush.msra.mxu0 0.0
    %2825 = vmatpush.msra.mxu0 0.0
    %2826 = vmatpush.msra.mxu0 0.0
    %2827 = vmatpush.msra.mxu0 0.0
    %2828 = vmatpush.msra.mxu0 0.0
    %2829 = vmatpush.msra.mxu0 0.0
    %2830 = vmatpush.msra.mxu0 0.0
    %2831 = vmatpush.msra.mxu0 0.0
    %2832 = vmatpush.msra.mxu0 0.0
    %2833 = vmatpush.msra.mxu0 0.0
    %2834 = vmatpush.msra.mxu0 0.0
    %2835 = vmatpush.msra.mxu0 0.0
    %2836 = vmatpush.msra.mxu0 0.0
    %2837 = vmatpush.msra.mxu0 0.0
    %2838 = vmatpush.msra.mxu0 0.0
    %2839 = vmatpush.msra.mxu0 %v2805
    %2840 = vmatmul.f32.gmra.mxu0 %v2822
    %v2841 = vpop.f32.mrf.mxu0
    %v2842 = vadd.f32 0.0, %v2841
    %2843 = vdwg.mxu0
    %2844 = vmatpush.msra.mxu0 0.0
    %2845 = vmatpush.msra.mxu0 0.0
    %2846 = vmatpush.msra.mxu0 0.0
    %2847 = vmatpush.msra.mxu0 0.0
    %2848 = vmatpush.msra.mxu0 0.0
    %2849 = vmatpush.msra.mxu0 0.0
    %2850 = vmatpush.msra.mxu0 0.0
    %2851 = vmatpush.msra.mxu0 0.0
    %2852 = vmatpush.msra.mxu0 0.0
    %2853 = vmatpush.msra.mxu0 0.0
    %2854 = vmatpush.msra.mxu0 0.0
    %2855 = vmatpush.msra.mxu0 0.0
    %2856 = vmatpush.msra.mxu0 0.0
    %2857 = vmatpush.msra.mxu0 0.0
    %2858 = vmatpush.msra.mxu0 0.0
    %2859 = vmatpush.msra.mxu0 %v2806
    %2860 = vmatmul.f32.gmra.mxu0 %v2822
    %v2861 = vpop.f32.mrf.mxu0
    %v2862 = vadd.f32 0.0, %v2861
    %2863 = vdwg.mxu0
    %2864 = vmatpush.msra.mxu0 0.0
    %2865 = vmatpush.msra.mxu0 0.0
    %2866 = vmatpush.msra.mxu0 0.0
    %2867 = vmatpush.msra.mxu0 0.0
    %2868 = vmatpush.msra.mxu0 0.0
    %2869 = vmatpush.msra.mxu0 0.0
    %2870 = vmatpush.msra.mxu0 0.0
    %2871 = vmatpush.msra.mxu0 0.0
    %2872 = vmatpush.msra.mxu0 0.0
    %2873 = vmatpush.msra.mxu0 0.0
    %2874 = vmatpush.msra.mxu0 0.0
    %2875 = vmatpush.msra.mxu0 0.0
    %2876 = vmatpush.msra.mxu0 0.0
    %2877 = vmatpush.msra.mxu0 0.0
    %2878 = vmatpush.msra.mxu0 0.0
    %2879 = vmatpush.msra.mxu0 %v2807
    %2880 = vmatmul.f32.gmra.mxu0 %v2822
    %v2881 = vpop.f32.mrf.mxu0
    %v2882 = vadd.f32 0.0, %v2881
    %2883 = vdwg.mxu0
    %2884 = vmatpush.msra.mxu0 0.0
    %2885 = vmatpush.msra.mxu0 0.0
    %2886 = vmatpush.msra.mxu0 0.0
    %2887 = vmatpush.msra.mxu0 0.0
    %2888 = vmatpush.msra.mxu0 0.0
    %2889 = vmatpush.msra.mxu0 0.0
    %2890 = vmatpush.msra.mxu0 0.0
    %2891 = vmatpush.msra.mxu0 0.0
    %2892 = vmatpush.msra.mxu0 0.0
    %2893 = vmatpush.msra.mxu0 0.0
    %2894 = vmatpush.msra.mxu0 0.0
    %2895 = vmatpush.msra.mxu0 0.0
    %2896 = vmatpush.msra.mxu0 0.0
    %2897 = vmatpush.msra.mxu0 0.0
    %2898 = vmatpush.msra.mxu0 0.0
    %2899 = vmatpush.msra.mxu0 %v2808
    %2900 = vmatmul.f32.gmra.mxu0 %v2822
    %v2901 = vpop.f32.mrf.mxu0
    %v2902 = vadd.f32 0.0, %v2901
    %2903 = vdwg.mxu0
    %2904 = vmatpush.msra.mxu0 0.0
    %2905 = vmatpush.msra.mxu0 0.0
    %2906 = vmatpush.msra.mxu0 0.0
    %2907 = vmatpush.msra.mxu0 0.0
    %2908 = vmatpush.msra.mxu0 0.0
    %2909 = vmatpush.msra.mxu0 0.0
    %2910 = vmatpush.msra.mxu0 0.0
    %2911 = vmatpush.msra.mxu0 0.0
    %2912 = vmatpush.msra.mxu0 0.0
    %2913 = vmatpush.msra.mxu0 0.0
    %2914 = vmatpush.msra.mxu0 0.0
    %2915 = vmatpush.msra.mxu0 0.0
    %2916 = vmatpush.msra.mxu0 0.0
    %2917 = vmatpush.msra.mxu0 0.0
    %2918 = vmatpush.msra.mxu0 0.0
    %2919 = vmatpush.msra.mxu0 %v2809
    %2920 = vmatmul.f32.gmra.mxu0 %v2822
    %v2921 = vpop.f32.mrf.mxu0
    %v2922 = vadd.f32 0.0, %v2921
    %2923 = vdwg.mxu0
    %2924 = vmatpush.msra.mxu0 0.0
    %2925 = vmatpush.msra.mxu0 0.0
    %2926 = vmatpush.msra.mxu0 0.0
    %2927 = vmatpush.msra.mxu0 0.0
    %2928 = vmatpush.msra.mxu0 0.0
    %2929 = vmatpush.msra.mxu0 0.0
    %2930 = vmatpush.msra.mxu0 0.0
    %2931 = vmatpush.msra.mxu0 0.0
    %2932 = vmatpush.msra.mxu0 0.0
    %2933 = vmatpush.msra.mxu0 0.0
    %2934 = vmatpush.msra.mxu0 0.0
    %2935 = vmatpush.msra.mxu0 0.0
    %2936 = vmatpush.msra.mxu0 0.0
    %2937 = vmatpush.msra.mxu0 0.0
    %2938 = vmatpush.msra.mxu0 0.0
    %2939 = vmatpush.msra.mxu0 %v2810
    %2940 = vmatmul.f32.gmra.mxu0 %v2822
    %v2941 = vpop.f32.mrf.mxu0
    %v2942 = vadd.f32 0.0, %v2941
    %2943 = vdwg.mxu0
    %2944 = vmatpush.msra.mxu0 0.0
    %2945 = vmatpush.msra.mxu0 0.0
    %2946 = vmatpush.msra.mxu0 0.0
    %2947 = vmatpush.msra.mxu0 0.0
    %2948 = vmatpush.msra.mxu0 0.0
    %2949 = vmatpush.msra.mxu0 0.0
    %2950 = vmatpush.msra.mxu0 0.0
    %2951 = vmatpush.msra.mxu0 0.0
    %2952 = vmatpush.msra.mxu0 0.0
    %2953 = vmatpush.msra.mxu0 0.0
    %2954 = vmatpush.msra.mxu0 0.0
    %2955 = vmatpush.msra.mxu0 0.0
    %2956 = vmatpush.msra.mxu0 0.0
    %2957 = vmatpush.msra.mxu0 0.0
    %2958 = vmatpush.msra.mxu0 0.0
    %2959 = vmatpush.msra.mxu0 %v2811
    %2960 = vmatmul.f32.gmra.mxu0 %v2822
    %v2961 = vpop.f32.mrf.mxu0
    %v2962 = vadd.f32 0.0, %v2961
    %2963 = vdwg.mxu0
    %2964 = vmatpush.msra.mxu0 0.0
    %2965 = vmatpush.msra.mxu0 0.0
    %2966 = vmatpush.msra.mxu0 0.0
    %2967 = vmatpush.msra.mxu0 0.0
    %2968 = vmatpush.msra.mxu0 0.0
    %2969 = vmatpush.msra.mxu0 0.0
    %2970 = vmatpush.msra.mxu0 0.0
    %2971 = vmatpush.msra.mxu0 0.0
    %2972 = vmatpush.msra.mxu0 0.0
    %2973 = vmatpush.msra.mxu0 0.0
    %2974 = vmatpush.msra.mxu0 0.0
    %2975 = vmatpush.msra.mxu0 0.0
    %2976 = vmatpush.msra.mxu0 0.0
    %2977 = vmatpush.msra.mxu0 0.0
    %2978 = vmatpush.msra.mxu0 0.0
    %2979 = vmatpush.msra.mxu0 %v2812
    %2980 = vmatmul.f32.gmra.mxu0 %v2822
    %v2981 = vpop.f32.mrf.mxu0
    %v2982 = vadd.f32 0.0, %v2981
    %2983 = vdwg.mxu0
    %v2984 = vadd.f32 %v2776, %v2842
    %v2985 = vadd.f32 %v2777, %v2862
    %v2986 = vadd.f32 %v2778, %v2882
    %v2987 = vadd.f32 %v2779, %v2902
    %v2988 = vadd.f32 %v2780, %v2922
    %v2989 = vadd.f32 %v2781, %v2942
    %v2990 = vadd.f32 %v2782, %v2962
    %v2991 = vadd.f32 %v2783, %v2982
    %s2992 = scalar_lea.vmem %s3, 112
    %v2993 = vld [vmem:[%s2992] sm:$0xff]
    %2994 = vrot.lane.b32.xlu0 %v114, 54
    %v2995 = vpop.permute.xlu0 %2994
    %2996 = vrot.lane.b32.xlu0 %v115, 54
    %v2997 = vpop.permute.xlu0 %2996
    %2998 = vrot.lane.b32.xlu0 %v116, 54
    %v2999 = vpop.permute.xlu0 %2998
    %3000 = vrot.lane.b32.xlu0 %v117, 54
    %v3001 = vpop.permute.xlu0 %3000
    %3002 = vrot.lane.b32.xlu0 %v118, 54
    %v3003 = vpop.permute.xlu0 %3002
    %3004 = vrot.lane.b32.xlu0 %v119, 54
    %v3005 = vpop.permute.xlu0 %3004
    %3006 = vrot.lane.b32.xlu0 %v120, 54
    %v3007 = vpop.permute.xlu0 %3006
    %3008 = vrot.lane.b32.xlu0 %v121, 54
    %v3009 = vpop.permute.xlu0 %3008
    %3010 = vrot.lane.b32.xlu0 %v124, 54
    %v3011 = vpop.permute.xlu0 %3010
    %vm3012 = vcmask 441344
    %v3013 = vsel %vm3012, %v2995, %v2997
    %v3014 = vsel %vm3012, %v2997, %v2999
    %v3015 = vsel %vm3012, %v2999, %v3001
    %v3016 = vsel %vm3012, %v3001, %v3003
    %v3017 = vsel %vm3012, %v3003, %v3005
    %v3018 = vsel %vm3012, %v3005, %v3007
    %v3019 = vsel %vm3012, %v3007, %v3009
    %v3020 = vsel %vm3012, %v3009, %v3011
    %v3030 = vsel %vm169, %v2993, 0
    %3032 = vmatpush.msra.mxu0 0.0
    %3033 = vmatpush.msra.mxu0 0.0
    %3034 = vmatpush.msra.mxu0 0.0
    %3035 = vmatpush.msra.mxu0 0.0
    %3036 = vmatpush.msra.mxu0 0.0
    %3037 = vmatpush.msra.mxu0 0.0
    %3038 = vmatpush.msra.mxu0 0.0
    %3039 = vmatpush.msra.mxu0 0.0
    %3040 = vmatpush.msra.mxu0 0.0
    %3041 = vmatpush.msra.mxu0 0.0
    %3042 = vmatpush.msra.mxu0 0.0
    %3043 = vmatpush.msra.mxu0 0.0
    %3044 = vmatpush.msra.mxu0 0.0
    %3045 = vmatpush.msra.mxu0 0.0
    %3046 = vmatpush.msra.mxu0 0.0
    %3047 = vmatpush.msra.mxu0 %v3013
    %3048 = vmatmul.f32.gmra.mxu0 %v3030
    %v3049 = vpop.f32.mrf.mxu0
    %v3050 = vadd.f32 0.0, %v3049
    %3051 = vdwg.mxu0
    %3052 = vmatpush.msra.mxu0 0.0
    %3053 = vmatpush.msra.mxu0 0.0
    %3054 = vmatpush.msra.mxu0 0.0
    %3055 = vmatpush.msra.mxu0 0.0
    %3056 = vmatpush.msra.mxu0 0.0
    %3057 = vmatpush.msra.mxu0 0.0
    %3058 = vmatpush.msra.mxu0 0.0
    %3059 = vmatpush.msra.mxu0 0.0
    %3060 = vmatpush.msra.mxu0 0.0
    %3061 = vmatpush.msra.mxu0 0.0
    %3062 = vmatpush.msra.mxu0 0.0
    %3063 = vmatpush.msra.mxu0 0.0
    %3064 = vmatpush.msra.mxu0 0.0
    %3065 = vmatpush.msra.mxu0 0.0
    %3066 = vmatpush.msra.mxu0 0.0
    %3067 = vmatpush.msra.mxu0 %v3014
    %3068 = vmatmul.f32.gmra.mxu0 %v3030
    %v3069 = vpop.f32.mrf.mxu0
    %v3070 = vadd.f32 0.0, %v3069
    %3071 = vdwg.mxu0
    %3072 = vmatpush.msra.mxu0 0.0
    %3073 = vmatpush.msra.mxu0 0.0
    %3074 = vmatpush.msra.mxu0 0.0
    %3075 = vmatpush.msra.mxu0 0.0
    %3076 = vmatpush.msra.mxu0 0.0
    %3077 = vmatpush.msra.mxu0 0.0
    %3078 = vmatpush.msra.mxu0 0.0
    %3079 = vmatpush.msra.mxu0 0.0
    %3080 = vmatpush.msra.mxu0 0.0
    %3081 = vmatpush.msra.mxu0 0.0
    %3082 = vmatpush.msra.mxu0 0.0
    %3083 = vmatpush.msra.mxu0 0.0
    %3084 = vmatpush.msra.mxu0 0.0
    %3085 = vmatpush.msra.mxu0 0.0
    %3086 = vmatpush.msra.mxu0 0.0
    %3087 = vmatpush.msra.mxu0 %v3015
    %3088 = vmatmul.f32.gmra.mxu0 %v3030
    %v3089 = vpop.f32.mrf.mxu0
    %v3090 = vadd.f32 0.0, %v3089
    %3091 = vdwg.mxu0
    %3092 = vmatpush.msra.mxu0 0.0
    %3093 = vmatpush.msra.mxu0 0.0
    %3094 = vmatpush.msra.mxu0 0.0
    %3095 = vmatpush.msra.mxu0 0.0
    %3096 = vmatpush.msra.mxu0 0.0
    %3097 = vmatpush.msra.mxu0 0.0
    %3098 = vmatpush.msra.mxu0 0.0
    %3099 = vmatpush.msra.mxu0 0.0
    %3100 = vmatpush.msra.mxu0 0.0
    %3101 = vmatpush.msra.mxu0 0.0
    %3102 = vmatpush.msra.mxu0 0.0
    %3103 = vmatpush.msra.mxu0 0.0
    %3104 = vmatpush.msra.mxu0 0.0
    %3105 = vmatpush.msra.mxu0 0.0
    %3106 = vmatpush.msra.mxu0 0.0
    %3107 = vmatpush.msra.mxu0 %v3016
    %3108 = vmatmul.f32.gmra.mxu0 %v3030
    %v3109 = vpop.f32.mrf.mxu0
    %v3110 = vadd.f32 0.0, %v3109
    %3111 = vdwg.mxu0
    %3112 = vmatpush.msra.mxu0 0.0
    %3113 = vmatpush.msra.mxu0 0.0
    %3114 = vmatpush.msra.mxu0 0.0
    %3115 = vmatpush.msra.mxu0 0.0
    %3116 = vmatpush.msra.mxu0 0.0
    %3117 = vmatpush.msra.mxu0 0.0
    %3118 = vmatpush.msra.mxu0 0.0
    %3119 = vmatpush.msra.mxu0 0.0
    %3120 = vmatpush.msra.mxu0 0.0
    %3121 = vmatpush.msra.mxu0 0.0
    %3122 = vmatpush.msra.mxu0 0.0
    %3123 = vmatpush.msra.mxu0 0.0
    %3124 = vmatpush.msra.mxu0 0.0
    %3125 = vmatpush.msra.mxu0 0.0
    %3126 = vmatpush.msra.mxu0 0.0
    %3127 = vmatpush.msra.mxu0 %v3017
    %3128 = vmatmul.f32.gmra.mxu0 %v3030
    %v3129 = vpop.f32.mrf.mxu0
    %v3130 = vadd.f32 0.0, %v3129
    %3131 = vdwg.mxu0
    %3132 = vmatpush.msra.mxu0 0.0
    %3133 = vmatpush.msra.mxu0 0.0
    %3134 = vmatpush.msra.mxu0 0.0
    %3135 = vmatpush.msra.mxu0 0.0
    %3136 = vmatpush.msra.mxu0 0.0
    %3137 = vmatpush.msra.mxu0 0.0
    %3138 = vmatpush.msra.mxu0 0.0
    %3139 = vmatpush.msra.mxu0 0.0
    %3140 = vmatpush.msra.mxu0 0.0
    %3141 = vmatpush.msra.mxu0 0.0
    %3142 = vmatpush.msra.mxu0 0.0
    %3143 = vmatpush.msra.mxu0 0.0
    %3144 = vmatpush.msra.mxu0 0.0
    %3145 = vmatpush.msra.mxu0 0.0
    %3146 = vmatpush.msra.mxu0 0.0
    %3147 = vmatpush.msra.mxu0 %v3018
    %3148 = vmatmul.f32.gmra.mxu0 %v3030
    %v3149 = vpop.f32.mrf.mxu0
    %v3150 = vadd.f32 0.0, %v3149
    %3151 = vdwg.mxu0
    %3152 = vmatpush.msra.mxu0 0.0
    %3153 = vmatpush.msra.mxu0 0.0
    %3154 = vmatpush.msra.mxu0 0.0
    %3155 = vmatpush.msra.mxu0 0.0
    %3156 = vmatpush.msra.mxu0 0.0
    %3157 = vmatpush.msra.mxu0 0.0
    %3158 = vmatpush.msra.mxu0 0.0
    %3159 = vmatpush.msra.mxu0 0.0
    %3160 = vmatpush.msra.mxu0 0.0
    %3161 = vmatpush.msra.mxu0 0.0
    %3162 = vmatpush.msra.mxu0 0.0
    %3163 = vmatpush.msra.mxu0 0.0
    %3164 = vmatpush.msra.mxu0 0.0
    %3165 = vmatpush.msra.mxu0 0.0
    %3166 = vmatpush.msra.mxu0 0.0
    %3167 = vmatpush.msra.mxu0 %v3019
    %3168 = vmatmul.f32.gmra.mxu0 %v3030
    %v3169 = vpop.f32.mrf.mxu0
    %v3170 = vadd.f32 0.0, %v3169
    %3171 = vdwg.mxu0
    %3172 = vmatpush.msra.mxu0 0.0
    %3173 = vmatpush.msra.mxu0 0.0
    %3174 = vmatpush.msra.mxu0 0.0
    %3175 = vmatpush.msra.mxu0 0.0
    %3176 = vmatpush.msra.mxu0 0.0
    %3177 = vmatpush.msra.mxu0 0.0
    %3178 = vmatpush.msra.mxu0 0.0
    %3179 = vmatpush.msra.mxu0 0.0
    %3180 = vmatpush.msra.mxu0 0.0
    %3181 = vmatpush.msra.mxu0 0.0
    %3182 = vmatpush.msra.mxu0 0.0
    %3183 = vmatpush.msra.mxu0 0.0
    %3184 = vmatpush.msra.mxu0 0.0
    %3185 = vmatpush.msra.mxu0 0.0
    %3186 = vmatpush.msra.mxu0 0.0
    %3187 = vmatpush.msra.mxu0 %v3020
    %3188 = vmatmul.f32.gmra.mxu0 %v3030
    %v3189 = vpop.f32.mrf.mxu0
    %v3190 = vadd.f32 0.0, %v3189
    %3191 = vdwg.mxu0
    %v3192 = vadd.f32 %v2984, %v3050
    %v3193 = vadd.f32 %v2985, %v3070
    %v3194 = vadd.f32 %v2986, %v3090
    %v3195 = vadd.f32 %v2987, %v3110
    %v3196 = vadd.f32 %v2988, %v3130
    %v3197 = vadd.f32 %v2989, %v3150
    %v3198 = vadd.f32 %v2990, %v3170
    %v3199 = vadd.f32 %v2991, %v3190
    %s3200 = scalar_lea.vmem %s3, 120
    %v3201 = vld [vmem:[%s3200] sm:$0xff]
    %3202 = vrot.lane.b32.xlu0 %v114, 48
    %v3203 = vpop.permute.xlu0 %3202
    %3204 = vrot.lane.b32.xlu0 %v115, 48
    %v3205 = vpop.permute.xlu0 %3204
    %3206 = vrot.lane.b32.xlu0 %v116, 48
    %v3207 = vpop.permute.xlu0 %3206
    %3208 = vrot.lane.b32.xlu0 %v117, 48
    %v3209 = vpop.permute.xlu0 %3208
    %3210 = vrot.lane.b32.xlu0 %v118, 48
    %v3211 = vpop.permute.xlu0 %3210
    %3212 = vrot.lane.b32.xlu0 %v119, 48
    %v3213 = vpop.permute.xlu0 %3212
    %3214 = vrot.lane.b32.xlu0 %v120, 48
    %v3215 = vpop.permute.xlu0 %3214
    %3216 = vrot.lane.b32.xlu0 %v121, 48
    %v3217 = vpop.permute.xlu0 %3216
    %3218 = vrot.lane.b32.xlu0 %v124, 48
    %v3219 = vpop.permute.xlu0 %3218
    %vm3220 = vcmask 392192
    %v3221 = vsel %vm3220, %v3203, %v3205
    %v3222 = vsel %vm3220, %v3205, %v3207
    %v3223 = vsel %vm3220, %v3207, %v3209
    %v3224 = vsel %vm3220, %v3209, %v3211
    %v3225 = vsel %vm3220, %v3211, %v3213
    %v3226 = vsel %vm3220, %v3213, %v3215
    %v3227 = vsel %vm3220, %v3215, %v3217
    %v3228 = vsel %vm3220, %v3217, %v3219
    %v3238 = vsel %vm169, %v3201, 0
    %3240 = vmatpush.msra.mxu0 0.0
    %3241 = vmatpush.msra.mxu0 0.0
    %3242 = vmatpush.msra.mxu0 0.0
    %3243 = vmatpush.msra.mxu0 0.0
    %3244 = vmatpush.msra.mxu0 0.0
    %3245 = vmatpush.msra.mxu0 0.0
    %3246 = vmatpush.msra.mxu0 0.0
    %3247 = vmatpush.msra.mxu0 0.0
    %3248 = vmatpush.msra.mxu0 0.0
    %3249 = vmatpush.msra.mxu0 0.0
    %3250 = vmatpush.msra.mxu0 0.0
    %3251 = vmatpush.msra.mxu0 0.0
    %3252 = vmatpush.msra.mxu0 0.0
    %3253 = vmatpush.msra.mxu0 0.0
    %3254 = vmatpush.msra.mxu0 0.0
    %3255 = vmatpush.msra.mxu0 %v3221
    %3256 = vmatmul.f32.gmra.mxu0 %v3238
    %v3257 = vpop.f32.mrf.mxu0
    %v3258 = vadd.f32 0.0, %v3257
    %3259 = vdwg.mxu0
    %3260 = vmatpush.msra.mxu0 0.0
    %3261 = vmatpush.msra.mxu0 0.0
    %3262 = vmatpush.msra.mxu0 0.0
    %3263 = vmatpush.msra.mxu0 0.0
    %3264 = vmatpush.msra.mxu0 0.0
    %3265 = vmatpush.msra.mxu0 0.0
    %3266 = vmatpush.msra.mxu0 0.0
    %3267 = vmatpush.msra.mxu0 0.0
    %3268 = vmatpush.msra.mxu0 0.0
    %3269 = vmatpush.msra.mxu0 0.0
    %3270 = vmatpush.msra.mxu0 0.0
    %3271 = vmatpush.msra.mxu0 0.0
    %3272 = vmatpush.msra.mxu0 0.0
    %3273 = vmatpush.msra.mxu0 0.0
    %3274 = vmatpush.msra.mxu0 0.0
    %3275 = vmatpush.msra.mxu0 %v3222
    %3276 = vmatmul.f32.gmra.mxu0 %v3238
    %v3277 = vpop.f32.mrf.mxu0
    %v3278 = vadd.f32 0.0, %v3277
    %3279 = vdwg.mxu0
    %3280 = vmatpush.msra.mxu0 0.0
    %3281 = vmatpush.msra.mxu0 0.0
    %3282 = vmatpush.msra.mxu0 0.0
    %3283 = vmatpush.msra.mxu0 0.0
    %3284 = vmatpush.msra.mxu0 0.0
    %3285 = vmatpush.msra.mxu0 0.0
    %3286 = vmatpush.msra.mxu0 0.0
    %3287 = vmatpush.msra.mxu0 0.0
    %3288 = vmatpush.msra.mxu0 0.0
    %3289 = vmatpush.msra.mxu0 0.0
    %3290 = vmatpush.msra.mxu0 0.0
    %3291 = vmatpush.msra.mxu0 0.0
    %3292 = vmatpush.msra.mxu0 0.0
    %3293 = vmatpush.msra.mxu0 0.0
    %3294 = vmatpush.msra.mxu0 0.0
    %3295 = vmatpush.msra.mxu0 %v3223
    %3296 = vmatmul.f32.gmra.mxu0 %v3238
    %v3297 = vpop.f32.mrf.mxu0
    %v3298 = vadd.f32 0.0, %v3297
    %3299 = vdwg.mxu0
    %3300 = vmatpush.msra.mxu0 0.0
    %3301 = vmatpush.msra.mxu0 0.0
    %3302 = vmatpush.msra.mxu0 0.0
    %3303 = vmatpush.msra.mxu0 0.0
    %3304 = vmatpush.msra.mxu0 0.0
    %3305 = vmatpush.msra.mxu0 0.0
    %3306 = vmatpush.msra.mxu0 0.0
    %3307 = vmatpush.msra.mxu0 0.0
    %3308 = vmatpush.msra.mxu0 0.0
    %3309 = vmatpush.msra.mxu0 0.0
    %3310 = vmatpush.msra.mxu0 0.0
    %3311 = vmatpush.msra.mxu0 0.0
    %3312 = vmatpush.msra.mxu0 0.0
    %3313 = vmatpush.msra.mxu0 0.0
    %3314 = vmatpush.msra.mxu0 0.0
    %3315 = vmatpush.msra.mxu0 %v3224
    %3316 = vmatmul.f32.gmra.mxu0 %v3238
    %v3317 = vpop.f32.mrf.mxu0
    %v3318 = vadd.f32 0.0, %v3317
    %3319 = vdwg.mxu0
    %3320 = vmatpush.msra.mxu0 0.0
    %3321 = vmatpush.msra.mxu0 0.0
    %3322 = vmatpush.msra.mxu0 0.0
    %3323 = vmatpush.msra.mxu0 0.0
    %3324 = vmatpush.msra.mxu0 0.0
    %3325 = vmatpush.msra.mxu0 0.0
    %3326 = vmatpush.msra.mxu0 0.0
    %3327 = vmatpush.msra.mxu0 0.0
    %3328 = vmatpush.msra.mxu0 0.0
    %3329 = vmatpush.msra.mxu0 0.0
    %3330 = vmatpush.msra.mxu0 0.0
    %3331 = vmatpush.msra.mxu0 0.0
    %3332 = vmatpush.msra.mxu0 0.0
    %3333 = vmatpush.msra.mxu0 0.0
    %3334 = vmatpush.msra.mxu0 0.0
    %3335 = vmatpush.msra.mxu0 %v3225
    %3336 = vmatmul.f32.gmra.mxu0 %v3238
    %v3337 = vpop.f32.mrf.mxu0
    %v3338 = vadd.f32 0.0, %v3337
    %3339 = vdwg.mxu0
    %3340 = vmatpush.msra.mxu0 0.0
    %3341 = vmatpush.msra.mxu0 0.0
    %3342 = vmatpush.msra.mxu0 0.0
    %3343 = vmatpush.msra.mxu0 0.0
    %3344 = vmatpush.msra.mxu0 0.0
    %3345 = vmatpush.msra.mxu0 0.0
    %3346 = vmatpush.msra.mxu0 0.0
    %3347 = vmatpush.msra.mxu0 0.0
    %3348 = vmatpush.msra.mxu0 0.0
    %3349 = vmatpush.msra.mxu0 0.0
    %3350 = vmatpush.msra.mxu0 0.0
    %3351 = vmatpush.msra.mxu0 0.0
    %3352 = vmatpush.msra.mxu0 0.0
    %3353 = vmatpush.msra.mxu0 0.0
    %3354 = vmatpush.msra.mxu0 0.0
    %3355 = vmatpush.msra.mxu0 %v3226
    %3356 = vmatmul.f32.gmra.mxu0 %v3238
    %v3357 = vpop.f32.mrf.mxu0
    %v3358 = vadd.f32 0.0, %v3357
    %3359 = vdwg.mxu0
    %3360 = vmatpush.msra.mxu0 0.0
    %3361 = vmatpush.msra.mxu0 0.0
    %3362 = vmatpush.msra.mxu0 0.0
    %3363 = vmatpush.msra.mxu0 0.0
    %3364 = vmatpush.msra.mxu0 0.0
    %3365 = vmatpush.msra.mxu0 0.0
    %3366 = vmatpush.msra.mxu0 0.0
    %3367 = vmatpush.msra.mxu0 0.0
    %3368 = vmatpush.msra.mxu0 0.0
    %3369 = vmatpush.msra.mxu0 0.0
    %3370 = vmatpush.msra.mxu0 0.0
    %3371 = vmatpush.msra.mxu0 0.0
    %3372 = vmatpush.msra.mxu0 0.0
    %3373 = vmatpush.msra.mxu0 0.0
    %3374 = vmatpush.msra.mxu0 0.0
    %3375 = vmatpush.msra.mxu0 %v3227
    %3376 = vmatmul.f32.gmra.mxu0 %v3238
    %v3377 = vpop.f32.mrf.mxu0
    %v3378 = vadd.f32 0.0, %v3377
    %3379 = vdwg.mxu0
    %3380 = vmatpush.msra.mxu0 0.0
    %3381 = vmatpush.msra.mxu0 0.0
    %3382 = vmatpush.msra.mxu0 0.0
    %3383 = vmatpush.msra.mxu0 0.0
    %3384 = vmatpush.msra.mxu0 0.0
    %3385 = vmatpush.msra.mxu0 0.0
    %3386 = vmatpush.msra.mxu0 0.0
    %3387 = vmatpush.msra.mxu0 0.0
    %3388 = vmatpush.msra.mxu0 0.0
    %3389 = vmatpush.msra.mxu0 0.0
    %3390 = vmatpush.msra.mxu0 0.0
    %3391 = vmatpush.msra.mxu0 0.0
    %3392 = vmatpush.msra.mxu0 0.0
    %3393 = vmatpush.msra.mxu0 0.0
    %3394 = vmatpush.msra.mxu0 0.0
    %3395 = vmatpush.msra.mxu0 %v3228
    %3396 = vmatmul.f32.gmra.mxu0 %v3238
    %v3397 = vpop.f32.mrf.mxu0
    %v3398 = vadd.f32 0.0, %v3397
    %3399 = vdwg.mxu0
    %v3400 = vadd.f32 %v3192, %v3258
    %v3401 = vadd.f32 %v3193, %v3278
    %v3402 = vadd.f32 %v3194, %v3298
    %v3403 = vadd.f32 %v3195, %v3318
    %v3404 = vadd.f32 %v3196, %v3338
    %v3405 = vadd.f32 %v3197, %v3358
    %v3406 = vadd.f32 %v3198, %v3378
    %v3407 = vadd.f32 %v3199, %v3398
    %s3408 = scalar_lea.vmem %s3, 128
    %v3409 = vld [vmem:[%s3408] sm:$0xff]
    %3410 = vrot.lane.b32.xlu0 %v114, 47
    %v3411 = vpop.permute.xlu0 %3410
    %3412 = vrot.lane.b32.xlu0 %v115, 47
    %v3413 = vpop.permute.xlu0 %3412
    %3414 = vrot.lane.b32.xlu0 %v116, 47
    %v3415 = vpop.permute.xlu0 %3414
    %3416 = vrot.lane.b32.xlu0 %v117, 47
    %v3417 = vpop.permute.xlu0 %3416
    %3418 = vrot.lane.b32.xlu0 %v118, 47
    %v3419 = vpop.permute.xlu0 %3418
    %3420 = vrot.lane.b32.xlu0 %v119, 47
    %v3421 = vpop.permute.xlu0 %3420
    %3422 = vrot.lane.b32.xlu0 %v120, 47
    %v3423 = vpop.permute.xlu0 %3422
    %3424 = vrot.lane.b32.xlu0 %v121, 47
    %v3425 = vpop.permute.xlu0 %3424
    %3426 = vrot.lane.b32.xlu0 %v124, 47
    %v3427 = vpop.permute.xlu0 %3426
    %vm3428 = vcmask 384000
    %v3429 = vsel %vm3428, %v3411, %v3413
    %v3430 = vsel %vm3428, %v3413, %v3415
    %v3431 = vsel %vm3428, %v3415, %v3417
    %v3432 = vsel %vm3428, %v3417, %v3419
    %v3433 = vsel %vm3428, %v3419, %v3421
    %v3434 = vsel %vm3428, %v3421, %v3423
    %v3435 = vsel %vm3428, %v3423, %v3425
    %v3436 = vsel %vm3428, %v3425, %v3427
    %v3446 = vsel %vm169, %v3409, 0
    %3448 = vmatpush.msra.mxu0 0.0
    %3449 = vmatpush.msra.mxu0 0.0
    %3450 = vmatpush.msra.mxu0 0.0
    %3451 = vmatpush.msra.mxu0 0.0
    %3452 = vmatpush.msra.mxu0 0.0
    %3453 = vmatpush.msra.mxu0 0.0
    %3454 = vmatpush.msra.mxu0 0.0
    %3455 = vmatpush.msra.mxu0 0.0
    %3456 = vmatpush.msra.mxu0 0.0
    %3457 = vmatpush.msra.mxu0 0.0
    %3458 = vmatpush.msra.mxu0 0.0
    %3459 = vmatpush.msra.mxu0 0.0
    %3460 = vmatpush.msra.mxu0 0.0
    %3461 = vmatpush.msra.mxu0 0.0
    %3462 = vmatpush.msra.mxu0 0.0
    %3463 = vmatpush.msra.mxu0 %v3429
    %3464 = vmatmul.f32.gmra.mxu0 %v3446
    %v3465 = vpop.f32.mrf.mxu0
    %v3466 = vadd.f32 0.0, %v3465
    %3467 = vdwg.mxu0
    %3468 = vmatpush.msra.mxu0 0.0
    %3469 = vmatpush.msra.mxu0 0.0
    %3470 = vmatpush.msra.mxu0 0.0
    %3471 = vmatpush.msra.mxu0 0.0
    %3472 = vmatpush.msra.mxu0 0.0
    %3473 = vmatpush.msra.mxu0 0.0
    %3474 = vmatpush.msra.mxu0 0.0
    %3475 = vmatpush.msra.mxu0 0.0
    %3476 = vmatpush.msra.mxu0 0.0
    %3477 = vmatpush.msra.mxu0 0.0
    %3478 = vmatpush.msra.mxu0 0.0
    %3479 = vmatpush.msra.mxu0 0.0
    %3480 = vmatpush.msra.mxu0 0.0
    %3481 = vmatpush.msra.mxu0 0.0
    %3482 = vmatpush.msra.mxu0 0.0
    %3483 = vmatpush.msra.mxu0 %v3430
    %3484 = vmatmul.f32.gmra.mxu0 %v3446
    %v3485 = vpop.f32.mrf.mxu0
    %v3486 = vadd.f32 0.0, %v3485
    %3487 = vdwg.mxu0
    %3488 = vmatpush.msra.mxu0 0.0
    %3489 = vmatpush.msra.mxu0 0.0
    %3490 = vmatpush.msra.mxu0 0.0
    %3491 = vmatpush.msra.mxu0 0.0
    %3492 = vmatpush.msra.mxu0 0.0
    %3493 = vmatpush.msra.mxu0 0.0
    %3494 = vmatpush.msra.mxu0 0.0
    %3495 = vmatpush.msra.mxu0 0.0
    %3496 = vmatpush.msra.mxu0 0.0
    %3497 = vmatpush.msra.mxu0 0.0
    %3498 = vmatpush.msra.mxu0 0.0
    %3499 = vmatpush.msra.mxu0 0.0
    %3500 = vmatpush.msra.mxu0 0.0
    %3501 = vmatpush.msra.mxu0 0.0
    %3502 = vmatpush.msra.mxu0 0.0
    %3503 = vmatpush.msra.mxu0 %v3431
    %3504 = vmatmul.f32.gmra.mxu0 %v3446
    %v3505 = vpop.f32.mrf.mxu0
    %v3506 = vadd.f32 0.0, %v3505
    %3507 = vdwg.mxu0
    %3508 = vmatpush.msra.mxu0 0.0
    %3509 = vmatpush.msra.mxu0 0.0
    %3510 = vmatpush.msra.mxu0 0.0
    %3511 = vmatpush.msra.mxu0 0.0
    %3512 = vmatpush.msra.mxu0 0.0
    %3513 = vmatpush.msra.mxu0 0.0
    %3514 = vmatpush.msra.mxu0 0.0
    %3515 = vmatpush.msra.mxu0 0.0
    %3516 = vmatpush.msra.mxu0 0.0
    %3517 = vmatpush.msra.mxu0 0.0
    %3518 = vmatpush.msra.mxu0 0.0
    %3519 = vmatpush.msra.mxu0 0.0
    %3520 = vmatpush.msra.mxu0 0.0
    %3521 = vmatpush.msra.mxu0 0.0
    %3522 = vmatpush.msra.mxu0 0.0
    %3523 = vmatpush.msra.mxu0 %v3432
    %3524 = vmatmul.f32.gmra.mxu0 %v3446
    %v3525 = vpop.f32.mrf.mxu0
    %v3526 = vadd.f32 0.0, %v3525
    %3527 = vdwg.mxu0
    %3528 = vmatpush.msra.mxu0 0.0
    %3529 = vmatpush.msra.mxu0 0.0
    %3530 = vmatpush.msra.mxu0 0.0
    %3531 = vmatpush.msra.mxu0 0.0
    %3532 = vmatpush.msra.mxu0 0.0
    %3533 = vmatpush.msra.mxu0 0.0
    %3534 = vmatpush.msra.mxu0 0.0
    %3535 = vmatpush.msra.mxu0 0.0
    %3536 = vmatpush.msra.mxu0 0.0
    %3537 = vmatpush.msra.mxu0 0.0
    %3538 = vmatpush.msra.mxu0 0.0
    %3539 = vmatpush.msra.mxu0 0.0
    %3540 = vmatpush.msra.mxu0 0.0
    %3541 = vmatpush.msra.mxu0 0.0
    %3542 = vmatpush.msra.mxu0 0.0
    %3543 = vmatpush.msra.mxu0 %v3433
    %3544 = vmatmul.f32.gmra.mxu0 %v3446
    %v3545 = vpop.f32.mrf.mxu0
    %v3546 = vadd.f32 0.0, %v3545
    %3547 = vdwg.mxu0
    %3548 = vmatpush.msra.mxu0 0.0
    %3549 = vmatpush.msra.mxu0 0.0
    %3550 = vmatpush.msra.mxu0 0.0
    %3551 = vmatpush.msra.mxu0 0.0
    %3552 = vmatpush.msra.mxu0 0.0
    %3553 = vmatpush.msra.mxu0 0.0
    %3554 = vmatpush.msra.mxu0 0.0
    %3555 = vmatpush.msra.mxu0 0.0
    %3556 = vmatpush.msra.mxu0 0.0
    %3557 = vmatpush.msra.mxu0 0.0
    %3558 = vmatpush.msra.mxu0 0.0
    %3559 = vmatpush.msra.mxu0 0.0
    %3560 = vmatpush.msra.mxu0 0.0
    %3561 = vmatpush.msra.mxu0 0.0
    %3562 = vmatpush.msra.mxu0 0.0
    %3563 = vmatpush.msra.mxu0 %v3434
    %3564 = vmatmul.f32.gmra.mxu0 %v3446
    %v3565 = vpop.f32.mrf.mxu0
    %v3566 = vadd.f32 0.0, %v3565
    %3567 = vdwg.mxu0
    %3568 = vmatpush.msra.mxu0 0.0
    %3569 = vmatpush.msra.mxu0 0.0
    %3570 = vmatpush.msra.mxu0 0.0
    %3571 = vmatpush.msra.mxu0 0.0
    %3572 = vmatpush.msra.mxu0 0.0
    %3573 = vmatpush.msra.mxu0 0.0
    %3574 = vmatpush.msra.mxu0 0.0
    %3575 = vmatpush.msra.mxu0 0.0
    %3576 = vmatpush.msra.mxu0 0.0
    %3577 = vmatpush.msra.mxu0 0.0
    %3578 = vmatpush.msra.mxu0 0.0
    %3579 = vmatpush.msra.mxu0 0.0
    %3580 = vmatpush.msra.mxu0 0.0
    %3581 = vmatpush.msra.mxu0 0.0
    %3582 = vmatpush.msra.mxu0 0.0
    %3583 = vmatpush.msra.mxu0 %v3435
    %3584 = vmatmul.f32.gmra.mxu0 %v3446
    %v3585 = vpop.f32.mrf.mxu0
    %v3586 = vadd.f32 0.0, %v3585
    %3587 = vdwg.mxu0
    %3588 = vmatpush.msra.mxu0 0.0
    %3589 = vmatpush.msra.mxu0 0.0
    %3590 = vmatpush.msra.mxu0 0.0
    %3591 = vmatpush.msra.mxu0 0.0
    %3592 = vmatpush.msra.mxu0 0.0
    %3593 = vmatpush.msra.mxu0 0.0
    %3594 = vmatpush.msra.mxu0 0.0
    %3595 = vmatpush.msra.mxu0 0.0
    %3596 = vmatpush.msra.mxu0 0.0
    %3597 = vmatpush.msra.mxu0 0.0
    %3598 = vmatpush.msra.mxu0 0.0
    %3599 = vmatpush.msra.mxu0 0.0
    %3600 = vmatpush.msra.mxu0 0.0
    %3601 = vmatpush.msra.mxu0 0.0
    %3602 = vmatpush.msra.mxu0 0.0
    %3603 = vmatpush.msra.mxu0 %v3436
    %3604 = vmatmul.f32.gmra.mxu0 %v3446
    %v3605 = vpop.f32.mrf.mxu0
    %v3606 = vadd.f32 0.0, %v3605
    %3607 = vdwg.mxu0
    %v3608 = vadd.f32 %v3400, %v3466
    %v3609 = vadd.f32 %v3401, %v3486
    %v3610 = vadd.f32 %v3402, %v3506
    %v3611 = vadd.f32 %v3403, %v3526
    %v3612 = vadd.f32 %v3404, %v3546
    %v3613 = vadd.f32 %v3405, %v3566
    %v3614 = vadd.f32 %v3406, %v3586
    %v3615 = vadd.f32 %v3407, %v3606
    %s3616 = scalar_lea.vmem %s3, 136
    %v3617 = vld [vmem:[%s3616] sm:$0xff]
    %3618 = vrot.lane.b32.xlu0 %v114, 46
    %v3619 = vpop.permute.xlu0 %3618
    %3620 = vrot.lane.b32.xlu0 %v115, 46
    %v3621 = vpop.permute.xlu0 %3620
    %3622 = vrot.lane.b32.xlu0 %v116, 46
    %v3623 = vpop.permute.xlu0 %3622
    %3624 = vrot.lane.b32.xlu0 %v117, 46
    %v3625 = vpop.permute.xlu0 %3624
    %3626 = vrot.lane.b32.xlu0 %v118, 46
    %v3627 = vpop.permute.xlu0 %3626
    %3628 = vrot.lane.b32.xlu0 %v119, 46
    %v3629 = vpop.permute.xlu0 %3628
    %3630 = vrot.lane.b32.xlu0 %v120, 46
    %v3631 = vpop.permute.xlu0 %3630
    %3632 = vrot.lane.b32.xlu0 %v121, 46
    %v3633 = vpop.permute.xlu0 %3632
    %3634 = vrot.lane.b32.xlu0 %v124, 46
    %v3635 = vpop.permute.xlu0 %3634
    %vm3636 = vcmask 375808
    %v3637 = vsel %vm3636, %v3619, %v3621
    %v3638 = vsel %vm3636, %v3621, %v3623
    %v3639 = vsel %vm3636, %v3623, %v3625
    %v3640 = vsel %vm3636, %v3625, %v3627
    %v3641 = vsel %vm3636, %v3627, %v3629
    %v3642 = vsel %vm3636, %v3629, %v3631
    %v3643 = vsel %vm3636, %v3631, %v3633
    %v3644 = vsel %vm3636, %v3633, %v3635
    %v3654 = vsel %vm169, %v3617, 0
    %3656 = vmatpush.msra.mxu0 0.0
    %3657 = vmatpush.msra.mxu0 0.0
    %3658 = vmatpush.msra.mxu0 0.0
    %3659 = vmatpush.msra.mxu0 0.0
    %3660 = vmatpush.msra.mxu0 0.0
    %3661 = vmatpush.msra.mxu0 0.0
    %3662 = vmatpush.msra.mxu0 0.0
    %3663 = vmatpush.msra.mxu0 0.0
    %3664 = vmatpush.msra.mxu0 0.0
    %3665 = vmatpush.msra.mxu0 0.0
    %3666 = vmatpush.msra.mxu0 0.0
    %3667 = vmatpush.msra.mxu0 0.0
    %3668 = vmatpush.msra.mxu0 0.0
    %3669 = vmatpush.msra.mxu0 0.0
    %3670 = vmatpush.msra.mxu0 0.0
    %3671 = vmatpush.msra.mxu0 %v3637
    %3672 = vmatmul.f32.gmra.mxu0 %v3654
    %v3673 = vpop.f32.mrf.mxu0
    %v3674 = vadd.f32 0.0, %v3673
    %3675 = vdwg.mxu0
    %3676 = vmatpush.msra.mxu0 0.0
    %3677 = vmatpush.msra.mxu0 0.0
    %3678 = vmatpush.msra.mxu0 0.0
    %3679 = vmatpush.msra.mxu0 0.0
    %3680 = vmatpush.msra.mxu0 0.0
    %3681 = vmatpush.msra.mxu0 0.0
    %3682 = vmatpush.msra.mxu0 0.0
    %3683 = vmatpush.msra.mxu0 0.0
    %3684 = vmatpush.msra.mxu0 0.0
    %3685 = vmatpush.msra.mxu0 0.0
    %3686 = vmatpush.msra.mxu0 0.0
    %3687 = vmatpush.msra.mxu0 0.0
    %3688 = vmatpush.msra.mxu0 0.0
    %3689 = vmatpush.msra.mxu0 0.0
    %3690 = vmatpush.msra.mxu0 0.0
    %3691 = vmatpush.msra.mxu0 %v3638
    %3692 = vmatmul.f32.gmra.mxu0 %v3654
    %v3693 = vpop.f32.mrf.mxu0
    %v3694 = vadd.f32 0.0, %v3693
    %3695 = vdwg.mxu0
    %3696 = vmatpush.msra.mxu0 0.0
    %3697 = vmatpush.msra.mxu0 0.0
    %3698 = vmatpush.msra.mxu0 0.0
    %3699 = vmatpush.msra.mxu0 0.0
    %3700 = vmatpush.msra.mxu0 0.0
    %3701 = vmatpush.msra.mxu0 0.0
    %3702 = vmatpush.msra.mxu0 0.0
    %3703 = vmatpush.msra.mxu0 0.0
    %3704 = vmatpush.msra.mxu0 0.0
    %3705 = vmatpush.msra.mxu0 0.0
    %3706 = vmatpush.msra.mxu0 0.0
    %3707 = vmatpush.msra.mxu0 0.0
    %3708 = vmatpush.msra.mxu0 0.0
    %3709 = vmatpush.msra.mxu0 0.0
    %3710 = vmatpush.msra.mxu0 0.0
    %3711 = vmatpush.msra.mxu0 %v3639
    %3712 = vmatmul.f32.gmra.mxu0 %v3654
    %v3713 = vpop.f32.mrf.mxu0
    %v3714 = vadd.f32 0.0, %v3713
    %3715 = vdwg.mxu0
    %3716 = vmatpush.msra.mxu0 0.0
    %3717 = vmatpush.msra.mxu0 0.0
    %3718 = vmatpush.msra.mxu0 0.0
    %3719 = vmatpush.msra.mxu0 0.0
    %3720 = vmatpush.msra.mxu0 0.0
    %3721 = vmatpush.msra.mxu0 0.0
    %3722 = vmatpush.msra.mxu0 0.0
    %3723 = vmatpush.msra.mxu0 0.0
    %3724 = vmatpush.msra.mxu0 0.0
    %3725 = vmatpush.msra.mxu0 0.0
    %3726 = vmatpush.msra.mxu0 0.0
    %3727 = vmatpush.msra.mxu0 0.0
    %3728 = vmatpush.msra.mxu0 0.0
    %3729 = vmatpush.msra.mxu0 0.0
    %3730 = vmatpush.msra.mxu0 0.0
    %3731 = vmatpush.msra.mxu0 %v3640
    %3732 = vmatmul.f32.gmra.mxu0 %v3654
    %v3733 = vpop.f32.mrf.mxu0
    %v3734 = vadd.f32 0.0, %v3733
    %3735 = vdwg.mxu0
    %3736 = vmatpush.msra.mxu0 0.0
    %3737 = vmatpush.msra.mxu0 0.0
    %3738 = vmatpush.msra.mxu0 0.0
    %3739 = vmatpush.msra.mxu0 0.0
    %3740 = vmatpush.msra.mxu0 0.0
    %3741 = vmatpush.msra.mxu0 0.0
    %3742 = vmatpush.msra.mxu0 0.0
    %3743 = vmatpush.msra.mxu0 0.0
    %3744 = vmatpush.msra.mxu0 0.0
    %3745 = vmatpush.msra.mxu0 0.0
    %3746 = vmatpush.msra.mxu0 0.0
    %3747 = vmatpush.msra.mxu0 0.0
    %3748 = vmatpush.msra.mxu0 0.0
    %3749 = vmatpush.msra.mxu0 0.0
    %3750 = vmatpush.msra.mxu0 0.0
    %3751 = vmatpush.msra.mxu0 %v3641
    %3752 = vmatmul.f32.gmra.mxu0 %v3654
    %v3753 = vpop.f32.mrf.mxu0
    %v3754 = vadd.f32 0.0, %v3753
    %3755 = vdwg.mxu0
    %3756 = vmatpush.msra.mxu0 0.0
    %3757 = vmatpush.msra.mxu0 0.0
    %3758 = vmatpush.msra.mxu0 0.0
    %3759 = vmatpush.msra.mxu0 0.0
    %3760 = vmatpush.msra.mxu0 0.0
    %3761 = vmatpush.msra.mxu0 0.0
    %3762 = vmatpush.msra.mxu0 0.0
    %3763 = vmatpush.msra.mxu0 0.0
    %3764 = vmatpush.msra.mxu0 0.0
    %3765 = vmatpush.msra.mxu0 0.0
    %3766 = vmatpush.msra.mxu0 0.0
    %3767 = vmatpush.msra.mxu0 0.0
    %3768 = vmatpush.msra.mxu0 0.0
    %3769 = vmatpush.msra.mxu0 0.0
    %3770 = vmatpush.msra.mxu0 0.0
    %3771 = vmatpush.msra.mxu0 %v3642
    %3772 = vmatmul.f32.gmra.mxu0 %v3654
    %v3773 = vpop.f32.mrf.mxu0
    %v3774 = vadd.f32 0.0, %v3773
    %3775 = vdwg.mxu0
    %3776 = vmatpush.msra.mxu0 0.0
    %3777 = vmatpush.msra.mxu0 0.0
    %3778 = vmatpush.msra.mxu0 0.0
    %3779 = vmatpush.msra.mxu0 0.0
    %3780 = vmatpush.msra.mxu0 0.0
    %3781 = vmatpush.msra.mxu0 0.0
    %3782 = vmatpush.msra.mxu0 0.0
    %3783 = vmatpush.msra.mxu0 0.0
    %3784 = vmatpush.msra.mxu0 0.0
    %3785 = vmatpush.msra.mxu0 0.0
    %3786 = vmatpush.msra.mxu0 0.0
    %3787 = vmatpush.msra.mxu0 0.0
    %3788 = vmatpush.msra.mxu0 0.0
    %3789 = vmatpush.msra.mxu0 0.0
    %3790 = vmatpush.msra.mxu0 0.0
    %3791 = vmatpush.msra.mxu0 %v3643
    %3792 = vmatmul.f32.gmra.mxu0 %v3654
    %v3793 = vpop.f32.mrf.mxu0
    %v3794 = vadd.f32 0.0, %v3793
    %3795 = vdwg.mxu0
    %3796 = vmatpush.msra.mxu0 0.0
    %3797 = vmatpush.msra.mxu0 0.0
    %3798 = vmatpush.msra.mxu0 0.0
    %3799 = vmatpush.msra.mxu0 0.0
    %3800 = vmatpush.msra.mxu0 0.0
    %3801 = vmatpush.msra.mxu0 0.0
    %3802 = vmatpush.msra.mxu0 0.0
    %3803 = vmatpush.msra.mxu0 0.0
    %3804 = vmatpush.msra.mxu0 0.0
    %3805 = vmatpush.msra.mxu0 0.0
    %3806 = vmatpush.msra.mxu0 0.0
    %3807 = vmatpush.msra.mxu0 0.0
    %3808 = vmatpush.msra.mxu0 0.0
    %3809 = vmatpush.msra.mxu0 0.0
    %3810 = vmatpush.msra.mxu0 0.0
    %3811 = vmatpush.msra.mxu0 %v3644
    %3812 = vmatmul.f32.gmra.mxu0 %v3654
    %v3813 = vpop.f32.mrf.mxu0
    %v3814 = vadd.f32 0.0, %v3813
    %3815 = vdwg.mxu0
    %v3816 = vadd.f32 %v3608, %v3674
    %v3817 = vadd.f32 %v3609, %v3694
    %v3818 = vadd.f32 %v3610, %v3714
    %v3819 = vadd.f32 %v3611, %v3734
    %v3820 = vadd.f32 %v3612, %v3754
    %v3821 = vadd.f32 %v3613, %v3774
    %v3822 = vadd.f32 %v3614, %v3794
    %v3823 = vadd.f32 %v3615, %v3814
    %s3824 = scalar_lea.vmem %s3, 144
    %v3825 = vld [vmem:[%s3824] sm:$0xff]
    %v3827 = vsel %vm169, %v3825, 0
    %3829 = vmatpush.msra.mxu0 0.0
    %3830 = vmatpush.msra.mxu0 0.0
    %3831 = vmatpush.msra.mxu0 0.0
    %3832 = vmatpush.msra.mxu0 0.0
    %3833 = vmatpush.msra.mxu0 0.0
    %3834 = vmatpush.msra.mxu0 0.0
    %3835 = vmatpush.msra.mxu0 0.0
    %3836 = vmatpush.msra.mxu0 0.0
    %3837 = vmatpush.msra.mxu0 0.0
    %3838 = vmatpush.msra.mxu0 0.0
    %3839 = vmatpush.msra.mxu0 0.0
    %3840 = vmatpush.msra.mxu0 0.0
    %3841 = vmatpush.msra.mxu0 0.0
    %3842 = vmatpush.msra.mxu0 0.0
    %3843 = vmatpush.msra.mxu0 0.0
    %3844 = vmatpush.msra.mxu0 %v115
    %3845 = vmatmul.f32.gmra.mxu0 %v3827
    %v3846 = vpop.f32.mrf.mxu0
    %v3847 = vadd.f32 0.0, %v3846
    %3848 = vdwg.mxu0
    %3849 = vmatpush.msra.mxu0 0.0
    %3850 = vmatpush.msra.mxu0 0.0
    %3851 = vmatpush.msra.mxu0 0.0
    %3852 = vmatpush.msra.mxu0 0.0
    %3853 = vmatpush.msra.mxu0 0.0
    %3854 = vmatpush.msra.mxu0 0.0
    %3855 = vmatpush.msra.mxu0 0.0
    %3856 = vmatpush.msra.mxu0 0.0
    %3857 = vmatpush.msra.mxu0 0.0
    %3858 = vmatpush.msra.mxu0 0.0
    %3859 = vmatpush.msra.mxu0 0.0
    %3860 = vmatpush.msra.mxu0 0.0
    %3861 = vmatpush.msra.mxu0 0.0
    %3862 = vmatpush.msra.mxu0 0.0
    %3863 = vmatpush.msra.mxu0 0.0
    %3864 = vmatpush.msra.mxu0 %v116
    %3865 = vmatmul.f32.gmra.mxu0 %v3827
    %v3866 = vpop.f32.mrf.mxu0
    %v3867 = vadd.f32 0.0, %v3866
    %3868 = vdwg.mxu0
    %3869 = vmatpush.msra.mxu0 0.0
    %3870 = vmatpush.msra.mxu0 0.0
    %3871 = vmatpush.msra.mxu0 0.0
    %3872 = vmatpush.msra.mxu0 0.0
    %3873 = vmatpush.msra.mxu0 0.0
    %3874 = vmatpush.msra.mxu0 0.0
    %3875 = vmatpush.msra.mxu0 0.0
    %3876 = vmatpush.msra.mxu0 0.0
    %3877 = vmatpush.msra.mxu0 0.0
    %3878 = vmatpush.msra.mxu0 0.0
    %3879 = vmatpush.msra.mxu0 0.0
    %3880 = vmatpush.msra.mxu0 0.0
    %3881 = vmatpush.msra.mxu0 0.0
    %3882 = vmatpush.msra.mxu0 0.0
    %3883 = vmatpush.msra.mxu0 0.0
    %3884 = vmatpush.msra.mxu0 %v117
    %3885 = vmatmul.f32.gmra.mxu0 %v3827
    %v3886 = vpop.f32.mrf.mxu0
    %v3887 = vadd.f32 0.0, %v3886
    %3888 = vdwg.mxu0
    %3889 = vmatpush.msra.mxu0 0.0
    %3890 = vmatpush.msra.mxu0 0.0
    %3891 = vmatpush.msra.mxu0 0.0
    %3892 = vmatpush.msra.mxu0 0.0
    %3893 = vmatpush.msra.mxu0 0.0
    %3894 = vmatpush.msra.mxu0 0.0
    %3895 = vmatpush.msra.mxu0 0.0
    %3896 = vmatpush.msra.mxu0 0.0
    %3897 = vmatpush.msra.mxu0 0.0
    %3898 = vmatpush.msra.mxu0 0.0
    %3899 = vmatpush.msra.mxu0 0.0
    %3900 = vmatpush.msra.mxu0 0.0
    %3901 = vmatpush.msra.mxu0 0.0
    %3902 = vmatpush.msra.mxu0 0.0
    %3903 = vmatpush.msra.mxu0 0.0
    %3904 = vmatpush.msra.mxu0 %v118
    %3905 = vmatmul.f32.gmra.mxu0 %v3827
    %v3906 = vpop.f32.mrf.mxu0
    %v3907 = vadd.f32 0.0, %v3906
    %3908 = vdwg.mxu0
    %3909 = vmatpush.msra.mxu0 0.0
    %3910 = vmatpush.msra.mxu0 0.0
    %3911 = vmatpush.msra.mxu0 0.0
    %3912 = vmatpush.msra.mxu0 0.0
    %3913 = vmatpush.msra.mxu0 0.0
    %3914 = vmatpush.msra.mxu0 0.0
    %3915 = vmatpush.msra.mxu0 0.0
    %3916 = vmatpush.msra.mxu0 0.0
    %3917 = vmatpush.msra.mxu0 0.0
    %3918 = vmatpush.msra.mxu0 0.0
    %3919 = vmatpush.msra.mxu0 0.0
    %3920 = vmatpush.msra.mxu0 0.0
    %3921 = vmatpush.msra.mxu0 0.0
    %3922 = vmatpush.msra.mxu0 0.0
    %3923 = vmatpush.msra.mxu0 0.0
    %3924 = vmatpush.msra.mxu0 %v119
    %3925 = vmatmul.f32.gmra.mxu0 %v3827
    %v3926 = vpop.f32.mrf.mxu0
    %v3927 = vadd.f32 0.0, %v3926
    %3928 = vdwg.mxu0
    %3929 = vmatpush.msra.mxu0 0.0
    %3930 = vmatpush.msra.mxu0 0.0
    %3931 = vmatpush.msra.mxu0 0.0
    %3932 = vmatpush.msra.mxu0 0.0
    %3933 = vmatpush.msra.mxu0 0.0
    %3934 = vmatpush.msra.mxu0 0.0
    %3935 = vmatpush.msra.mxu0 0.0
    %3936 = vmatpush.msra.mxu0 0.0
    %3937 = vmatpush.msra.mxu0 0.0
    %3938 = vmatpush.msra.mxu0 0.0
    %3939 = vmatpush.msra.mxu0 0.0
    %3940 = vmatpush.msra.mxu0 0.0
    %3941 = vmatpush.msra.mxu0 0.0
    %3942 = vmatpush.msra.mxu0 0.0
    %3943 = vmatpush.msra.mxu0 0.0
    %3944 = vmatpush.msra.mxu0 %v120
    %3945 = vmatmul.f32.gmra.mxu0 %v3827
    %v3946 = vpop.f32.mrf.mxu0
    %v3947 = vadd.f32 0.0, %v3946
    %3948 = vdwg.mxu0
    %3949 = vmatpush.msra.mxu0 0.0
    %3950 = vmatpush.msra.mxu0 0.0
    %3951 = vmatpush.msra.mxu0 0.0
    %3952 = vmatpush.msra.mxu0 0.0
    %3953 = vmatpush.msra.mxu0 0.0
    %3954 = vmatpush.msra.mxu0 0.0
    %3955 = vmatpush.msra.mxu0 0.0
    %3956 = vmatpush.msra.mxu0 0.0
    %3957 = vmatpush.msra.mxu0 0.0
    %3958 = vmatpush.msra.mxu0 0.0
    %3959 = vmatpush.msra.mxu0 0.0
    %3960 = vmatpush.msra.mxu0 0.0
    %3961 = vmatpush.msra.mxu0 0.0
    %3962 = vmatpush.msra.mxu0 0.0
    %3963 = vmatpush.msra.mxu0 0.0
    %3964 = vmatpush.msra.mxu0 %v121
    %3965 = vmatmul.f32.gmra.mxu0 %v3827
    %v3966 = vpop.f32.mrf.mxu0
    %v3967 = vadd.f32 0.0, %v3966
    %3968 = vdwg.mxu0
    %3969 = vmatpush.msra.mxu0 0.0
    %3970 = vmatpush.msra.mxu0 0.0
    %3971 = vmatpush.msra.mxu0 0.0
    %3972 = vmatpush.msra.mxu0 0.0
    %3973 = vmatpush.msra.mxu0 0.0
    %3974 = vmatpush.msra.mxu0 0.0
    %3975 = vmatpush.msra.mxu0 0.0
    %3976 = vmatpush.msra.mxu0 0.0
    %3977 = vmatpush.msra.mxu0 0.0
    %3978 = vmatpush.msra.mxu0 0.0
    %3979 = vmatpush.msra.mxu0 0.0
    %3980 = vmatpush.msra.mxu0 0.0
    %3981 = vmatpush.msra.mxu0 0.0
    %3982 = vmatpush.msra.mxu0 0.0
    %3983 = vmatpush.msra.mxu0 0.0
    %3984 = vmatpush.msra.mxu0 %v124
    %3985 = vmatmul.f32.gmra.mxu0 %v3827
    %v3986 = vpop.f32.mrf.mxu0
    %v3987 = vadd.f32 0.0, %v3986
    %3988 = vdwg.mxu0
    %v3989 = vadd.f32 %v3816, %v3847
    %v3990 = vadd.f32 %v3817, %v3867
    %v3991 = vadd.f32 %v3818, %v3887
    %v3992 = vadd.f32 %v3819, %v3907
    %v3993 = vadd.f32 %v3820, %v3927
    %v3994 = vadd.f32 %v3821, %v3947
    %v3995 = vadd.f32 %v3822, %v3967
    %v3996 = vadd.f32 %v3823, %v3987
    %s3997 = scalar_lea.vmem %s3, 152
    %v3998 = vld [vmem:[%s3997] sm:$0xff]
    %v3999 = vld [vmem:[#allocation2 + $0x8] sm:$0xff]
    %v4000 = vld [vmem:[#allocation2 + $0x10] sm:$0xff]
    %v4001 = vld [vmem:[#allocation2 + $0x18] sm:$0xff]
    %v4002 = vld [vmem:[#allocation2 + $0x20] sm:$0xff]
    %v4003 = vld [vmem:[#allocation2 + $0x28] sm:$0xff]
    %v4004 = vld [vmem:[#allocation2 + $0x30] sm:$0xff]
    %v4005 = vld [vmem:[#allocation2 + $0x38] sm:$0xff]
    %v4006 = vld [vmem:[#allocation2 + $0x40] sm:$0xff]
    %v4007 = vld [vmem:[#allocation2 + $0x48] sm:$0xff]
    %4017 = vrot.lane.b32.xlu0 %v3999, 127
    %v4018 = vpop.permute.xlu0 %4017
    %4019 = vrot.lane.b32.xlu0 %v4000, 127
    %v4020 = vpop.permute.xlu0 %4019
    %4021 = vrot.lane.b32.xlu0 %v4001, 127
    %v4022 = vpop.permute.xlu0 %4021
    %4023 = vrot.lane.b32.xlu0 %v4002, 127
    %v4024 = vpop.permute.xlu0 %4023
    %4025 = vrot.lane.b32.xlu0 %v4003, 127
    %v4026 = vpop.permute.xlu0 %4025
    %4027 = vrot.lane.b32.xlu0 %v4004, 127
    %v4028 = vpop.permute.xlu0 %4027
    %4029 = vrot.lane.b32.xlu0 %v4005, 127
    %v4030 = vpop.permute.xlu0 %4029
    %4031 = vrot.lane.b32.xlu0 %v4006, 127
    %v4032 = vpop.permute.xlu0 %4031
    %4033 = vrot.lane.b32.xlu0 %v4007, 127
    %v4034 = vpop.permute.xlu0 %4033
    %v4035 = vsel %vm152, %v4018, %v4020
    %v4036 = vsel %vm152, %v4020, %v4022
    %v4037 = vsel %vm152, %v4022, %v4024
    %v4038 = vsel %vm152, %v4024, %v4026
    %v4039 = vsel %vm152, %v4026, %v4028
    %v4040 = vsel %vm152, %v4028, %v4030
    %v4041 = vsel %vm152, %v4030, %v4032
    %v4042 = vsel %vm152, %v4032, %v4034
    %v4052 = vsel %vm169, %v3998, 0
    %4054 = vmatpush.msra.mxu0 0.0
    %4055 = vmatpush.msra.mxu0 0.0
    %4056 = vmatpush.msra.mxu0 0.0
    %4057 = vmatpush.msra.mxu0 0.0
    %4058 = vmatpush.msra.mxu0 0.0
    %4059 = vmatpush.msra.mxu0 0.0
    %4060 = vmatpush.msra.mxu0 0.0
    %4061 = vmatpush.msra.mxu0 0.0
    %4062 = vmatpush.msra.mxu0 0.0
    %4063 = vmatpush.msra.mxu0 0.0
    %4064 = vmatpush.msra.mxu0 0.0
    %4065 = vmatpush.msra.mxu0 0.0
    %4066 = vmatpush.msra.mxu0 0.0
    %4067 = vmatpush.msra.mxu0 0.0
    %4068 = vmatpush.msra.mxu0 0.0
    %4069 = vmatpush.msra.mxu0 %v4035
    %4070 = vmatmul.f32.gmra.mxu0 %v4052
    %v4071 = vpop.f32.mrf.mxu0
    %v4072 = vadd.f32 0.0, %v4071
    %4073 = vdwg.mxu0
    %4074 = vmatpush.msra.mxu0 0.0
    %4075 = vmatpush.msra.mxu0 0.0
    %4076 = vmatpush.msra.mxu0 0.0
    %4077 = vmatpush.msra.mxu0 0.0
    %4078 = vmatpush.msra.mxu0 0.0
    %4079 = vmatpush.msra.mxu0 0.0
    %4080 = vmatpush.msra.mxu0 0.0
    %4081 = vmatpush.msra.mxu0 0.0
    %4082 = vmatpush.msra.mxu0 0.0
    %4083 = vmatpush.msra.mxu0 0.0
    %4084 = vmatpush.msra.mxu0 0.0
    %4085 = vmatpush.msra.mxu0 0.0
    %4086 = vmatpush.msra.mxu0 0.0
    %4087 = vmatpush.msra.mxu0 0.0
    %4088 = vmatpush.msra.mxu0 0.0
    %4089 = vmatpush.msra.mxu0 %v4036
    %4090 = vmatmul.f32.gmra.mxu0 %v4052
    %v4091 = vpop.f32.mrf.mxu0
    %v4092 = vadd.f32 0.0, %v4091
    %4093 = vdwg.mxu0
    %4094 = vmatpush.msra.mxu0 0.0
    %4095 = vmatpush.msra.mxu0 0.0
    %4096 = vmatpush.msra.mxu0 0.0
    %4097 = vmatpush.msra.mxu0 0.0
    %4098 = vmatpush.msra.mxu0 0.0
    %4099 = vmatpush.msra.mxu0 0.0
    %4100 = vmatpush.msra.mxu0 0.0
    %4101 = vmatpush.msra.mxu0 0.0
    %4102 = vmatpush.msra.mxu0 0.0
    %4103 = vmatpush.msra.mxu0 0.0
    %4104 = vmatpush.msra.mxu0 0.0
    %4105 = vmatpush.msra.mxu0 0.0
    %4106 = vmatpush.msra.mxu0 0.0
    %4107 = vmatpush.msra.mxu0 0.0
    %4108 = vmatpush.msra.mxu0 0.0
    %4109 = vmatpush.msra.mxu0 %v4037
    %4110 = vmatmul.f32.gmra.mxu0 %v4052
    %v4111 = vpop.f32.mrf.mxu0
    %v4112 = vadd.f32 0.0, %v4111
    %4113 = vdwg.mxu0
    %4114 = vmatpush.msra.mxu0 0.0
    %4115 = vmatpush.msra.mxu0 0.0
    %4116 = vmatpush.msra.mxu0 0.0
    %4117 = vmatpush.msra.mxu0 0.0
    %4118 = vmatpush.msra.mxu0 0.0
    %4119 = vmatpush.msra.mxu0 0.0
    %4120 = vmatpush.msra.mxu0 0.0
    %4121 = vmatpush.msra.mxu0 0.0
    %4122 = vmatpush.msra.mxu0 0.0
    %4123 = vmatpush.msra.mxu0 0.0
    %4124 = vmatpush.msra.mxu0 0.0
    %4125 = vmatpush.msra.mxu0 0.0
    %4126 = vmatpush.msra.mxu0 0.0
    %4127 = vmatpush.msra.mxu0 0.0
    %4128 = vmatpush.msra.mxu0 0.0
    %4129 = vmatpush.msra.mxu0 %v4038
    %4130 = vmatmul.f32.gmra.mxu0 %v4052
    %v4131 = vpop.f32.mrf.mxu0
    %v4132 = vadd.f32 0.0, %v4131
    %4133 = vdwg.mxu0
    %4134 = vmatpush.msra.mxu0 0.0
    %4135 = vmatpush.msra.mxu0 0.0
    %4136 = vmatpush.msra.mxu0 0.0
    %4137 = vmatpush.msra.mxu0 0.0
    %4138 = vmatpush.msra.mxu0 0.0
    %4139 = vmatpush.msra.mxu0 0.0
    %4140 = vmatpush.msra.mxu0 0.0
    %4141 = vmatpush.msra.mxu0 0.0
    %4142 = vmatpush.msra.mxu0 0.0
    %4143 = vmatpush.msra.mxu0 0.0
    %4144 = vmatpush.msra.mxu0 0.0
    %4145 = vmatpush.msra.mxu0 0.0
    %4146 = vmatpush.msra.mxu0 0.0
    %4147 = vmatpush.msra.mxu0 0.0
    %4148 = vmatpush.msra.mxu0 0.0
    %4149 = vmatpush.msra.mxu0 %v4039
    %4150 = vmatmul.f32.gmra.mxu0 %v4052
    %v4151 = vpop.f32.mrf.mxu0
    %v4152 = vadd.f32 0.0, %v4151
    %4153 = vdwg.mxu0
    %4154 = vmatpush.msra.mxu0 0.0
    %4155 = vmatpush.msra.mxu0 0.0
    %4156 = vmatpush.msra.mxu0 0.0
    %4157 = vmatpush.msra.mxu0 0.0
    %4158 = vmatpush.msra.mxu0 0.0
    %4159 = vmatpush.msra.mxu0 0.0
    %4160 = vmatpush.msra.mxu0 0.0
    %4161 = vmatpush.msra.mxu0 0.0
    %4162 = vmatpush.msra.mxu0 0.0
    %4163 = vmatpush.msra.mxu0 0.0
    %4164 = vmatpush.msra.mxu0 0.0
    %4165 = vmatpush.msra.mxu0 0.0
    %4166 = vmatpush.msra.mxu0 0.0
    %4167 = vmatpush.msra.mxu0 0.0
    %4168 = vmatpush.msra.mxu0 0.0
    %4169 = vmatpush.msra.mxu0 %v4040
    %4170 = vmatmul.f32.gmra.mxu0 %v4052
    %v4171 = vpop.f32.mrf.mxu0
    %v4172 = vadd.f32 0.0, %v4171
    %4173 = vdwg.mxu0
    %4174 = vmatpush.msra.mxu0 0.0
    %4175 = vmatpush.msra.mxu0 0.0
    %4176 = vmatpush.msra.mxu0 0.0
    %4177 = vmatpush.msra.mxu0 0.0
    %4178 = vmatpush.msra.mxu0 0.0
    %4179 = vmatpush.msra.mxu0 0.0
    %4180 = vmatpush.msra.mxu0 0.0
    %4181 = vmatpush.msra.mxu0 0.0
    %4182 = vmatpush.msra.mxu0 0.0
    %4183 = vmatpush.msra.mxu0 0.0
    %4184 = vmatpush.msra.mxu0 0.0
    %4185 = vmatpush.msra.mxu0 0.0
    %4186 = vmatpush.msra.mxu0 0.0
    %4187 = vmatpush.msra.mxu0 0.0
    %4188 = vmatpush.msra.mxu0 0.0
    %4189 = vmatpush.msra.mxu0 %v4041
    %4190 = vmatmul.f32.gmra.mxu0 %v4052
    %v4191 = vpop.f32.mrf.mxu0
    %v4192 = vadd.f32 0.0, %v4191
    %4193 = vdwg.mxu0
    %4194 = vmatpush.msra.mxu0 0.0
    %4195 = vmatpush.msra.mxu0 0.0
    %4196 = vmatpush.msra.mxu0 0.0
    %4197 = vmatpush.msra.mxu0 0.0
    %4198 = vmatpush.msra.mxu0 0.0
    %4199 = vmatpush.msra.mxu0 0.0
    %4200 = vmatpush.msra.mxu0 0.0
    %4201 = vmatpush.msra.mxu0 0.0
    %4202 = vmatpush.msra.mxu0 0.0
    %4203 = vmatpush.msra.mxu0 0.0
    %4204 = vmatpush.msra.mxu0 0.0
    %4205 = vmatpush.msra.mxu0 0.0
    %4206 = vmatpush.msra.mxu0 0.0
    %4207 = vmatpush.msra.mxu0 0.0
    %4208 = vmatpush.msra.mxu0 0.0
    %4209 = vmatpush.msra.mxu0 %v4042
    %4210 = vmatmul.f32.gmra.mxu0 %v4052
    %v4211 = vpop.f32.mrf.mxu0
    %v4212 = vadd.f32 0.0, %v4211
    %4213 = vdwg.mxu0
    %v4214 = vadd.f32 %v3989, %v4072
    %v4215 = vadd.f32 %v3990, %v4092
    %v4216 = vadd.f32 %v3991, %v4112
    %v4217 = vadd.f32 %v3992, %v4132
    %v4218 = vadd.f32 %v3993, %v4152
    %v4219 = vadd.f32 %v3994, %v4172
    %v4220 = vadd.f32 %v3995, %v4192
    %v4221 = vadd.f32 %v3996, %v4212
    %s4222 = scalar_lea.vmem %s3, 160
    %v4223 = vld [vmem:[%s4222] sm:$0xff]
    %4224 = vrot.lane.b32.xlu0 %v3999, 126
    %v4225 = vpop.permute.xlu0 %4224
    %4226 = vrot.lane.b32.xlu0 %v4000, 126
    %v4227 = vpop.permute.xlu0 %4226
    %4228 = vrot.lane.b32.xlu0 %v4001, 126
    %v4229 = vpop.permute.xlu0 %4228
    %4230 = vrot.lane.b32.xlu0 %v4002, 126
    %v4231 = vpop.permute.xlu0 %4230
    %4232 = vrot.lane.b32.xlu0 %v4003, 126
    %v4233 = vpop.permute.xlu0 %4232
    %4234 = vrot.lane.b32.xlu0 %v4004, 126
    %v4235 = vpop.permute.xlu0 %4234
    %4236 = vrot.lane.b32.xlu0 %v4005, 126
    %v4237 = vpop.permute.xlu0 %4236
    %4238 = vrot.lane.b32.xlu0 %v4006, 126
    %v4239 = vpop.permute.xlu0 %4238
    %4240 = vrot.lane.b32.xlu0 %v4007, 126
    %v4241 = vpop.permute.xlu0 %4240
    %v4242 = vsel %vm516, %v4225, %v4227
    %v4243 = vsel %vm516, %v4227, %v4229
    %v4244 = vsel %vm516, %v4229, %v4231
    %v4245 = vsel %vm516, %v4231, %v4233
    %v4246 = vsel %vm516, %v4233, %v4235
    %v4247 = vsel %vm516, %v4235, %v4237
    %v4248 = vsel %vm516, %v4237, %v4239
    %v4249 = vsel %vm516, %v4239, %v4241
    %v4259 = vsel %vm169, %v4223, 0
    %4261 = vmatpush.msra.mxu0 0.0
    %4262 = vmatpush.msra.mxu0 0.0
    %4263 = vmatpush.msra.mxu0 0.0
    %4264 = vmatpush.msra.mxu0 0.0
    %4265 = vmatpush.msra.mxu0 0.0
    %4266 = vmatpush.msra.mxu0 0.0
    %4267 = vmatpush.msra.mxu0 0.0
    %4268 = vmatpush.msra.mxu0 0.0
    %4269 = vmatpush.msra.mxu0 0.0
    %4270 = vmatpush.msra.mxu0 0.0
    %4271 = vmatpush.msra.mxu0 0.0
    %4272 = vmatpush.msra.mxu0 0.0
    %4273 = vmatpush.msra.mxu0 0.0
    %4274 = vmatpush.msra.mxu0 0.0
    %4275 = vmatpush.msra.mxu0 0.0
    %4276 = vmatpush.msra.mxu0 %v4242
    %4277 = vmatmul.f32.gmra.mxu0 %v4259
    %v4278 = vpop.f32.mrf.mxu0
    %v4279 = vadd.f32 0.0, %v4278
    %4280 = vdwg.mxu0
    %4281 = vmatpush.msra.mxu0 0.0
    %4282 = vmatpush.msra.mxu0 0.0
    %4283 = vmatpush.msra.mxu0 0.0
    %4284 = vmatpush.msra.mxu0 0.0
    %4285 = vmatpush.msra.mxu0 0.0
    %4286 = vmatpush.msra.mxu0 0.0
    %4287 = vmatpush.msra.mxu0 0.0
    %4288 = vmatpush.msra.mxu0 0.0
    %4289 = vmatpush.msra.mxu0 0.0
    %4290 = vmatpush.msra.mxu0 0.0
    %4291 = vmatpush.msra.mxu0 0.0
    %4292 = vmatpush.msra.mxu0 0.0
    %4293 = vmatpush.msra.mxu0 0.0
    %4294 = vmatpush.msra.mxu0 0.0
    %4295 = vmatpush.msra.mxu0 0.0
    %4296 = vmatpush.msra.mxu0 %v4243
    %4297 = vmatmul.f32.gmra.mxu0 %v4259
    %v4298 = vpop.f32.mrf.mxu0
    %v4299 = vadd.f32 0.0, %v4298
    %4300 = vdwg.mxu0
    %4301 = vmatpush.msra.mxu0 0.0
    %4302 = vmatpush.msra.mxu0 0.0
    %4303 = vmatpush.msra.mxu0 0.0
    %4304 = vmatpush.msra.mxu0 0.0
    %4305 = vmatpush.msra.mxu0 0.0
    %4306 = vmatpush.msra.mxu0 0.0
    %4307 = vmatpush.msra.mxu0 0.0
    %4308 = vmatpush.msra.mxu0 0.0
    %4309 = vmatpush.msra.mxu0 0.0
    %4310 = vmatpush.msra.mxu0 0.0
    %4311 = vmatpush.msra.mxu0 0.0
    %4312 = vmatpush.msra.mxu0 0.0
    %4313 = vmatpush.msra.mxu0 0.0
    %4314 = vmatpush.msra.mxu0 0.0
    %4315 = vmatpush.msra.mxu0 0.0
    %4316 = vmatpush.msra.mxu0 %v4244
    %4317 = vmatmul.f32.gmra.mxu0 %v4259
    %v4318 = vpop.f32.mrf.mxu0
    %v4319 = vadd.f32 0.0, %v4318
    %4320 = vdwg.mxu0
    %4321 = vmatpush.msra.mxu0 0.0
    %4322 = vmatpush.msra.mxu0 0.0
    %4323 = vmatpush.msra.mxu0 0.0
    %4324 = vmatpush.msra.mxu0 0.0
    %4325 = vmatpush.msra.mxu0 0.0
    %4326 = vmatpush.msra.mxu0 0.0
    %4327 = vmatpush.msra.mxu0 0.0
    %4328 = vmatpush.msra.mxu0 0.0
    %4329 = vmatpush.msra.mxu0 0.0
    %4330 = vmatpush.msra.mxu0 0.0
    %4331 = vmatpush.msra.mxu0 0.0
    %4332 = vmatpush.msra.mxu0 0.0
    %4333 = vmatpush.msra.mxu0 0.0
    %4334 = vmatpush.msra.mxu0 0.0
    %4335 = vmatpush.msra.mxu0 0.0
    %4336 = vmatpush.msra.mxu0 %v4245
    %4337 = vmatmul.f32.gmra.mxu0 %v4259
    %v4338 = vpop.f32.mrf.mxu0
    %v4339 = vadd.f32 0.0, %v4338
    %4340 = vdwg.mxu0
    %4341 = vmatpush.msra.mxu0 0.0
    %4342 = vmatpush.msra.mxu0 0.0
    %4343 = vmatpush.msra.mxu0 0.0
    %4344 = vmatpush.msra.mxu0 0.0
    %4345 = vmatpush.msra.mxu0 0.0
    %4346 = vmatpush.msra.mxu0 0.0
    %4347 = vmatpush.msra.mxu0 0.0
    %4348 = vmatpush.msra.mxu0 0.0
    %4349 = vmatpush.msra.mxu0 0.0
    %4350 = vmatpush.msra.mxu0 0.0
    %4351 = vmatpush.msra.mxu0 0.0
    %4352 = vmatpush.msra.mxu0 0.0
    %4353 = vmatpush.msra.mxu0 0.0
    %4354 = vmatpush.msra.mxu0 0.0
    %4355 = vmatpush.msra.mxu0 0.0
    %4356 = vmatpush.msra.mxu0 %v4246
    %4357 = vmatmul.f32.gmra.mxu0 %v4259
    %v4358 = vpop.f32.mrf.mxu0
    %v4359 = vadd.f32 0.0, %v4358
    %4360 = vdwg.mxu0
    %4361 = vmatpush.msra.mxu0 0.0
    %4362 = vmatpush.msra.mxu0 0.0
    %4363 = vmatpush.msra.mxu0 0.0
    %4364 = vmatpush.msra.mxu0 0.0
    %4365 = vmatpush.msra.mxu0 0.0
    %4366 = vmatpush.msra.mxu0 0.0
    %4367 = vmatpush.msra.mxu0 0.0
    %4368 = vmatpush.msra.mxu0 0.0
    %4369 = vmatpush.msra.mxu0 0.0
    %4370 = vmatpush.msra.mxu0 0.0
    %4371 = vmatpush.msra.mxu0 0.0
    %4372 = vmatpush.msra.mxu0 0.0
    %4373 = vmatpush.msra.mxu0 0.0
    %4374 = vmatpush.msra.mxu0 0.0
    %4375 = vmatpush.msra.mxu0 0.0
    %4376 = vmatpush.msra.mxu0 %v4247
    %4377 = vmatmul.f32.gmra.mxu0 %v4259
    %v4378 = vpop.f32.mrf.mxu0
    %v4379 = vadd.f32 0.0, %v4378
    %4380 = vdwg.mxu0
    %4381 = vmatpush.msra.mxu0 0.0
    %4382 = vmatpush.msra.mxu0 0.0
    %4383 = vmatpush.msra.mxu0 0.0
    %4384 = vmatpush.msra.mxu0 0.0
    %4385 = vmatpush.msra.mxu0 0.0
    %4386 = vmatpush.msra.mxu0 0.0
    %4387 = vmatpush.msra.mxu0 0.0
    %4388 = vmatpush.msra.mxu0 0.0
    %4389 = vmatpush.msra.mxu0 0.0
    %4390 = vmatpush.msra.mxu0 0.0
    %4391 = vmatpush.msra.mxu0 0.0
    %4392 = vmatpush.msra.mxu0 0.0
    %4393 = vmatpush.msra.mxu0 0.0
    %4394 = vmatpush.msra.mxu0 0.0
    %4395 = vmatpush.msra.mxu0 0.0
    %4396 = vmatpush.msra.mxu0 %v4248
    %4397 = vmatmul.f32.gmra.mxu0 %v4259
    %v4398 = vpop.f32.mrf.mxu0
    %v4399 = vadd.f32 0.0, %v4398
    %4400 = vdwg.mxu0
    %4401 = vmatpush.msra.mxu0 0.0
    %4402 = vmatpush.msra.mxu0 0.0
    %4403 = vmatpush.msra.mxu0 0.0
    %4404 = vmatpush.msra.mxu0 0.0
    %4405 = vmatpush.msra.mxu0 0.0
    %4406 = vmatpush.msra.mxu0 0.0
    %4407 = vmatpush.msra.mxu0 0.0
    %4408 = vmatpush.msra.mxu0 0.0
    %4409 = vmatpush.msra.mxu0 0.0
    %4410 = vmatpush.msra.mxu0 0.0
    %4411 = vmatpush.msra.mxu0 0.0
    %4412 = vmatpush.msra.mxu0 0.0
    %4413 = vmatpush.msra.mxu0 0.0
    %4414 = vmatpush.msra.mxu0 0.0
    %4415 = vmatpush.msra.mxu0 0.0
    %4416 = vmatpush.msra.mxu0 %v4249
    %4417 = vmatmul.f32.gmra.mxu0 %v4259
    %v4418 = vpop.f32.mrf.mxu0
    %v4419 = vadd.f32 0.0, %v4418
    %4420 = vdwg.mxu0
    %v4421 = vadd.f32 %v4214, %v4279
    %v4422 = vadd.f32 %v4215, %v4299
    %v4423 = vadd.f32 %v4216, %v4319
    %v4424 = vadd.f32 %v4217, %v4339
    %v4425 = vadd.f32 %v4218, %v4359
    %v4426 = vadd.f32 %v4219, %v4379
    %v4427 = vadd.f32 %v4220, %v4399
    %v4428 = vadd.f32 %v4221, %v4419
    %s4429 = scalar_lea.vmem %s3, 168
    %v4430 = vld [vmem:[%s4429] sm:$0xff]
    %4431 = vrot.lane.b32.xlu0 %v3999, 120
    %v4432 = vpop.permute.xlu0 %4431
    %4433 = vrot.lane.b32.xlu0 %v4000, 120
    %v4434 = vpop.permute.xlu0 %4433
    %4435 = vrot.lane.b32.xlu0 %v4001, 120
    %v4436 = vpop.permute.xlu0 %4435
    %4437 = vrot.lane.b32.xlu0 %v4002, 120
    %v4438 = vpop.permute.xlu0 %4437
    %4439 = vrot.lane.b32.xlu0 %v4003, 120
    %v4440 = vpop.permute.xlu0 %4439
    %4441 = vrot.lane.b32.xlu0 %v4004, 120
    %v4442 = vpop.permute.xlu0 %4441
    %4443 = vrot.lane.b32.xlu0 %v4005, 120
    %v4444 = vpop.permute.xlu0 %4443
    %4445 = vrot.lane.b32.xlu0 %v4006, 120
    %v4446 = vpop.permute.xlu0 %4445
    %4447 = vrot.lane.b32.xlu0 %v4007, 120
    %v4448 = vpop.permute.xlu0 %4447
    %v4449 = vsel %vm724, %v4432, %v4434
    %v4450 = vsel %vm724, %v4434, %v4436
    %v4451 = vsel %vm724, %v4436, %v4438
    %v4452 = vsel %vm724, %v4438, %v4440
    %v4453 = vsel %vm724, %v4440, %v4442
    %v4454 = vsel %vm724, %v4442, %v4444
    %v4455 = vsel %vm724, %v4444, %v4446
    %v4456 = vsel %vm724, %v4446, %v4448
    %v4466 = vsel %vm169, %v4430, 0
    %4468 = vmatpush.msra.mxu0 0.0
    %4469 = vmatpush.msra.mxu0 0.0
    %4470 = vmatpush.msra.mxu0 0.0
    %4471 = vmatpush.msra.mxu0 0.0
    %4472 = vmatpush.msra.mxu0 0.0
    %4473 = vmatpush.msra.mxu0 0.0
    %4474 = vmatpush.msra.mxu0 0.0
    %4475 = vmatpush.msra.mxu0 0.0
    %4476 = vmatpush.msra.mxu0 0.0
    %4477 = vmatpush.msra.mxu0 0.0
    %4478 = vmatpush.msra.mxu0 0.0
    %4479 = vmatpush.msra.mxu0 0.0
    %4480 = vmatpush.msra.mxu0 0.0
    %4481 = vmatpush.msra.mxu0 0.0
    %4482 = vmatpush.msra.mxu0 0.0
    %4483 = vmatpush.msra.mxu0 %v4449
    %4484 = vmatmul.f32.gmra.mxu0 %v4466
    %v4485 = vpop.f32.mrf.mxu0
    %v4486 = vadd.f32 0.0, %v4485
    %4487 = vdwg.mxu0
    %4488 = vmatpush.msra.mxu0 0.0
    %4489 = vmatpush.msra.mxu0 0.0
    %4490 = vmatpush.msra.mxu0 0.0
    %4491 = vmatpush.msra.mxu0 0.0
    %4492 = vmatpush.msra.mxu0 0.0
    %4493 = vmatpush.msra.mxu0 0.0
    %4494 = vmatpush.msra.mxu0 0.0
    %4495 = vmatpush.msra.mxu0 0.0
    %4496 = vmatpush.msra.mxu0 0.0
    %4497 = vmatpush.msra.mxu0 0.0
    %4498 = vmatpush.msra.mxu0 0.0
    %4499 = vmatpush.msra.mxu0 0.0
    %4500 = vmatpush.msra.mxu0 0.0
    %4501 = vmatpush.msra.mxu0 0.0
    %4502 = vmatpush.msra.mxu0 0.0
    %4503 = vmatpush.msra.mxu0 %v4450
    %4504 = vmatmul.f32.gmra.mxu0 %v4466
    %v4505 = vpop.f32.mrf.mxu0
    %v4506 = vadd.f32 0.0, %v4505
    %4507 = vdwg.mxu0
    %4508 = vmatpush.msra.mxu0 0.0
    %4509 = vmatpush.msra.mxu0 0.0
    %4510 = vmatpush.msra.mxu0 0.0
    %4511 = vmatpush.msra.mxu0 0.0
    %4512 = vmatpush.msra.mxu0 0.0
    %4513 = vmatpush.msra.mxu0 0.0
    %4514 = vmatpush.msra.mxu0 0.0
    %4515 = vmatpush.msra.mxu0 0.0
    %4516 = vmatpush.msra.mxu0 0.0
    %4517 = vmatpush.msra.mxu0 0.0
    %4518 = vmatpush.msra.mxu0 0.0
    %4519 = vmatpush.msra.mxu0 0.0
    %4520 = vmatpush.msra.mxu0 0.0
    %4521 = vmatpush.msra.mxu0 0.0
    %4522 = vmatpush.msra.mxu0 0.0
    %4523 = vmatpush.msra.mxu0 %v4451
    %4524 = vmatmul.f32.gmra.mxu0 %v4466
    %v4525 = vpop.f32.mrf.mxu0
    %v4526 = vadd.f32 0.0, %v4525
    %4527 = vdwg.mxu0
    %4528 = vmatpush.msra.mxu0 0.0
    %4529 = vmatpush.msra.mxu0 0.0
    %4530 = vmatpush.msra.mxu0 0.0
    %4531 = vmatpush.msra.mxu0 0.0
    %4532 = vmatpush.msra.mxu0 0.0
    %4533 = vmatpush.msra.mxu0 0.0
    %4534 = vmatpush.msra.mxu0 0.0
    %4535 = vmatpush.msra.mxu0 0.0
    %4536 = vmatpush.msra.mxu0 0.0
    %4537 = vmatpush.msra.mxu0 0.0
    %4538 = vmatpush.msra.mxu0 0.0
    %4539 = vmatpush.msra.mxu0 0.0
    %4540 = vmatpush.msra.mxu0 0.0
    %4541 = vmatpush.msra.mxu0 0.0
    %4542 = vmatpush.msra.mxu0 0.0
    %4543 = vmatpush.msra.mxu0 %v4452
    %4544 = vmatmul.f32.gmra.mxu0 %v4466
    %v4545 = vpop.f32.mrf.mxu0
    %v4546 = vadd.f32 0.0, %v4545
    %4547 = vdwg.mxu0
    %4548 = vmatpush.msra.mxu0 0.0
    %4549 = vmatpush.msra.mxu0 0.0
    %4550 = vmatpush.msra.mxu0 0.0
    %4551 = vmatpush.msra.mxu0 0.0
    %4552 = vmatpush.msra.mxu0 0.0
    %4553 = vmatpush.msra.mxu0 0.0
    %4554 = vmatpush.msra.mxu0 0.0
    %4555 = vmatpush.msra.mxu0 0.0
    %4556 = vmatpush.msra.mxu0 0.0
    %4557 = vmatpush.msra.mxu0 0.0
    %4558 = vmatpush.msra.mxu0 0.0
    %4559 = vmatpush.msra.mxu0 0.0
    %4560 = vmatpush.msra.mxu0 0.0
    %4561 = vmatpush.msra.mxu0 0.0
    %4562 = vmatpush.msra.mxu0 0.0
    %4563 = vmatpush.msra.mxu0 %v4453
    %4564 = vmatmul.f32.gmra.mxu0 %v4466
    %v4565 = vpop.f32.mrf.mxu0
    %v4566 = vadd.f32 0.0, %v4565
    %4567 = vdwg.mxu0
    %4568 = vmatpush.msra.mxu0 0.0
    %4569 = vmatpush.msra.mxu0 0.0
    %4570 = vmatpush.msra.mxu0 0.0
    %4571 = vmatpush.msra.mxu0 0.0
    %4572 = vmatpush.msra.mxu0 0.0
    %4573 = vmatpush.msra.mxu0 0.0
    %4574 = vmatpush.msra.mxu0 0.0
    %4575 = vmatpush.msra.mxu0 0.0
    %4576 = vmatpush.msra.mxu0 0.0
    %4577 = vmatpush.msra.mxu0 0.0
    %4578 = vmatpush.msra.mxu0 0.0
    %4579 = vmatpush.msra.mxu0 0.0
    %4580 = vmatpush.msra.mxu0 0.0
    %4581 = vmatpush.msra.mxu0 0.0
    %4582 = vmatpush.msra.mxu0 0.0
    %4583 = vmatpush.msra.mxu0 %v4454
    %4584 = vmatmul.f32.gmra.mxu0 %v4466
    %v4585 = vpop.f32.mrf.mxu0
    %v4586 = vadd.f32 0.0, %v4585
    %4587 = vdwg.mxu0
    %4588 = vmatpush.msra.mxu0 0.0
    %4589 = vmatpush.msra.mxu0 0.0
    %4590 = vmatpush.msra.mxu0 0.0
    %4591 = vmatpush.msra.mxu0 0.0
    %4592 = vmatpush.msra.mxu0 0.0
    %4593 = vmatpush.msra.mxu0 0.0
    %4594 = vmatpush.msra.mxu0 0.0
    %4595 = vmatpush.msra.mxu0 0.0
    %4596 = vmatpush.msra.mxu0 0.0
    %4597 = vmatpush.msra.mxu0 0.0
    %4598 = vmatpush.msra.mxu0 0.0
    %4599 = vmatpush.msra.mxu0 0.0
    %4600 = vmatpush.msra.mxu0 0.0
    %4601 = vmatpush.msra.mxu0 0.0
    %4602 = vmatpush.msra.mxu0 0.0
    %4603 = vmatpush.msra.mxu0 %v4455
    %4604 = vmatmul.f32.gmra.mxu0 %v4466
    %v4605 = vpop.f32.mrf.mxu0
    %v4606 = vadd.f32 0.0, %v4605
    %4607 = vdwg.mxu0
    %4608 = vmatpush.msra.mxu0 0.0
    %4609 = vmatpush.msra.mxu0 0.0
    %4610 = vmatpush.msra.mxu0 0.0
    %4611 = vmatpush.msra.mxu0 0.0
    %4612 = vmatpush.msra.mxu0 0.0
    %4613 = vmatpush.msra.mxu0 0.0
    %4614 = vmatpush.msra.mxu0 0.0
    %4615 = vmatpush.msra.mxu0 0.0
    %4616 = vmatpush.msra.mxu0 0.0
    %4617 = vmatpush.msra.mxu0 0.0
    %4618 = vmatpush.msra.mxu0 0.0
    %4619 = vmatpush.msra.mxu0 0.0
    %4620 = vmatpush.msra.mxu0 0.0
    %4621 = vmatpush.msra.mxu0 0.0
    %4622 = vmatpush.msra.mxu0 0.0
    %4623 = vmatpush.msra.mxu0 %v4456
    %4624 = vmatmul.f32.gmra.mxu0 %v4466
    %v4625 = vpop.f32.mrf.mxu0
    %v4626 = vadd.f32 0.0, %v4625
    %4627 = vdwg.mxu0
    %v4628 = vadd.f32 %v4421, %v4486
    %v4629 = vadd.f32 %v4422, %v4506
    %v4630 = vadd.f32 %v4423, %v4526
    %v4631 = vadd.f32 %v4424, %v4546
    %v4632 = vadd.f32 %v4425, %v4566
    %v4633 = vadd.f32 %v4426, %v4586
    %v4634 = vadd.f32 %v4427, %v4606
    %v4635 = vadd.f32 %v4428, %v4626
    %s4636 = scalar_lea.vmem %s3, 176
    %v4637 = vld [vmem:[%s4636] sm:$0xff]
    %4638 = vrot.lane.b32.xlu0 %v3999, 119
    %v4639 = vpop.permute.xlu0 %4638
    %4640 = vrot.lane.b32.xlu0 %v4000, 119
    %v4641 = vpop.permute.xlu0 %4640
    %4642 = vrot.lane.b32.xlu0 %v4001, 119
    %v4643 = vpop.permute.xlu0 %4642
    %4644 = vrot.lane.b32.xlu0 %v4002, 119
    %v4645 = vpop.permute.xlu0 %4644
    %4646 = vrot.lane.b32.xlu0 %v4003, 119
    %v4647 = vpop.permute.xlu0 %4646
    %4648 = vrot.lane.b32.xlu0 %v4004, 119
    %v4649 = vpop.permute.xlu0 %4648
    %4650 = vrot.lane.b32.xlu0 %v4005, 119
    %v4651 = vpop.permute.xlu0 %4650
    %4652 = vrot.lane.b32.xlu0 %v4006, 119
    %v4653 = vpop.permute.xlu0 %4652
    %4654 = vrot.lane.b32.xlu0 %v4007, 119
    %v4655 = vpop.permute.xlu0 %4654
    %v4656 = vsel %vm932, %v4639, %v4641
    %v4657 = vsel %vm932, %v4641, %v4643
    %v4658 = vsel %vm932, %v4643, %v4645
    %v4659 = vsel %vm932, %v4645, %v4647
    %v4660 = vsel %vm932, %v4647, %v4649
    %v4661 = vsel %vm932, %v4649, %v4651
    %v4662 = vsel %vm932, %v4651, %v4653
    %v4663 = vsel %vm932, %v4653, %v4655
    %v4673 = vsel %vm169, %v4637, 0
    %4675 = vmatpush.msra.mxu0 0.0
    %4676 = vmatpush.msra.mxu0 0.0
    %4677 = vmatpush.msra.mxu0 0.0
    %4678 = vmatpush.msra.mxu0 0.0
    %4679 = vmatpush.msra.mxu0 0.0
    %4680 = vmatpush.msra.mxu0 0.0
    %4681 = vmatpush.msra.mxu0 0.0
    %4682 = vmatpush.msra.mxu0 0.0
    %4683 = vmatpush.msra.mxu0 0.0
    %4684 = vmatpush.msra.mxu0 0.0
    %4685 = vmatpush.msra.mxu0 0.0
    %4686 = vmatpush.msra.mxu0 0.0
    %4687 = vmatpush.msra.mxu0 0.0
    %4688 = vmatpush.msra.mxu0 0.0
    %4689 = vmatpush.msra.mxu0 0.0
    %4690 = vmatpush.msra.mxu0 %v4656
    %4691 = vmatmul.f32.gmra.mxu0 %v4673
    %v4692 = vpop.f32.mrf.mxu0
    %v4693 = vadd.f32 0.0, %v4692
    %4694 = vdwg.mxu0
    %4695 = vmatpush.msra.mxu0 0.0
    %4696 = vmatpush.msra.mxu0 0.0
    %4697 = vmatpush.msra.mxu0 0.0
    %4698 = vmatpush.msra.mxu0 0.0
    %4699 = vmatpush.msra.mxu0 0.0
    %4700 = vmatpush.msra.mxu0 0.0
    %4701 = vmatpush.msra.mxu0 0.0
    %4702 = vmatpush.msra.mxu0 0.0
    %4703 = vmatpush.msra.mxu0 0.0
    %4704 = vmatpush.msra.mxu0 0.0
    %4705 = vmatpush.msra.mxu0 0.0
    %4706 = vmatpush.msra.mxu0 0.0
    %4707 = vmatpush.msra.mxu0 0.0
    %4708 = vmatpush.msra.mxu0 0.0
    %4709 = vmatpush.msra.mxu0 0.0
    %4710 = vmatpush.msra.mxu0 %v4657
    %4711 = vmatmul.f32.gmra.mxu0 %v4673
    %v4712 = vpop.f32.mrf.mxu0
    %v4713 = vadd.f32 0.0, %v4712
    %4714 = vdwg.mxu0
    %4715 = vmatpush.msra.mxu0 0.0
    %4716 = vmatpush.msra.mxu0 0.0
    %4717 = vmatpush.msra.mxu0 0.0
    %4718 = vmatpush.msra.mxu0 0.0
    %4719 = vmatpush.msra.mxu0 0.0
    %4720 = vmatpush.msra.mxu0 0.0
    %4721 = vmatpush.msra.mxu0 0.0
    %4722 = vmatpush.msra.mxu0 0.0
    %4723 = vmatpush.msra.mxu0 0.0
    %4724 = vmatpush.msra.mxu0 0.0
    %4725 = vmatpush.msra.mxu0 0.0
    %4726 = vmatpush.msra.mxu0 0.0
    %4727 = vmatpush.msra.mxu0 0.0
    %4728 = vmatpush.msra.mxu0 0.0
    %4729 = vmatpush.msra.mxu0 0.0
    %4730 = vmatpush.msra.mxu0 %v4658
    %4731 = vmatmul.f32.gmra.mxu0 %v4673
    %v4732 = vpop.f32.mrf.mxu0
    %v4733 = vadd.f32 0.0, %v4732
    %4734 = vdwg.mxu0
    %4735 = vmatpush.msra.mxu0 0.0
    %4736 = vmatpush.msra.mxu0 0.0
    %4737 = vmatpush.msra.mxu0 0.0
    %4738 = vmatpush.msra.mxu0 0.0
    %4739 = vmatpush.msra.mxu0 0.0
    %4740 = vmatpush.msra.mxu0 0.0
    %4741 = vmatpush.msra.mxu0 0.0
    %4742 = vmatpush.msra.mxu0 0.0
    %4743 = vmatpush.msra.mxu0 0.0
    %4744 = vmatpush.msra.mxu0 0.0
    %4745 = vmatpush.msra.mxu0 0.0
    %4746 = vmatpush.msra.mxu0 0.0
    %4747 = vmatpush.msra.mxu0 0.0
    %4748 = vmatpush.msra.mxu0 0.0
    %4749 = vmatpush.msra.mxu0 0.0
    %4750 = vmatpush.msra.mxu0 %v4659
    %4751 = vmatmul.f32.gmra.mxu0 %v4673
    %v4752 = vpop.f32.mrf.mxu0
    %v4753 = vadd.f32 0.0, %v4752
    %4754 = vdwg.mxu0
    %4755 = vmatpush.msra.mxu0 0.0
    %4756 = vmatpush.msra.mxu0 0.0
    %4757 = vmatpush.msra.mxu0 0.0
    %4758 = vmatpush.msra.mxu0 0.0
    %4759 = vmatpush.msra.mxu0 0.0
    %4760 = vmatpush.msra.mxu0 0.0
    %4761 = vmatpush.msra.mxu0 0.0
    %4762 = vmatpush.msra.mxu0 0.0
    %4763 = vmatpush.msra.mxu0 0.0
    %4764 = vmatpush.msra.mxu0 0.0
    %4765 = vmatpush.msra.mxu0 0.0
    %4766 = vmatpush.msra.mxu0 0.0
    %4767 = vmatpush.msra.mxu0 0.0
    %4768 = vmatpush.msra.mxu0 0.0
    %4769 = vmatpush.msra.mxu0 0.0
    %4770 = vmatpush.msra.mxu0 %v4660
    %4771 = vmatmul.f32.gmra.mxu0 %v4673
    %v4772 = vpop.f32.mrf.mxu0
    %v4773 = vadd.f32 0.0, %v4772
    %4774 = vdwg.mxu0
    %4775 = vmatpush.msra.mxu0 0.0
    %4776 = vmatpush.msra.mxu0 0.0
    %4777 = vmatpush.msra.mxu0 0.0
    %4778 = vmatpush.msra.mxu0 0.0
    %4779 = vmatpush.msra.mxu0 0.0
    %4780 = vmatpush.msra.mxu0 0.0
    %4781 = vmatpush.msra.mxu0 0.0
    %4782 = vmatpush.msra.mxu0 0.0
    %4783 = vmatpush.msra.mxu0 0.0
    %4784 = vmatpush.msra.mxu0 0.0
    %4785 = vmatpush.msra.mxu0 0.0
    %4786 = vmatpush.msra.mxu0 0.0
    %4787 = vmatpush.msra.mxu0 0.0
    %4788 = vmatpush.msra.mxu0 0.0
    %4789 = vmatpush.msra.mxu0 0.0
    %4790 = vmatpush.msra.mxu0 %v4661
    %4791 = vmatmul.f32.gmra.mxu0 %v4673
    %v4792 = vpop.f32.mrf.mxu0
    %v4793 = vadd.f32 0.0, %v4792
    %4794 = vdwg.mxu0
    %4795 = vmatpush.msra.mxu0 0.0
    %4796 = vmatpush.msra.mxu0 0.0
    %4797 = vmatpush.msra.mxu0 0.0
    %4798 = vmatpush.msra.mxu0 0.0
    %4799 = vmatpush.msra.mxu0 0.0
    %4800 = vmatpush.msra.mxu0 0.0
    %4801 = vmatpush.msra.mxu0 0.0
    %4802 = vmatpush.msra.mxu0 0.0
    %4803 = vmatpush.msra.mxu0 0.0
    %4804 = vmatpush.msra.mxu0 0.0
    %4805 = vmatpush.msra.mxu0 0.0
    %4806 = vmatpush.msra.mxu0 0.0
    %4807 = vmatpush.msra.mxu0 0.0
    %4808 = vmatpush.msra.mxu0 0.0
    %4809 = vmatpush.msra.mxu0 0.0
    %4810 = vmatpush.msra.mxu0 %v4662
    %4811 = vmatmul.f32.gmra.mxu0 %v4673
    %v4812 = vpop.f32.mrf.mxu0
    %v4813 = vadd.f32 0.0, %v4812
    %4814 = vdwg.mxu0
    %4815 = vmatpush.msra.mxu0 0.0
    %4816 = vmatpush.msra.mxu0 0.0
    %4817 = vmatpush.msra.mxu0 0.0
    %4818 = vmatpush.msra.mxu0 0.0
    %4819 = vmatpush.msra.mxu0 0.0
    %4820 = vmatpush.msra.mxu0 0.0
    %4821 = vmatpush.msra.mxu0 0.0
    %4822 = vmatpush.msra.mxu0 0.0
    %4823 = vmatpush.msra.mxu0 0.0
    %4824 = vmatpush.msra.mxu0 0.0
    %4825 = vmatpush.msra.mxu0 0.0
    %4826 = vmatpush.msra.mxu0 0.0
    %4827 = vmatpush.msra.mxu0 0.0
    %4828 = vmatpush.msra.mxu0 0.0
    %4829 = vmatpush.msra.mxu0 0.0
    %4830 = vmatpush.msra.mxu0 %v4663
    %4831 = vmatmul.f32.gmra.mxu0 %v4673
    %v4832 = vpop.f32.mrf.mxu0
    %v4833 = vadd.f32 0.0, %v4832
    %4834 = vdwg.mxu0
    %v4835 = vadd.f32 %v4628, %v4693
    %v4836 = vadd.f32 %v4629, %v4713
    %v4837 = vadd.f32 %v4630, %v4733
    %v4838 = vadd.f32 %v4631, %v4753
    %v4839 = vadd.f32 %v4632, %v4773
    %v4840 = vadd.f32 %v4633, %v4793
    %v4841 = vadd.f32 %v4634, %v4813
    %v4842 = vadd.f32 %v4635, %v4833
    %s4843 = scalar_lea.vmem %s3, 184
    %v4844 = vld [vmem:[%s4843] sm:$0xff]
    %4845 = vrot.lane.b32.xlu0 %v3999, 118
    %v4846 = vpop.permute.xlu0 %4845
    %4847 = vrot.lane.b32.xlu0 %v4000, 118
    %v4848 = vpop.permute.xlu0 %4847
    %4849 = vrot.lane.b32.xlu0 %v4001, 118
    %v4850 = vpop.permute.xlu0 %4849
    %4851 = vrot.lane.b32.xlu0 %v4002, 118
    %v4852 = vpop.permute.xlu0 %4851
    %4853 = vrot.lane.b32.xlu0 %v4003, 118
    %v4854 = vpop.permute.xlu0 %4853
    %4855 = vrot.lane.b32.xlu0 %v4004, 118
    %v4856 = vpop.permute.xlu0 %4855
    %4857 = vrot.lane.b32.xlu0 %v4005, 118
    %v4858 = vpop.permute.xlu0 %4857
    %4859 = vrot.lane.b32.xlu0 %v4006, 118
    %v4860 = vpop.permute.xlu0 %4859
    %4861 = vrot.lane.b32.xlu0 %v4007, 118
    %v4862 = vpop.permute.xlu0 %4861
    %v4863 = vsel %vm1140, %v4846, %v4848
    %v4864 = vsel %vm1140, %v4848, %v4850
    %v4865 = vsel %vm1140, %v4850, %v4852
    %v4866 = vsel %vm1140, %v4852, %v4854
    %v4867 = vsel %vm1140, %v4854, %v4856
    %v4868 = vsel %vm1140, %v4856, %v4858
    %v4869 = vsel %vm1140, %v4858, %v4860
    %v4870 = vsel %vm1140, %v4860, %v4862
    %v4880 = vsel %vm169, %v4844, 0
    %4882 = vmatpush.msra.mxu0 0.0
    %4883 = vmatpush.msra.mxu0 0.0
    %4884 = vmatpush.msra.mxu0 0.0
    %4885 = vmatpush.msra.mxu0 0.0
    %4886 = vmatpush.msra.mxu0 0.0
    %4887 = vmatpush.msra.mxu0 0.0
    %4888 = vmatpush.msra.mxu0 0.0
    %4889 = vmatpush.msra.mxu0 0.0
    %4890 = vmatpush.msra.mxu0 0.0
    %4891 = vmatpush.msra.mxu0 0.0
    %4892 = vmatpush.msra.mxu0 0.0
    %4893 = vmatpush.msra.mxu0 0.0
    %4894 = vmatpush.msra.mxu0 0.0
    %4895 = vmatpush.msra.mxu0 0.0
    %4896 = vmatpush.msra.mxu0 0.0
    %4897 = vmatpush.msra.mxu0 %v4863
    %4898 = vmatmul.f32.gmra.mxu0 %v4880
    %v4899 = vpop.f32.mrf.mxu0
    %v4900 = vadd.f32 0.0, %v4899
    %4901 = vdwg.mxu0
    %4902 = vmatpush.msra.mxu0 0.0
    %4903 = vmatpush.msra.mxu0 0.0
    %4904 = vmatpush.msra.mxu0 0.0
    %4905 = vmatpush.msra.mxu0 0.0
    %4906 = vmatpush.msra.mxu0 0.0
    %4907 = vmatpush.msra.mxu0 0.0
    %4908 = vmatpush.msra.mxu0 0.0
    %4909 = vmatpush.msra.mxu0 0.0
    %4910 = vmatpush.msra.mxu0 0.0
    %4911 = vmatpush.msra.mxu0 0.0
    %4912 = vmatpush.msra.mxu0 0.0
    %4913 = vmatpush.msra.mxu0 0.0
    %4914 = vmatpush.msra.mxu0 0.0
    %4915 = vmatpush.msra.mxu0 0.0
    %4916 = vmatpush.msra.mxu0 0.0
    %4917 = vmatpush.msra.mxu0 %v4864
    %4918 = vmatmul.f32.gmra.mxu0 %v4880
    %v4919 = vpop.f32.mrf.mxu0
    %v4920 = vadd.f32 0.0, %v4919
    %4921 = vdwg.mxu0
    %4922 = vmatpush.msra.mxu0 0.0
    %4923 = vmatpush.msra.mxu0 0.0
    %4924 = vmatpush.msra.mxu0 0.0
    %4925 = vmatpush.msra.mxu0 0.0
    %4926 = vmatpush.msra.mxu0 0.0
    %4927 = vmatpush.msra.mxu0 0.0
    %4928 = vmatpush.msra.mxu0 0.0
    %4929 = vmatpush.msra.mxu0 0.0
    %4930 = vmatpush.msra.mxu0 0.0
    %4931 = vmatpush.msra.mxu0 0.0
    %4932 = vmatpush.msra.mxu0 0.0
    %4933 = vmatpush.msra.mxu0 0.0
    %4934 = vmatpush.msra.mxu0 0.0
    %4935 = vmatpush.msra.mxu0 0.0
    %4936 = vmatpush.msra.mxu0 0.0
    %4937 = vmatpush.msra.mxu0 %v4865
    %4938 = vmatmul.f32.gmra.mxu0 %v4880
    %v4939 = vpop.f32.mrf.mxu0
    %v4940 = vadd.f32 0.0, %v4939
    %4941 = vdwg.mxu0
    %4942 = vmatpush.msra.mxu0 0.0
    %4943 = vmatpush.msra.mxu0 0.0
    %4944 = vmatpush.msra.mxu0 0.0
    %4945 = vmatpush.msra.mxu0 0.0
    %4946 = vmatpush.msra.mxu0 0.0
    %4947 = vmatpush.msra.mxu0 0.0
    %4948 = vmatpush.msra.mxu0 0.0
    %4949 = vmatpush.msra.mxu0 0.0
    %4950 = vmatpush.msra.mxu0 0.0
    %4951 = vmatpush.msra.mxu0 0.0
    %4952 = vmatpush.msra.mxu0 0.0
    %4953 = vmatpush.msra.mxu0 0.0
    %4954 = vmatpush.msra.mxu0 0.0
    %4955 = vmatpush.msra.mxu0 0.0
    %4956 = vmatpush.msra.mxu0 0.0
    %4957 = vmatpush.msra.mxu0 %v4866
    %4958 = vmatmul.f32.gmra.mxu0 %v4880
    %v4959 = vpop.f32.mrf.mxu0
    %v4960 = vadd.f32 0.0, %v4959
    %4961 = vdwg.mxu0
    %4962 = vmatpush.msra.mxu0 0.0
    %4963 = vmatpush.msra.mxu0 0.0
    %4964 = vmatpush.msra.mxu0 0.0
    %4965 = vmatpush.msra.mxu0 0.0
    %4966 = vmatpush.msra.mxu0 0.0
    %4967 = vmatpush.msra.mxu0 0.0
    %4968 = vmatpush.msra.mxu0 0.0
    %4969 = vmatpush.msra.mxu0 0.0
    %4970 = vmatpush.msra.mxu0 0.0
    %4971 = vmatpush.msra.mxu0 0.0
    %4972 = vmatpush.msra.mxu0 0.0
    %4973 = vmatpush.msra.mxu0 0.0
    %4974 = vmatpush.msra.mxu0 0.0
    %4975 = vmatpush.msra.mxu0 0.0
    %4976 = vmatpush.msra.mxu0 0.0
    %4977 = vmatpush.msra.mxu0 %v4867
    %4978 = vmatmul.f32.gmra.mxu0 %v4880
    %v4979 = vpop.f32.mrf.mxu0
    %v4980 = vadd.f32 0.0, %v4979
    %4981 = vdwg.mxu0
    %4982 = vmatpush.msra.mxu0 0.0
    %4983 = vmatpush.msra.mxu0 0.0
    %4984 = vmatpush.msra.mxu0 0.0
    %4985 = vmatpush.msra.mxu0 0.0
    %4986 = vmatpush.msra.mxu0 0.0
    %4987 = vmatpush.msra.mxu0 0.0
    %4988 = vmatpush.msra.mxu0 0.0
    %4989 = vmatpush.msra.mxu0 0.0
    %4990 = vmatpush.msra.mxu0 0.0
    %4991 = vmatpush.msra.mxu0 0.0
    %4992 = vmatpush.msra.mxu0 0.0
    %4993 = vmatpush.msra.mxu0 0.0
    %4994 = vmatpush.msra.mxu0 0.0
    %4995 = vmatpush.msra.mxu0 0.0
    %4996 = vmatpush.msra.mxu0 0.0
    %4997 = vmatpush.msra.mxu0 %v4868
    %4998 = vmatmul.f32.gmra.mxu0 %v4880
    %v4999 = vpop.f32.mrf.mxu0
    %v5000 = vadd.f32 0.0, %v4999
    %5001 = vdwg.mxu0
    %5002 = vmatpush.msra.mxu0 0.0
    %5003 = vmatpush.msra.mxu0 0.0
    %5004 = vmatpush.msra.mxu0 0.0
    %5005 = vmatpush.msra.mxu0 0.0
    %5006 = vmatpush.msra.mxu0 0.0
    %5007 = vmatpush.msra.mxu0 0.0
    %5008 = vmatpush.msra.mxu0 0.0
    %5009 = vmatpush.msra.mxu0 0.0
    %5010 = vmatpush.msra.mxu0 0.0
    %5011 = vmatpush.msra.mxu0 0.0
    %5012 = vmatpush.msra.mxu0 0.0
    %5013 = vmatpush.msra.mxu0 0.0
    %5014 = vmatpush.msra.mxu0 0.0
    %5015 = vmatpush.msra.mxu0 0.0
    %5016 = vmatpush.msra.mxu0 0.0
    %5017 = vmatpush.msra.mxu0 %v4869
    %5018 = vmatmul.f32.gmra.mxu0 %v4880
    %v5019 = vpop.f32.mrf.mxu0
    %v5020 = vadd.f32 0.0, %v5019
    %5021 = vdwg.mxu0
    %5022 = vmatpush.msra.mxu0 0.0
    %5023 = vmatpush.msra.mxu0 0.0
    %5024 = vmatpush.msra.mxu0 0.0
    %5025 = vmatpush.msra.mxu0 0.0
    %5026 = vmatpush.msra.mxu0 0.0
    %5027 = vmatpush.msra.mxu0 0.0
    %5028 = vmatpush.msra.mxu0 0.0
    %5029 = vmatpush.msra.mxu0 0.0
    %5030 = vmatpush.msra.mxu0 0.0
    %5031 = vmatpush.msra.mxu0 0.0
    %5032 = vmatpush.msra.mxu0 0.0
    %5033 = vmatpush.msra.mxu0 0.0
    %5034 = vmatpush.msra.mxu0 0.0
    %5035 = vmatpush.msra.mxu0 0.0
    %5036 = vmatpush.msra.mxu0 0.0
    %5037 = vmatpush.msra.mxu0 %v4870
    %5038 = vmatmul.f32.gmra.mxu0 %v4880
    %v5039 = vpop.f32.mrf.mxu0
    %v5040 = vadd.f32 0.0, %v5039
    %5041 = vdwg.mxu0
    %v5042 = vadd.f32 %v4835, %v4900
    %v5043 = vadd.f32 %v4836, %v4920
    %v5044 = vadd.f32 %v4837, %v4940
    %v5045 = vadd.f32 %v4838, %v4960
    %v5046 = vadd.f32 %v4839, %v4980
    %v5047 = vadd.f32 %v4840, %v5000
    %v5048 = vadd.f32 %v4841, %v5020
    %v5049 = vadd.f32 %v4842, %v5040
    %s5050 = scalar_lea.vmem %s3, 192
    %v5051 = vld [vmem:[%s5050] sm:$0xff]
    %5052 = vrot.lane.b32.xlu0 %v3999, 112
    %v5053 = vpop.permute.xlu0 %5052
    %5054 = vrot.lane.b32.xlu0 %v4000, 112
    %v5055 = vpop.permute.xlu0 %5054
    %5056 = vrot.lane.b32.xlu0 %v4001, 112
    %v5057 = vpop.permute.xlu0 %5056
    %5058 = vrot.lane.b32.xlu0 %v4002, 112
    %v5059 = vpop.permute.xlu0 %5058
    %5060 = vrot.lane.b32.xlu0 %v4003, 112
    %v5061 = vpop.permute.xlu0 %5060
    %5062 = vrot.lane.b32.xlu0 %v4004, 112
    %v5063 = vpop.permute.xlu0 %5062
    %5064 = vrot.lane.b32.xlu0 %v4005, 112
    %v5065 = vpop.permute.xlu0 %5064
    %5066 = vrot.lane.b32.xlu0 %v4006, 112
    %v5067 = vpop.permute.xlu0 %5066
    %5068 = vrot.lane.b32.xlu0 %v4007, 112
    %v5069 = vpop.permute.xlu0 %5068
    %v5070 = vsel %vm1348, %v5053, %v5055
    %v5071 = vsel %vm1348, %v5055, %v5057
    %v5072 = vsel %vm1348, %v5057, %v5059
    %v5073 = vsel %vm1348, %v5059, %v5061
    %v5074 = vsel %vm1348, %v5061, %v5063
    %v5075 = vsel %vm1348, %v5063, %v5065
    %v5076 = vsel %vm1348, %v5065, %v5067
    %v5077 = vsel %vm1348, %v5067, %v5069
    %v5087 = vsel %vm169, %v5051, 0
    %5089 = vmatpush.msra.mxu0 0.0
    %5090 = vmatpush.msra.mxu0 0.0
    %5091 = vmatpush.msra.mxu0 0.0
    %5092 = vmatpush.msra.mxu0 0.0
    %5093 = vmatpush.msra.mxu0 0.0
    %5094 = vmatpush.msra.mxu0 0.0
    %5095 = vmatpush.msra.mxu0 0.0
    %5096 = vmatpush.msra.mxu0 0.0
    %5097 = vmatpush.msra.mxu0 0.0
    %5098 = vmatpush.msra.mxu0 0.0
    %5099 = vmatpush.msra.mxu0 0.0
    %5100 = vmatpush.msra.mxu0 0.0
    %5101 = vmatpush.msra.mxu0 0.0
    %5102 = vmatpush.msra.mxu0 0.0
    %5103 = vmatpush.msra.mxu0 0.0
    %5104 = vmatpush.msra.mxu0 %v5070
    %5105 = vmatmul.f32.gmra.mxu0 %v5087
    %v5106 = vpop.f32.mrf.mxu0
    %v5107 = vadd.f32 0.0, %v5106
    %5108 = vdwg.mxu0
    %5109 = vmatpush.msra.mxu0 0.0
    %5110 = vmatpush.msra.mxu0 0.0
    %5111 = vmatpush.msra.mxu0 0.0
    %5112 = vmatpush.msra.mxu0 0.0
    %5113 = vmatpush.msra.mxu0 0.0
    %5114 = vmatpush.msra.mxu0 0.0
    %5115 = vmatpush.msra.mxu0 0.0
    %5116 = vmatpush.msra.mxu0 0.0
    %5117 = vmatpush.msra.mxu0 0.0
    %5118 = vmatpush.msra.mxu0 0.0
    %5119 = vmatpush.msra.mxu0 0.0
    %5120 = vmatpush.msra.mxu0 0.0
    %5121 = vmatpush.msra.mxu0 0.0
    %5122 = vmatpush.msra.mxu0 0.0
    %5123 = vmatpush.msra.mxu0 0.0
    %5124 = vmatpush.msra.mxu0 %v5071
    %5125 = vmatmul.f32.gmra.mxu0 %v5087
    %v5126 = vpop.f32.mrf.mxu0
    %v5127 = vadd.f32 0.0, %v5126
    %5128 = vdwg.mxu0
    %5129 = vmatpush.msra.mxu0 0.0
    %5130 = vmatpush.msra.mxu0 0.0
    %5131 = vmatpush.msra.mxu0 0.0
    %5132 = vmatpush.msra.mxu0 0.0
    %5133 = vmatpush.msra.mxu0 0.0
    %5134 = vmatpush.msra.mxu0 0.0
    %5135 = vmatpush.msra.mxu0 0.0
    %5136 = vmatpush.msra.mxu0 0.0
    %5137 = vmatpush.msra.mxu0 0.0
    %5138 = vmatpush.msra.mxu0 0.0
    %5139 = vmatpush.msra.mxu0 0.0
    %5140 = vmatpush.msra.mxu0 0.0
    %5141 = vmatpush.msra.mxu0 0.0
    %5142 = vmatpush.msra.mxu0 0.0
    %5143 = vmatpush.msra.mxu0 0.0
    %5144 = vmatpush.msra.mxu0 %v5072
    %5145 = vmatmul.f32.gmra.mxu0 %v5087
    %v5146 = vpop.f32.mrf.mxu0
    %v5147 = vadd.f32 0.0, %v5146
    %5148 = vdwg.mxu0
    %5149 = vmatpush.msra.mxu0 0.0
    %5150 = vmatpush.msra.mxu0 0.0
    %5151 = vmatpush.msra.mxu0 0.0
    %5152 = vmatpush.msra.mxu0 0.0
    %5153 = vmatpush.msra.mxu0 0.0
    %5154 = vmatpush.msra.mxu0 0.0
    %5155 = vmatpush.msra.mxu0 0.0
    %5156 = vmatpush.msra.mxu0 0.0
    %5157 = vmatpush.msra.mxu0 0.0
    %5158 = vmatpush.msra.mxu0 0.0
    %5159 = vmatpush.msra.mxu0 0.0
    %5160 = vmatpush.msra.mxu0 0.0
    %5161 = vmatpush.msra.mxu0 0.0
    %5162 = vmatpush.msra.mxu0 0.0
    %5163 = vmatpush.msra.mxu0 0.0
    %5164 = vmatpush.msra.mxu0 %v5073
    %5165 = vmatmul.f32.gmra.mxu0 %v5087
    %v5166 = vpop.f32.mrf.mxu0
    %v5167 = vadd.f32 0.0, %v5166
    %5168 = vdwg.mxu0
    %5169 = vmatpush.msra.mxu0 0.0
    %5170 = vmatpush.msra.mxu0 0.0
    %5171 = vmatpush.msra.mxu0 0.0
    %5172 = vmatpush.msra.mxu0 0.0
    %5173 = vmatpush.msra.mxu0 0.0
    %5174 = vmatpush.msra.mxu0 0.0
    %5175 = vmatpush.msra.mxu0 0.0
    %5176 = vmatpush.msra.mxu0 0.0
    %5177 = vmatpush.msra.mxu0 0.0
    %5178 = vmatpush.msra.mxu0 0.0
    %5179 = vmatpush.msra.mxu0 0.0
    %5180 = vmatpush.msra.mxu0 0.0
    %5181 = vmatpush.msra.mxu0 0.0
    %5182 = vmatpush.msra.mxu0 0.0
    %5183 = vmatpush.msra.mxu0 0.0
    %5184 = vmatpush.msra.mxu0 %v5074
    %5185 = vmatmul.f32.gmra.mxu0 %v5087
    %v5186 = vpop.f32.mrf.mxu0
    %v5187 = vadd.f32 0.0, %v5186
    %5188 = vdwg.mxu0
    %5189 = vmatpush.msra.mxu0 0.0
    %5190 = vmatpush.msra.mxu0 0.0
    %5191 = vmatpush.msra.mxu0 0.0
    %5192 = vmatpush.msra.mxu0 0.0
    %5193 = vmatpush.msra.mxu0 0.0
    %5194 = vmatpush.msra.mxu0 0.0
    %5195 = vmatpush.msra.mxu0 0.0
    %5196 = vmatpush.msra.mxu0 0.0
    %5197 = vmatpush.msra.mxu0 0.0
    %5198 = vmatpush.msra.mxu0 0.0
    %5199 = vmatpush.msra.mxu0 0.0
    %5200 = vmatpush.msra.mxu0 0.0
    %5201 = vmatpush.msra.mxu0 0.0
    %5202 = vmatpush.msra.mxu0 0.0
    %5203 = vmatpush.msra.mxu0 0.0
    %5204 = vmatpush.msra.mxu0 %v5075
    %5205 = vmatmul.f32.gmra.mxu0 %v5087
    %v5206 = vpop.f32.mrf.mxu0
    %v5207 = vadd.f32 0.0, %v5206
    %5208 = vdwg.mxu0
    %5209 = vmatpush.msra.mxu0 0.0
    %5210 = vmatpush.msra.mxu0 0.0
    %5211 = vmatpush.msra.mxu0 0.0
    %5212 = vmatpush.msra.mxu0 0.0
    %5213 = vmatpush.msra.mxu0 0.0
    %5214 = vmatpush.msra.mxu0 0.0
    %5215 = vmatpush.msra.mxu0 0.0
    %5216 = vmatpush.msra.mxu0 0.0
    %5217 = vmatpush.msra.mxu0 0.0
    %5218 = vmatpush.msra.mxu0 0.0
    %5219 = vmatpush.msra.mxu0 0.0
    %5220 = vmatpush.msra.mxu0 0.0
    %5221 = vmatpush.msra.mxu0 0.0
    %5222 = vmatpush.msra.mxu0 0.0
    %5223 = vmatpush.msra.mxu0 0.0
    %5224 = vmatpush.msra.mxu0 %v5076
    %5225 = vmatmul.f32.gmra.mxu0 %v5087
    %v5226 = vpop.f32.mrf.mxu0
    %v5227 = vadd.f32 0.0, %v5226
    %5228 = vdwg.mxu0
    %5229 = vmatpush.msra.mxu0 0.0
    %5230 = vmatpush.msra.mxu0 0.0
    %5231 = vmatpush.msra.mxu0 0.0
    %5232 = vmatpush.msra.mxu0 0.0
    %5233 = vmatpush.msra.mxu0 0.0
    %5234 = vmatpush.msra.mxu0 0.0
    %5235 = vmatpush.msra.mxu0 0.0
    %5236 = vmatpush.msra.mxu0 0.0
    %5237 = vmatpush.msra.mxu0 0.0
    %5238 = vmatpush.msra.mxu0 0.0
    %5239 = vmatpush.msra.mxu0 0.0
    %5240 = vmatpush.msra.mxu0 0.0
    %5241 = vmatpush.msra.mxu0 0.0
    %5242 = vmatpush.msra.mxu0 0.0
    %5243 = vmatpush.msra.mxu0 0.0
    %5244 = vmatpush.msra.mxu0 %v5077
    %5245 = vmatmul.f32.gmra.mxu0 %v5087
    %v5246 = vpop.f32.mrf.mxu0
    %v5247 = vadd.f32 0.0, %v5246
    %5248 = vdwg.mxu0
    %v5249 = vadd.f32 %v5042, %v5107
    %v5250 = vadd.f32 %v5043, %v5127
    %v5251 = vadd.f32 %v5044, %v5147
    %v5252 = vadd.f32 %v5045, %v5167
    %v5253 = vadd.f32 %v5046, %v5187
    %v5254 = vadd.f32 %v5047, %v5207
    %v5255 = vadd.f32 %v5048, %v5227
    %v5256 = vadd.f32 %v5049, %v5247
    %s5257 = scalar_lea.vmem %s3, 200
    %v5258 = vld [vmem:[%s5257] sm:$0xff]
    %5259 = vrot.lane.b32.xlu0 %v3999, 111
    %v5260 = vpop.permute.xlu0 %5259
    %5261 = vrot.lane.b32.xlu0 %v4000, 111
    %v5262 = vpop.permute.xlu0 %5261
    %5263 = vrot.lane.b32.xlu0 %v4001, 111
    %v5264 = vpop.permute.xlu0 %5263
    %5265 = vrot.lane.b32.xlu0 %v4002, 111
    %v5266 = vpop.permute.xlu0 %5265
    %5267 = vrot.lane.b32.xlu0 %v4003, 111
    %v5268 = vpop.permute.xlu0 %5267
    %5269 = vrot.lane.b32.xlu0 %v4004, 111
    %v5270 = vpop.permute.xlu0 %5269
    %5271 = vrot.lane.b32.xlu0 %v4005, 111
    %v5272 = vpop.permute.xlu0 %5271
    %5273 = vrot.lane.b32.xlu0 %v4006, 111
    %v5274 = vpop.permute.xlu0 %5273
    %5275 = vrot.lane.b32.xlu0 %v4007, 111
    %v5276 = vpop.permute.xlu0 %5275
    %v5277 = vsel %vm1556, %v5260, %v5262
    %v5278 = vsel %vm1556, %v5262, %v5264
    %v5279 = vsel %vm1556, %v5264, %v5266
    %v5280 = vsel %vm1556, %v5266, %v5268
    %v5281 = vsel %vm1556, %v5268, %v5270
    %v5282 = vsel %vm1556, %v5270, %v5272
    %v5283 = vsel %vm1556, %v5272, %v5274
    %v5284 = vsel %vm1556, %v5274, %v5276
    %v5294 = vsel %vm169, %v5258, 0
    %5296 = vmatpush.msra.mxu0 0.0
    %5297 = vmatpush.msra.mxu0 0.0
    %5298 = vmatpush.msra.mxu0 0.0
    %5299 = vmatpush.msra.mxu0 0.0
    %5300 = vmatpush.msra.mxu0 0.0
    %5301 = vmatpush.msra.mxu0 0.0
    %5302 = vmatpush.msra.mxu0 0.0
    %5303 = vmatpush.msra.mxu0 0.0
    %5304 = vmatpush.msra.mxu0 0.0
    %5305 = vmatpush.msra.mxu0 0.0
    %5306 = vmatpush.msra.mxu0 0.0
    %5307 = vmatpush.msra.mxu0 0.0
    %5308 = vmatpush.msra.mxu0 0.0
    %5309 = vmatpush.msra.mxu0 0.0
    %5310 = vmatpush.msra.mxu0 0.0
    %5311 = vmatpush.msra.mxu0 %v5277
    %5312 = vmatmul.f32.gmra.mxu0 %v5294
    %v5313 = vpop.f32.mrf.mxu0
    %v5314 = vadd.f32 0.0, %v5313
    %5315 = vdwg.mxu0
    %5316 = vmatpush.msra.mxu0 0.0
    %5317 = vmatpush.msra.mxu0 0.0
    %5318 = vmatpush.msra.mxu0 0.0
    %5319 = vmatpush.msra.mxu0 0.0
    %5320 = vmatpush.msra.mxu0 0.0
    %5321 = vmatpush.msra.mxu0 0.0
    %5322 = vmatpush.msra.mxu0 0.0
    %5323 = vmatpush.msra.mxu0 0.0
    %5324 = vmatpush.msra.mxu0 0.0
    %5325 = vmatpush.msra.mxu0 0.0
    %5326 = vmatpush.msra.mxu0 0.0
    %5327 = vmatpush.msra.mxu0 0.0
    %5328 = vmatpush.msra.mxu0 0.0
    %5329 = vmatpush.msra.mxu0 0.0
    %5330 = vmatpush.msra.mxu0 0.0
    %5331 = vmatpush.msra.mxu0 %v5278
    %5332 = vmatmul.f32.gmra.mxu0 %v5294
    %v5333 = vpop.f32.mrf.mxu0
    %v5334 = vadd.f32 0.0, %v5333
    %5335 = vdwg.mxu0
    %5336 = vmatpush.msra.mxu0 0.0
    %5337 = vmatpush.msra.mxu0 0.0
    %5338 = vmatpush.msra.mxu0 0.0
    %5339 = vmatpush.msra.mxu0 0.0
    %5340 = vmatpush.msra.mxu0 0.0
    %5341 = vmatpush.msra.mxu0 0.0
    %5342 = vmatpush.msra.mxu0 0.0
    %5343 = vmatpush.msra.mxu0 0.0
    %5344 = vmatpush.msra.mxu0 0.0
    %5345 = vmatpush.msra.mxu0 0.0
    %5346 = vmatpush.msra.mxu0 0.0
    %5347 = vmatpush.msra.mxu0 0.0
    %5348 = vmatpush.msra.mxu0 0.0
    %5349 = vmatpush.msra.mxu0 0.0
    %5350 = vmatpush.msra.mxu0 0.0
    %5351 = vmatpush.msra.mxu0 %v5279
    %5352 = vmatmul.f32.gmra.mxu0 %v5294
    %v5353 = vpop.f32.mrf.mxu0
    %v5354 = vadd.f32 0.0, %v5353
    %5355 = vdwg.mxu0
    %5356 = vmatpush.msra.mxu0 0.0
    %5357 = vmatpush.msra.mxu0 0.0
    %5358 = vmatpush.msra.mxu0 0.0
    %5359 = vmatpush.msra.mxu0 0.0
    %5360 = vmatpush.msra.mxu0 0.0
    %5361 = vmatpush.msra.mxu0 0.0
    %5362 = vmatpush.msra.mxu0 0.0
    %5363 = vmatpush.msra.mxu0 0.0
    %5364 = vmatpush.msra.mxu0 0.0
    %5365 = vmatpush.msra.mxu0 0.0
    %5366 = vmatpush.msra.mxu0 0.0
    %5367 = vmatpush.msra.mxu0 0.0
    %5368 = vmatpush.msra.mxu0 0.0
    %5369 = vmatpush.msra.mxu0 0.0
    %5370 = vmatpush.msra.mxu0 0.0
    %5371 = vmatpush.msra.mxu0 %v5280
    %5372 = vmatmul.f32.gmra.mxu0 %v5294
    %v5373 = vpop.f32.mrf.mxu0
    %v5374 = vadd.f32 0.0, %v5373
    %5375 = vdwg.mxu0
    %5376 = vmatpush.msra.mxu0 0.0
    %5377 = vmatpush.msra.mxu0 0.0
    %5378 = vmatpush.msra.mxu0 0.0
    %5379 = vmatpush.msra.mxu0 0.0
    %5380 = vmatpush.msra.mxu0 0.0
    %5381 = vmatpush.msra.mxu0 0.0
    %5382 = vmatpush.msra.mxu0 0.0
    %5383 = vmatpush.msra.mxu0 0.0
    %5384 = vmatpush.msra.mxu0 0.0
    %5385 = vmatpush.msra.mxu0 0.0
    %5386 = vmatpush.msra.mxu0 0.0
    %5387 = vmatpush.msra.mxu0 0.0
    %5388 = vmatpush.msra.mxu0 0.0
    %5389 = vmatpush.msra.mxu0 0.0
    %5390 = vmatpush.msra.mxu0 0.0
    %5391 = vmatpush.msra.mxu0 %v5281
    %5392 = vmatmul.f32.gmra.mxu0 %v5294
    %v5393 = vpop.f32.mrf.mxu0
    %v5394 = vadd.f32 0.0, %v5393
    %5395 = vdwg.mxu0
    %5396 = vmatpush.msra.mxu0 0.0
    %5397 = vmatpush.msra.mxu0 0.0
    %5398 = vmatpush.msra.mxu0 0.0
    %5399 = vmatpush.msra.mxu0 0.0
    %5400 = vmatpush.msra.mxu0 0.0
    %5401 = vmatpush.msra.mxu0 0.0
    %5402 = vmatpush.msra.mxu0 0.0
    %5403 = vmatpush.msra.mxu0 0.0
    %5404 = vmatpush.msra.mxu0 0.0
    %5405 = vmatpush.msra.mxu0 0.0
    %5406 = vmatpush.msra.mxu0 0.0
    %5407 = vmatpush.msra.mxu0 0.0
    %5408 = vmatpush.msra.mxu0 0.0
    %5409 = vmatpush.msra.mxu0 0.0
    %5410 = vmatpush.msra.mxu0 0.0
    %5411 = vmatpush.msra.mxu0 %v5282
    %5412 = vmatmul.f32.gmra.mxu0 %v5294
    %v5413 = vpop.f32.mrf.mxu0
    %v5414 = vadd.f32 0.0, %v5413
    %5415 = vdwg.mxu0
    %5416 = vmatpush.msra.mxu0 0.0
    %5417 = vmatpush.msra.mxu0 0.0
    %5418 = vmatpush.msra.mxu0 0.0
    %5419 = vmatpush.msra.mxu0 0.0
    %5420 = vmatpush.msra.mxu0 0.0
    %5421 = vmatpush.msra.mxu0 0.0
    %5422 = vmatpush.msra.mxu0 0.0
    %5423 = vmatpush.msra.mxu0 0.0
    %5424 = vmatpush.msra.mxu0 0.0
    %5425 = vmatpush.msra.mxu0 0.0
    %5426 = vmatpush.msra.mxu0 0.0
    %5427 = vmatpush.msra.mxu0 0.0
    %5428 = vmatpush.msra.mxu0 0.0
    %5429 = vmatpush.msra.mxu0 0.0
    %5430 = vmatpush.msra.mxu0 0.0
    %5431 = vmatpush.msra.mxu0 %v5283
    %5432 = vmatmul.f32.gmra.mxu0 %v5294
    %v5433 = vpop.f32.mrf.mxu0
    %v5434 = vadd.f32 0.0, %v5433
    %5435 = vdwg.mxu0
    %5436 = vmatpush.msra.mxu0 0.0
    %5437 = vmatpush.msra.mxu0 0.0
    %5438 = vmatpush.msra.mxu0 0.0
    %5439 = vmatpush.msra.mxu0 0.0
    %5440 = vmatpush.msra.mxu0 0.0
    %5441 = vmatpush.msra.mxu0 0.0
    %5442 = vmatpush.msra.mxu0 0.0
    %5443 = vmatpush.msra.mxu0 0.0
    %5444 = vmatpush.msra.mxu0 0.0
    %5445 = vmatpush.msra.mxu0 0.0
    %5446 = vmatpush.msra.mxu0 0.0
    %5447 = vmatpush.msra.mxu0 0.0
    %5448 = vmatpush.msra.mxu0 0.0
    %5449 = vmatpush.msra.mxu0 0.0
    %5450 = vmatpush.msra.mxu0 0.0
    %5451 = vmatpush.msra.mxu0 %v5284
    %5452 = vmatmul.f32.gmra.mxu0 %v5294
    %v5453 = vpop.f32.mrf.mxu0
    %v5454 = vadd.f32 0.0, %v5453
    %5455 = vdwg.mxu0
    %v5456 = vadd.f32 %v5249, %v5314
    %v5457 = vadd.f32 %v5250, %v5334
    %v5458 = vadd.f32 %v5251, %v5354
    %v5459 = vadd.f32 %v5252, %v5374
    %v5460 = vadd.f32 %v5253, %v5394
    %v5461 = vadd.f32 %v5254, %v5414
    %v5462 = vadd.f32 %v5255, %v5434
    %v5463 = vadd.f32 %v5256, %v5454
    %s5464 = scalar_lea.vmem %s3, 208
    %v5465 = vld [vmem:[%s5464] sm:$0xff]
    %5466 = vrot.lane.b32.xlu0 %v3999, 110
    %v5467 = vpop.permute.xlu0 %5466
    %5468 = vrot.lane.b32.xlu0 %v4000, 110
    %v5469 = vpop.permute.xlu0 %5468
    %5470 = vrot.lane.b32.xlu0 %v4001, 110
    %v5471 = vpop.permute.xlu0 %5470
    %5472 = vrot.lane.b32.xlu0 %v4002, 110
    %v5473 = vpop.permute.xlu0 %5472
    %5474 = vrot.lane.b32.xlu0 %v4003, 110
    %v5475 = vpop.permute.xlu0 %5474
    %5476 = vrot.lane.b32.xlu0 %v4004, 110
    %v5477 = vpop.permute.xlu0 %5476
    %5478 = vrot.lane.b32.xlu0 %v4005, 110
    %v5479 = vpop.permute.xlu0 %5478
    %5480 = vrot.lane.b32.xlu0 %v4006, 110
    %v5481 = vpop.permute.xlu0 %5480
    %5482 = vrot.lane.b32.xlu0 %v4007, 110
    %v5483 = vpop.permute.xlu0 %5482
    %v5484 = vsel %vm1764, %v5467, %v5469
    %v5485 = vsel %vm1764, %v5469, %v5471
    %v5486 = vsel %vm1764, %v5471, %v5473
    %v5487 = vsel %vm1764, %v5473, %v5475
    %v5488 = vsel %vm1764, %v5475, %v5477
    %v5489 = vsel %vm1764, %v5477, %v5479
    %v5490 = vsel %vm1764, %v5479, %v5481
    %v5491 = vsel %vm1764, %v5481, %v5483
    %v5501 = vsel %vm169, %v5465, 0
    %5503 = vmatpush.msra.mxu0 0.0
    %5504 = vmatpush.msra.mxu0 0.0
    %5505 = vmatpush.msra.mxu0 0.0
    %5506 = vmatpush.msra.mxu0 0.0
    %5507 = vmatpush.msra.mxu0 0.0
    %5508 = vmatpush.msra.mxu0 0.0
    %5509 = vmatpush.msra.mxu0 0.0
    %5510 = vmatpush.msra.mxu0 0.0
    %5511 = vmatpush.msra.mxu0 0.0
    %5512 = vmatpush.msra.mxu0 0.0
    %5513 = vmatpush.msra.mxu0 0.0
    %5514 = vmatpush.msra.mxu0 0.0
    %5515 = vmatpush.msra.mxu0 0.0
    %5516 = vmatpush.msra.mxu0 0.0
    %5517 = vmatpush.msra.mxu0 0.0
    %5518 = vmatpush.msra.mxu0 %v5484
    %5519 = vmatmul.f32.gmra.mxu0 %v5501
    %v5520 = vpop.f32.mrf.mxu0
    %v5521 = vadd.f32 0.0, %v5520
    %5522 = vdwg.mxu0
    %5523 = vmatpush.msra.mxu0 0.0
    %5524 = vmatpush.msra.mxu0 0.0
    %5525 = vmatpush.msra.mxu0 0.0
    %5526 = vmatpush.msra.mxu0 0.0
    %5527 = vmatpush.msra.mxu0 0.0
    %5528 = vmatpush.msra.mxu0 0.0
    %5529 = vmatpush.msra.mxu0 0.0
    %5530 = vmatpush.msra.mxu0 0.0
    %5531 = vmatpush.msra.mxu0 0.0
    %5532 = vmatpush.msra.mxu0 0.0
    %5533 = vmatpush.msra.mxu0 0.0
    %5534 = vmatpush.msra.mxu0 0.0
    %5535 = vmatpush.msra.mxu0 0.0
    %5536 = vmatpush.msra.mxu0 0.0
    %5537 = vmatpush.msra.mxu0 0.0
    %5538 = vmatpush.msra.mxu0 %v5485
    %5539 = vmatmul.f32.gmra.mxu0 %v5501
    %v5540 = vpop.f32.mrf.mxu0
    %v5541 = vadd.f32 0.0, %v5540
    %5542 = vdwg.mxu0
    %5543 = vmatpush.msra.mxu0 0.0
    %5544 = vmatpush.msra.mxu0 0.0
    %5545 = vmatpush.msra.mxu0 0.0
    %5546 = vmatpush.msra.mxu0 0.0
    %5547 = vmatpush.msra.mxu0 0.0
    %5548 = vmatpush.msra.mxu0 0.0
    %5549 = vmatpush.msra.mxu0 0.0
    %5550 = vmatpush.msra.mxu0 0.0
    %5551 = vmatpush.msra.mxu0 0.0
    %5552 = vmatpush.msra.mxu0 0.0
    %5553 = vmatpush.msra.mxu0 0.0
    %5554 = vmatpush.msra.mxu0 0.0
    %5555 = vmatpush.msra.mxu0 0.0
    %5556 = vmatpush.msra.mxu0 0.0
    %5557 = vmatpush.msra.mxu0 0.0
    %5558 = vmatpush.msra.mxu0 %v5486
    %5559 = vmatmul.f32.gmra.mxu0 %v5501
    %v5560 = vpop.f32.mrf.mxu0
    %v5561 = vadd.f32 0.0, %v5560
    %5562 = vdwg.mxu0
    %5563 = vmatpush.msra.mxu0 0.0
    %5564 = vmatpush.msra.mxu0 0.0
    %5565 = vmatpush.msra.mxu0 0.0
    %5566 = vmatpush.msra.mxu0 0.0
    %5567 = vmatpush.msra.mxu0 0.0
    %5568 = vmatpush.msra.mxu0 0.0
    %5569 = vmatpush.msra.mxu0 0.0
    %5570 = vmatpush.msra.mxu0 0.0
    %5571 = vmatpush.msra.mxu0 0.0
    %5572 = vmatpush.msra.mxu0 0.0
    %5573 = vmatpush.msra.mxu0 0.0
    %5574 = vmatpush.msra.mxu0 0.0
    %5575 = vmatpush.msra.mxu0 0.0
    %5576 = vmatpush.msra.mxu0 0.0
    %5577 = vmatpush.msra.mxu0 0.0
    %5578 = vmatpush.msra.mxu0 %v5487
    %5579 = vmatmul.f32.gmra.mxu0 %v5501
    %v5580 = vpop.f32.mrf.mxu0
    %v5581 = vadd.f32 0.0, %v5580
    %5582 = vdwg.mxu0
    %5583 = vmatpush.msra.mxu0 0.0
    %5584 = vmatpush.msra.mxu0 0.0
    %5585 = vmatpush.msra.mxu0 0.0
    %5586 = vmatpush.msra.mxu0 0.0
    %5587 = vmatpush.msra.mxu0 0.0
    %5588 = vmatpush.msra.mxu0 0.0
    %5589 = vmatpush.msra.mxu0 0.0
    %5590 = vmatpush.msra.mxu0 0.0
    %5591 = vmatpush.msra.mxu0 0.0
    %5592 = vmatpush.msra.mxu0 0.0
    %5593 = vmatpush.msra.mxu0 0.0
    %5594 = vmatpush.msra.mxu0 0.0
    %5595 = vmatpush.msra.mxu0 0.0
    %5596 = vmatpush.msra.mxu0 0.0
    %5597 = vmatpush.msra.mxu0 0.0
    %5598 = vmatpush.msra.mxu0 %v5488
    %5599 = vmatmul.f32.gmra.mxu0 %v5501
    %v5600 = vpop.f32.mrf.mxu0
    %v5601 = vadd.f32 0.0, %v5600
    %5602 = vdwg.mxu0
    %5603 = vmatpush.msra.mxu0 0.0
    %5604 = vmatpush.msra.mxu0 0.0
    %5605 = vmatpush.msra.mxu0 0.0
    %5606 = vmatpush.msra.mxu0 0.0
    %5607 = vmatpush.msra.mxu0 0.0
    %5608 = vmatpush.msra.mxu0 0.0
    %5609 = vmatpush.msra.mxu0 0.0
    %5610 = vmatpush.msra.mxu0 0.0
    %5611 = vmatpush.msra.mxu0 0.0
    %5612 = vmatpush.msra.mxu0 0.0
    %5613 = vmatpush.msra.mxu0 0.0
    %5614 = vmatpush.msra.mxu0 0.0
    %5615 = vmatpush.msra.mxu0 0.0
    %5616 = vmatpush.msra.mxu0 0.0
    %5617 = vmatpush.msra.mxu0 0.0
    %5618 = vmatpush.msra.mxu0 %v5489
    %5619 = vmatmul.f32.gmra.mxu0 %v5501
    %v5620 = vpop.f32.mrf.mxu0
    %v5621 = vadd.f32 0.0, %v5620
    %5622 = vdwg.mxu0
    %5623 = vmatpush.msra.mxu0 0.0
    %5624 = vmatpush.msra.mxu0 0.0
    %5625 = vmatpush.msra.mxu0 0.0
    %5626 = vmatpush.msra.mxu0 0.0
    %5627 = vmatpush.msra.mxu0 0.0
    %5628 = vmatpush.msra.mxu0 0.0
    %5629 = vmatpush.msra.mxu0 0.0
    %5630 = vmatpush.msra.mxu0 0.0
    %5631 = vmatpush.msra.mxu0 0.0
    %5632 = vmatpush.msra.mxu0 0.0
    %5633 = vmatpush.msra.mxu0 0.0
    %5634 = vmatpush.msra.mxu0 0.0
    %5635 = vmatpush.msra.mxu0 0.0
    %5636 = vmatpush.msra.mxu0 0.0
    %5637 = vmatpush.msra.mxu0 0.0
    %5638 = vmatpush.msra.mxu0 %v5490
    %5639 = vmatmul.f32.gmra.mxu0 %v5501
    %v5640 = vpop.f32.mrf.mxu0
    %v5641 = vadd.f32 0.0, %v5640
    %5642 = vdwg.mxu0
    %5643 = vmatpush.msra.mxu0 0.0
    %5644 = vmatpush.msra.mxu0 0.0
    %5645 = vmatpush.msra.mxu0 0.0
    %5646 = vmatpush.msra.mxu0 0.0
    %5647 = vmatpush.msra.mxu0 0.0
    %5648 = vmatpush.msra.mxu0 0.0
    %5649 = vmatpush.msra.mxu0 0.0
    %5650 = vmatpush.msra.mxu0 0.0
    %5651 = vmatpush.msra.mxu0 0.0
    %5652 = vmatpush.msra.mxu0 0.0
    %5653 = vmatpush.msra.mxu0 0.0
    %5654 = vmatpush.msra.mxu0 0.0
    %5655 = vmatpush.msra.mxu0 0.0
    %5656 = vmatpush.msra.mxu0 0.0
    %5657 = vmatpush.msra.mxu0 0.0
    %5658 = vmatpush.msra.mxu0 %v5491
    %5659 = vmatmul.f32.gmra.mxu0 %v5501
    %v5660 = vpop.f32.mrf.mxu0
    %v5661 = vadd.f32 0.0, %v5660
    %5662 = vdwg.mxu0
    %v5663 = vadd.f32 %v5456, %v5521
    %v5664 = vadd.f32 %v5457, %v5541
    %v5665 = vadd.f32 %v5458, %v5561
    %v5666 = vadd.f32 %v5459, %v5581
    %v5667 = vadd.f32 %v5460, %v5601
    %v5668 = vadd.f32 %v5461, %v5621
    %v5669 = vadd.f32 %v5462, %v5641
    %v5670 = vadd.f32 %v5463, %v5661
    %v5679 = vrot.slane %v5664, 4
    %v5680 = vrot.slane %v5666, 4
    %v5681 = vrot.slane %v5668, 4
    %v5682 = vrot.slane %v5670, 4
    %vm5683 = vcmask 1043456
    %v5684 = vsel %vm5683, %v5663, %v5679
    %v5685 = vsel %vm5683, %v5665, %v5680
    %v5686 = vsel %vm5683, %v5667, %v5681
    %v5687 = vsel %vm5683, %v5669, %v5682
    %5692 = vst [vmem:[#allocation3] sm:$0xff] %v5684
    %5693 = vst [vmem:[#allocation3 + $0x8] sm:$0xff] %v5685
    %5694 = vst [vmem:[#allocation3 + $0x10] sm:$0xff] %v5686
    %5695 = vst [vmem:[#allocation3 + $0x18] sm:$0xff] %v5687
    %v5696 = vlaneseq
    %v5697 = vand.u32 %v5696, 127
    %v5698 = vadd.s32 %v5697, 128
    %v5699 = vadd.s32 %v5697, 256
    %v5700 = vadd.s32 %v5697, 384
    %v5701 = vadd.s32 %v5697, 512
    %v5702 = vadd.s32 %v5697, 640
    %v5703 = vadd.s32 %v5697, 768
    %v5704 = vadd.s32 %v5697, 896
    %v5705 = vld [vmem:[%s2] sm:$0xff]
    %s5706 = smul.u32 0, 1024
    %v5707 = vstv %s5706
    %v5708 = vadd.s32 %v5697, %v5707
    %v5709 = vadd.s32 %v5698, %v5707
    %v5710 = vadd.s32 %v5699, %v5707
    %v5711 = vadd.s32 %v5700, %v5707
    %v5712 = vadd.s32 %v5701, %v5707
    %v5713 = vadd.s32 %v5702, %v5707
    %v5714 = vadd.s32 %v5703, %v5707
    %v5715 = vadd.s32 %v5704, %v5707
    %vm5716 = vcmp.lt.s32.totalorder %v5708, 1024
    %vm5717 = vcmp.lt.s32.totalorder %v5709, 1024
    %vm5718 = vcmp.lt.s32.totalorder %v5710, 1024
    %vm5719 = vcmp.lt.s32.totalorder %v5711, 1024
    %vm5720 = vcmp.lt.s32.totalorder %v5712, 1024
    %vm5721 = vcmp.lt.s32.totalorder %v5713, 1024
    %vm5722 = vcmp.lt.s32.totalorder %v5714, 1024
    %vm5723 = vcmp.lt.s32.totalorder %v5715, 1024
    %v5724 = vsel %vm5716, 1, 0
    %v5725 = vsel %vm5717, 1, 0
    %v5726 = vsel %vm5718, 1, 0
    %v5727 = vsel %vm5719, 1, 0
    %v5728 = vsel %vm5720, 1, 0
    %v5729 = vsel %vm5721, 1, 0
    %v5730 = vsel %vm5722, 1, 0
    %v5731 = vsel %vm5723, 1, 0
    %v5732 = vcvt.s32.f32 %v5724
    %v5733 = vcvt.s32.f32 %v5725
    %v5734 = vcvt.s32.f32 %v5726
    %v5735 = vcvt.s32.f32 %v5727
    %v5736 = vcvt.s32.f32 %v5728
    %v5737 = vcvt.s32.f32 %v5729
    %v5738 = vcvt.s32.f32 %v5730
    %v5739 = vcvt.s32.f32 %v5731
    %v5748 = vrot.slane %v5733, 7
    %v5749 = vrot.slane %v5734, 6
    %v5750 = vrot.slane %v5735, 5
    %v5751 = vrot.slane %v5736, 4
    %v5752 = vrot.slane %v5737, 3
    %v5753 = vrot.slane %v5738, 2
    %v5754 = vrot.slane %v5739, 1
    %vm5755 = vcmask 1040384
    %v5756 = vsel %vm5755, %v5732, %v5748
    %vm5757 = vcmask 1042434
    %v5758 = vsel %vm5757, %v5749, %v5750
    %vm5759 = vcmask 1041408
    %v5760 = vsel %vm5759, %v5756, %v5758
    %vm5761 = vcmask 1044484
    %v5762 = vsel %vm5761, %v5751, %v5752
    %vm5763 = vcmask 1046534
    %v5764 = vsel %vm5763, %v5753, %v5754
    %vm5765 = vcmask 1045508
    %v5766 = vsel %vm5765, %v5762, %v5764
    %v5767 = vsel %vm5683, %v5760, %v5766
    %v5769 = vmul.f32 %v5705, %v5767
    %v5771 = vperm.slane %v5769, 0
    %v5772 = vperm.slane %v5769, 1
    %v5773 = vperm.slane %v5769, 2
    %v5774 = vperm.slane %v5769, 3
    %v5775 = vperm.slane %v5769, 4
    %v5776 = vperm.slane %v5769, 5
    %v5777 = vperm.slane %v5769, 6
    %v5778 = vperm.slane %v5769, 7
    %v5787 = vmul.f32 %v5663, %v5771
    %v5788 = vmul.f32 %v5664, %v5772
    %v5789 = vmul.f32 %v5665, %v5773
    %v5790 = vmul.f32 %v5666, %v5774
    %v5791 = vmul.f32 %v5667, %v5775
    %v5792 = vmul.f32 %v5668, %v5776
    %v5793 = vmul.f32 %v5669, %v5777
    %v5794 = vmul.f32 %v5670, %v5778
    %v5795 = vld [vmem:[%s5] sm:$0xf]
    %v5796 = vsel %vm5683, %v5787, 0.0
    %v5797 = vsel %vm5683, %v5788, 0.0
    %v5798 = vadd.f32 %v5796, %v5797
    %v5799 = vsel %vm5683, %v5789, 0.0
    %v5800 = vadd.f32 %v5798, %v5799
    %v5801 = vsel %vm5683, %v5790, 0.0
    %v5802 = vadd.f32 %v5800, %v5801
    %v5803 = vsel %vm5683, %v5791, 0.0
    %v5804 = vadd.f32 %v5802, %v5803
    %v5805 = vsel %vm5683, %v5792, 0.0
    %v5806 = vadd.f32 %v5804, %v5805
    %v5807 = vsel %vm5683, %v5793, 0.0
    %v5808 = vadd.f32 %v5806, %v5807
    %v5809 = vsel %vm5683, %v5794, 0.0
    %v5810 = vadd.f32 %v5808, %v5809
    %5811 = vadd.xlane.f32.xlu0 %v5810
    %v5812 = vpop.xlane.xlu0 %5811
    %v5813 = vadd.f32 %v5795, %v5812
    %vm5814 = vcmask 3072
    %5815 = vst.msk [vmem:[%s5] sm:$0xf] %vm5814, %v5813
    %v5816 = vld [vmem:[%s6] sm:$0xf]
    %v5817 = vmul.f32 %v5787, %v5787
    %v5818 = vmul.f32 %v5788, %v5788
    %v5819 = vmul.f32 %v5789, %v5789
    %v5820 = vmul.f32 %v5790, %v5790
    %v5821 = vmul.f32 %v5791, %v5791
    %v5822 = vmul.f32 %v5792, %v5792
    %v5823 = vmul.f32 %v5793, %v5793
    %v5824 = vmul.f32 %v5794, %v5794
    %v5825 = vsel %vm5683, %v5817, 0.0
    %v5826 = vsel %vm5683, %v5818, 0.0
    %v5827 = vadd.f32 %v5825, %v5826
    %v5828 = vsel %vm5683, %v5819, 0.0
    %v5829 = vadd.f32 %v5827, %v5828
    %v5830 = vsel %vm5683, %v5820, 0.0
    %v5831 = vadd.f32 %v5829, %v5830
    %v5832 = vsel %vm5683, %v5821, 0.0
    %v5833 = vadd.f32 %v5831, %v5832
    %v5834 = vsel %vm5683, %v5822, 0.0
    %v5835 = vadd.f32 %v5833, %v5834
    %v5836 = vsel %vm5683, %v5823, 0.0
    %v5837 = vadd.f32 %v5835, %v5836
    %v5838 = vsel %vm5683, %v5824, 0.0
    %v5839 = vadd.f32 %v5837, %v5838
    %5840 = vadd.xlane.f32.xlu0 %v5839
    %v5841 = vpop.xlane.xlu0 %5840
    %v5842 = vadd.f32 %v5816, %v5841
    %5843 = vst.msk [vmem:[%s6] sm:$0xf] %vm5814, %v5842
    // Predicated region
    $region22: #{tpu_custom_call.1} parent=1 // pred_check
      _
    $region23: #{tpu_custom_call.1} parent=1 // pred_check_branch
      %5845 = sbr.rel (0) target = $region25
    $region24: #{tpu_custom_call.1} parent=1 // pred_region
      %5847 = vsyncadd [#allocation4], 0
      %s5849 = sshll.u32 [#allocation3], 4
      %s5850 = int_to_ptr.vmem [resolvable:$true] %s5849
      %s5851 = sshll.u32 %s4, 4
      %s5852 = int_to_ptr.hbm [resolvable:$true] %s5851
      %5854 = dma.vmem_to_hbm [thread:$0]  %s5850, 512, %s5852, [#allocation4]
    $region25: #{tpu_custom_call.1} parent=1 // pred_fallthru
      _
    // Predicated region
    $region26: #{tpu_custom_call.1} parent=1 // pred_check
      _
    $region27: #{tpu_custom_call.1} parent=1 // pred_check_branch
      %5856 = sbr.rel (0) target = $region29
    $region28: #{tpu_custom_call.1} parent=1 // pred_region
      _
    $region29: #{tpu_custom_call.1} parent=1 // pred_fallthru
      _
    // Predicated region
    $region30: #{tpu_custom_call.1} parent=1 // pred_check
      _
    $region31: #{tpu_custom_call.1} parent=1 // pred_check_branch
      %5858 = sbr.rel (0) target = $region33
    $region32: #{tpu_custom_call.1} parent=1 // pred_region
      _
    $region33: #{tpu_custom_call.1} parent=1 // pred_fallthru
      _
    // Predicated region
    $region34: #{tpu_custom_call.1} parent=1 // pred_check
      _
    $region35: #{tpu_custom_call.1} parent=1 // pred_check_branch
      %5860 = sbr.rel (0) target = $region37
    $region36: #{tpu_custom_call.1} parent=1 // pred_region
      %5862 = dma.done [#allocation4], 512
    $region37: #{tpu_custom_call.1} parent=1 // pred_fallthru
      _
    // Predicated region
    $region38: #{tpu_custom_call.1} parent=1 // pred_check
      _
    $region39: #{tpu_custom_call.1} parent=1 // pred_check_branch
      %5864 = sbr.rel (0) target = $region41
    $region40: #{tpu_custom_call.1} parent=1 // pred_region
      _
    $region41: #{tpu_custom_call.1} parent=1 // pred_fallthru
      _
    // Predicated region
    $region42: #{tpu_custom_call.1} parent=1 // pred_check
      _
    $region43: #{tpu_custom_call.1} parent=1 // pred_check_branch
      %5866 = sbr.rel (0) target = $region45
    $region44: #{tpu_custom_call.1} parent=1 // pred_region
      _
    $region45: #{tpu_custom_call.1} parent=1 // pred_fallthru
      _
    %5867 = vsyncpa [#allocation4], 1

</llo_original>
